<compile_context>
chip_gen: v7x
topology: tpu7x:2x2x1
jax: 0.10.0
libtpu: 0.0.40
codegen_flags: <defaults>
</compile_context>

<pallas_src>
import math

import jax
import jax.numpy as jnp
from jax.experimental import pallas as pl
from jax.experimental.pallas import tpu as pltpu  # noqa: F401  (TPU backend)

# ----------------------------- model configs ---------------------------------
B = 2            # batch
C_IN = 4         # enc_in (nvars)
SEQ_LEN = 16     # context_window
PRED_LEN = 8     # target_window
E_LAYERS = 2
N_HEADS = 2
D_MODEL = 16
D_FF = 32
PATCH_LEN = 4
STRIDE = 4
D_K = D_MODEL // N_HEADS
D_V = D_MODEL // N_HEADS
PATCH_NUM = (SEQ_LEN - PATCH_LEN) // STRIDE + 1 + 1   # +1 for padding_patch='end'
NF = D_MODEL * PATCH_NUM                              # head_nf
BN = B * C_IN                                         # channel-independent batch
R = BN * PATCH_NUM                                    # fused row count (= 40)
EPS_BN = 1e-5
EPS_REVIN = 1e-5
NEG_BIG = -1e30

# erf(x) = x * P(x^2)/Q(x^2) on x clipped to [-4, 4] -- the same Cephes-style
# rational XLA uses for f32 erf, so exact-GELU matches
# jax.nn.gelu(approximate=False) numerics.
_ERF_ALPHA = (-2.72614225801306e-10, 2.77068142495902e-08, -2.10102402082508e-06,
              -5.69250639462346e-05, -7.34990630326855e-04, -2.95459980854025e-03,
              -1.60960333262415e-02)
_ERF_BETA = (-1.45660718464996e-05, -2.13374055278905e-04, -1.68282697438203e-03,
             -7.37332916720468e-03, -1.42647390514189e-02)


# --------------------------- kernel helpers ----------------------------------
def _mm_nt(a, b):
    """a @ b.T (contract last dims) -> MXU, f32 accumulate."""
    return jax.lax.dot_general(a, b, (((1,), (1,)), ((), ())),
                               preferred_element_type=jnp.float32)


def _erf_f32(x):
    x = jnp.clip(x, -4.0, 4.0)
    x2 = x * x
    p = _ERF_ALPHA[0] * x2 + _ERF_ALPHA[1]
    for a in _ERF_ALPHA[2:]:
        p = p * x2 + a
    q = _ERF_BETA[0] * x2 + _ERF_BETA[1]
    for b in _ERF_BETA[2:]:
        q = q * x2 + b
    return x * p / q


def _gelu_exact(x):
    return 0.5 * x * (1.0 + _erf_f32(x * (1.0 / math.sqrt(2.0))))


def _add_batchnorm(a, b, gamma, beta):
    """residual add + BatchNorm1d(d_model), train-mode batch stats (biased var).

    a, b: (R, D); stats are taken over all R = BN*patch_num rows per feature,
    which is exactly what Transpose->BatchNorm1d->Transpose does in PatchTST.
    """
    x = a + b
    mean = jnp.mean(x, axis=0, keepdims=True)           # (1, D)
    d = x - mean
    var = jnp.mean(d * d, axis=0, keepdims=True)        # (1, D)
    return d * jax.lax.rsqrt(var + EPS_BN) * gamma + beta


# ------------------------------ fused kernel ----------------------------------
def fused_kernel(patches_ref, wp_ref, bp_ref, wpos_ref, bias_ref,
                 wqkv_ref, bqkv_ref, wo_ref, bo_ref,
                 bn1g_ref, bn1b_ref, wff1_ref, bff1_ref, wff2_ref, bff2_ref,
                 bn2g_ref, bn2b_ref, wh3_ref, bh_ref, out_ref):
    scale = float(D_K) ** -0.5

    # ---- patch embedding + learned positional encoding ----
    # patches: (R, patch_len), row = p*BN + (b*C_IN + c)
    src = _mm_nt(patches_ref[...], wp_ref[...]) + bp_ref[...] + wpos_ref[...]  # (R,D)

    # additive block mask: 0 within the same channel-series, -1e30 across series
    bias = bias_ref[...]                                  # (R, R)

    # residual-attention scores, carried across layers as live values
    scores = [None] * N_HEADS

    for layer in range(E_LAYERS):
        # ---- fused QKV projection: one (R,16)@(16,48) matmul ----
        qkv = _mm_nt(src, wqkv_ref[layer]) + bqkv_ref[layer]          # (R, 3*D)
        wo = wo_ref[layer]                                            # (D, D)
        attn_out = bo_ref[layer]                                      # (1, D)
        new_scores = []
        for h in range(N_HEADS):
            q = qkv[:, h * D_K:(h + 1) * D_K]                               # (R,dk)
            k = qkv[:, N_HEADS * D_K + h * D_K:N_HEADS * D_K + (h + 1) * D_K]
            v = qkv[:, 2 * N_HEADS * D_K + h * D_V:
                       2 * N_HEADS * D_K + (h + 1) * D_V]                   # (R,dv)
            s = _mm_nt(q, k) * scale                                        # (R,R)
            if scores[h] is not None:                 # residual attention
                s = s + scores[h]
            new_scores.append(s)                      # pre-mask, as in torch
            sm = s + bias
            m = jnp.max(sm, axis=-1, keepdims=True)
            e = jnp.exp(sm - m)
            w = e / jnp.sum(e, axis=-1, keepdims=True)                      # softmax
            ctx = jax.lax.dot_general(w, v, (((1,), (0,)), ((), ())),
                                      preferred_element_type=jnp.float32)   # (R,dv)
            # fold this head's slice of W_o directly (no lane concatenate)
            attn_out = attn_out + _mm_nt(ctx, wo[:, h * D_V:(h + 1) * D_V])  # (R,D)
        scores = new_scores

        # ---- add & BatchNorm ----
        src = _add_batchnorm(src, attn_out, bn1g_ref[layer], bn1b_ref[layer])

        # ---- position-wise FFN: Linear -> GELU(exact) -> Linear ----
        hdn = _gelu_exact(_mm_nt(src, wff1_ref[layer]) + bff1_ref[layer])    # (R,dff)
        ff = _mm_nt(hdn, wff2_ref[layer]) + bff2_ref[layer]                  # (R,D)

        # ---- add & BatchNorm ----
        src = _add_batchnorm(src, ff, bn2g_ref[layer], bn2b_ref[layer])

    # ---- flatten head: y[g,o] = sum_{p,d} src[p*BN+g, d] * W_head[o, d*P+p] ----
    y = bh_ref[...]                                       # (1, pred_len)
    for p in range(PATCH_NUM):
        blk = src[p * BN:(p + 1) * BN, :]                 # (BN, D) aligned slice
        y = y + _mm_nt(blk, wh3_ref[p])                   # (BN, pred_len)
    out_ref[...] = y


# ------------------------------ wrapper ---------------------------------------
def patchtst_forward(x, pk):
    """x: [B, seq_len, c_in] -> [B, pred_len, c_in]. pk: packed params."""
    B_, L, C = x.shape

    # ---- RevIN 'norm' (per-series stats; XLA glue) ----
    mean = jnp.mean(x, axis=1, keepdims=True)                    # [B,1,C]
    stdev = jnp.sqrt(jnp.var(x, axis=1, keepdims=True) + EPS_REVIN)
    xn = (x - mean) / stdev

    # ---- ReplicationPad1d((0, stride)) + unfold patching (XLA glue) ----
    z = jnp.transpose(xn, (0, 2, 1))                             # [B,C,L]
    z = jnp.concatenate([z, jnp.repeat(z[:, :, -1:], STRIDE, axis=-1)], axis=-1)
    starts = jnp.arange(PATCH_NUM) * STRIDE
    idx = starts[:, None] + jnp.arange(PATCH_LEN)[None, :]       # [P, patch_len]
    patches = z[:, :, idx]                                       # [B,C,P,patch_len]
    # patch-major row order: row = p*BN + (b*C + c)
    patches = jnp.transpose(patches, (2, 0, 1, 3)).reshape(R, PATCH_LEN)

    # ---- the whole encoder + head: ONE pallas_call, invoked once ----
    y = pl.pallas_call(
        fused_kernel,
        out_shape=jax.ShapeDtypeStruct((BN, PRED_LEN), jnp.float32),
    )(patches, pk['w_p'], pk['b_p'], pk['w_pos_t'], pk['attn_bias'],
      pk['wqkv'], pk['bqkv'], pk['wo'], pk['bo'],
      pk['bn1_g'], pk['bn1_b'], pk['wff1'], pk['bff1'], pk['wff2'], pk['bff2'],
      pk['bn2_g'], pk['bn2_b'], pk['wh3'], pk['b_head'])

    # ---- RevIN 'denorm' + final permute of net.forward (XLA glue) ----
    y = jnp.transpose(y.reshape(B_, C, PRED_LEN), (0, 2, 1))     # [B,pred,C]
    return y * stdev + mean


# --------------------------- parameter handling --------------------------------
def init_params(key):
    """Parameters in the PyTorch module's native layout."""
    keys = jax.random.split(key, 80)
    it = iter(keys)

    def linear(fan_in, w_shape, b_shape):
        bound = 1.0 / math.sqrt(fan_in)
        w = jax.random.uniform(next(it), w_shape, jnp.float32, -bound, bound)
        b = jax.random.uniform(next(it), b_shape, jnp.float32, -bound, bound)
        return w, b

    params = {}
    params['w_p'], params['b_p'] = linear(PATCH_LEN, (D_MODEL, PATCH_LEN),
                                          (1, D_MODEL))
    # pe='zeros', learn_pe=True -> uniform(-0.02, 0.02) learnable pos encoding
    params['w_pos'] = jax.random.uniform(next(it), (PATCH_NUM, D_MODEL),
                                         jnp.float32, -0.02, 0.02)
    layers = []
    for _ in range(E_LAYERS):
        p = {}
        p['w_q'], p['b_q'] = linear(D_MODEL, (N_HEADS * D_K, D_MODEL),
                                    (1, N_HEADS * D_K))
        p['w_k'], p['b_k'] = linear(D_MODEL, (N_HEADS * D_K, D_MODEL),
                                    (1, N_HEADS * D_K))
        p['w_v'], p['b_v'] = linear(D_MODEL, (N_HEADS * D_V, D_MODEL),
                                    (1, N_HEADS * D_V))
        p['w_o'], p['b_o'] = linear(N_HEADS * D_V, (D_MODEL, N_HEADS * D_V),
                                    (1, D_MODEL))
        p['bn1_g'] = jnp.ones((1, D_MODEL), jnp.float32)
        p['bn1_b'] = jnp.zeros((1, D_MODEL), jnp.float32)
        p['w_ff1'], p['b_ff1'] = linear(D_MODEL, (D_FF, D_MODEL), (1, D_FF))
        p['w_ff2'], p['b_ff2'] = linear(D_FF, (D_MODEL, D_FF), (1, D_MODEL))
        p['bn2_g'] = jnp.ones((1, D_MODEL), jnp.float32)
        p['bn2_b'] = jnp.zeros((1, D_MODEL), jnp.float32)
        layers.append(p)
    params['layers'] = layers
    params['w_head'], params['b_head'] = linear(NF, (PRED_LEN, NF), (1, PRED_LEN))
    return params


def pack_params(params):
    """One-time host-side repacking into fused-kernel-friendly layouts."""
    L = params['layers']
    pk = {'w_p': params['w_p'], 'b_p': params['b_p'], 'b_head': params['b_head']}

    # positional encoding tiled to the (R, D) patch-major row layout
    pk['w_pos_t'] = jnp.repeat(params['w_pos'], BN, axis=0)            # (R, D)

    # additive attention mask: same channel-series <=> same (row % BN)
    rows = jnp.arange(R)
    same = (rows[:, None] % BN) == (rows[None, :] % BN)
    pk['attn_bias'] = jnp.where(same, 0.0, NEG_BIG).astype(jnp.float32)  # (R,R)

    def stack(name):
        return jnp.stack([p[name] for p in L])

    # fused QKV weights/biases, per layer stacked on a leading axis
    pk['wqkv'] = jnp.stack(
        [jnp.concatenate([p['w_q'], p['w_k'], p['w_v']], axis=0) for p in L])   # (E,3D,D)
    pk['bqkv'] = jnp.stack(
        [jnp.concatenate([p['b_q'], p['b_k'], p['b_v']], axis=1) for p in L])   # (E,1,3D)
    pk['wo'] = stack('w_o')       # (E, D, D)
    pk['bo'] = stack('b_o')       # (E, 1, D)
    pk['bn1_g'] = stack('bn1_g'); pk['bn1_b'] = stack('bn1_b')
    pk['wff1'] = stack('w_ff1');  pk['bff1'] = stack('b_ff1')
    pk['wff2'] = stack('w_ff2');  pk['bff2'] = stack('b_ff2')
    pk['bn2_g'] = stack('bn2_g'); pk['bn2_b'] = stack('bn2_b')

    # flatten-head weight regrouped per patch: wh3[p, o, d] = W_head[o, d*P + p]
    pk['wh3'] = jnp.transpose(
        params['w_head'].reshape(PRED_LEN, D_MODEL, PATCH_NUM), (2, 0, 1))      # (P,pred,D)
    return pk


# -------------------------------- main -----------------------------------------
if __name__ == "__main__":
    key = jax.random.PRNGKey(0)
    pkey, xkey = jax.random.split(key)
    params = init_params(pkey)
    packed = pack_params(params)
    x = jax.random.normal(xkey, (B, SEQ_LEN, C_IN), jnp.float32)

    fwd = jax.jit(patchtst_forward)
    out = jax.block_until_ready(fwd(x, packed))
    assert out.shape == (B, PRED_LEN, C_IN), out.shape
    assert bool(jnp.all(jnp.isfinite(out)))
    print("KERNEL_OK")
</pallas_src>

<mosaic_0001>
module attributes {stable_mosaic.version = 11 : i64} {
  func.func @fused_kernel(%arg0: memref<40x4xf32, #tpu.memory_space<vmem>>, %arg1: memref<16x4xf32, #tpu.memory_space<vmem>>, %arg2: memref<1x16xf32, #tpu.memory_space<vmem>>, %arg3: memref<40x16xf32, #tpu.memory_space<vmem>>, %arg4: memref<40x40xf32, #tpu.memory_space<vmem>>, %arg5: memref<2x48x16xf32, #tpu.memory_space<vmem>>, %arg6: memref<2x1x48xf32, #tpu.memory_space<vmem>>, %arg7: memref<2x16x16xf32, #tpu.memory_space<vmem>>, %arg8: memref<2x1x16xf32, #tpu.memory_space<vmem>>, %arg9: memref<2x1x16xf32, #tpu.memory_space<vmem>>, %arg10: memref<2x1x16xf32, #tpu.memory_space<vmem>>, %arg11: memref<2x32x16xf32, #tpu.memory_space<vmem>>, %arg12: memref<2x1x32xf32, #tpu.memory_space<vmem>>, %arg13: memref<2x16x32xf32, #tpu.memory_space<vmem>>, %arg14: memref<2x1x16xf32, #tpu.memory_space<vmem>>, %arg15: memref<2x1x16xf32, #tpu.memory_space<vmem>>, %arg16: memref<2x1x16xf32, #tpu.memory_space<vmem>>, %arg17: memref<5x8x16xf32, #tpu.memory_space<vmem>>, %arg18: memref<1x8xf32, #tpu.memory_space<vmem>>, %arg19: memref<8x8xf32, #tpu.memory_space<vmem>>) attributes {dimension_semantics = [], scalar_prefetch = 0 : i64, scratch_operands = 0 : i64, tpu.core_type = #tpu.core_type<tc>} {
    %c0 = arith.constant 0 : index
    %c0_0 = arith.constant 0 : index
    %0 = vector.load %arg0[%c0, %c0_0] : memref<40x4xf32, #tpu.memory_space<vmem>>, vector<40x4xf32>
    %c0_1 = arith.constant 0 : index
    %c0_2 = arith.constant 0 : index
    %1 = vector.load %arg1[%c0_1, %c0_2] : memref<16x4xf32, #tpu.memory_space<vmem>>, vector<16x4xf32>
    %cst = arith.constant dense<0.000000e+00> : vector<40x16xf32>
    %2 = tpu.matmul %0, %1, %cst {dimension_numbers = #tpu.dot_dimension_numbers<[1], [1], [0], [0], [0, 0, 1, 0], [], []>} : vector<40x4xf32>, vector<16x4xf32>, vector<40x16xf32> -> vector<40x16xf32>
    %c0_3 = arith.constant 0 : index
    %c0_4 = arith.constant 0 : index
    %3 = vector.load %arg2[%c0_3, %c0_4] : memref<1x16xf32, #tpu.memory_space<vmem>>, vector<1x16xf32>
    %4 = vector.broadcast %3 : vector<1x16xf32> to vector<40x16xf32>
    %5 = arith.addf %2, %4 : vector<40x16xf32>
    %c0_5 = arith.constant 0 : index
    %c0_6 = arith.constant 0 : index
    %6 = vector.load %arg3[%c0_5, %c0_6] : memref<40x16xf32, #tpu.memory_space<vmem>>, vector<40x16xf32>
    %7 = arith.addf %5, %6 : vector<40x16xf32>
    %c0_7 = arith.constant 0 : index
    %c0_8 = arith.constant 0 : index
    %8 = vector.load %arg4[%c0_7, %c0_8] : memref<40x40xf32, #tpu.memory_space<vmem>>, vector<40x40xf32>
    %c0_9 = arith.constant 0 : index
    %c0_10 = arith.constant 0 : index
    %c0_11 = arith.constant 0 : index
    %9 = vector.load %arg5[%c0_9, %c0_10, %c0_11] : memref<2x48x16xf32, #tpu.memory_space<vmem>>, vector<1x48x16xf32>
    %10 = vector.shape_cast %9 : vector<1x48x16xf32> to vector<48x16xf32>
    %cst_12 = arith.constant dense<0.000000e+00> : vector<40x48xf32>
    %11 = tpu.matmul %7, %10, %cst_12 {dimension_numbers = #tpu.dot_dimension_numbers<[1], [1], [0], [0], [0, 0, 1, 0], [], []>} : vector<40x16xf32>, vector<48x16xf32>, vector<40x48xf32> -> vector<40x48xf32>
    %c0_13 = arith.constant 0 : index
    %c0_14 = arith.constant 0 : index
    %c0_15 = arith.constant 0 : index
    %12 = vector.load %arg6[%c0_13, %c0_14, %c0_15] : memref<2x1x48xf32, #tpu.memory_space<vmem>>, vector<1x1x48xf32>
    %13 = vector.shape_cast %12 : vector<1x1x48xf32> to vector<1x48xf32>
    %14 = vector.broadcast %13 : vector<1x48xf32> to vector<40x48xf32>
    %15 = arith.addf %11, %14 : vector<40x48xf32>
    %c0_16 = arith.constant 0 : index
    %c0_17 = arith.constant 0 : index
    %c0_18 = arith.constant 0 : index
    %16 = vector.load %arg7[%c0_16, %c0_17, %c0_18] : memref<2x16x16xf32, #tpu.memory_space<vmem>>, vector<1x16x16xf32>
    %17 = vector.shape_cast %16 : vector<1x16x16xf32> to vector<16x16xf32>
    %c0_19 = arith.constant 0 : index
    %c0_20 = arith.constant 0 : index
    %c0_21 = arith.constant 0 : index
    %18 = vector.load %arg8[%c0_19, %c0_20, %c0_21] : memref<2x1x16xf32, #tpu.memory_space<vmem>>, vector<1x1x16xf32>
    %19 = vector.shape_cast %18 : vector<1x1x16xf32> to vector<1x16xf32>
    %20 = vector.extract_strided_slice %15 {offsets = [0, 0], sizes = [40, 8], strides = [1, 1]} : vector<40x48xf32> to vector<40x8xf32>
    %21 = vector.extract_strided_slice %15 {offsets = [0, 16], sizes = [40, 8], strides = [1, 1]} : vector<40x48xf32> to vector<40x8xf32>
    %22 = vector.extract_strided_slice %15 {offsets = [0, 32], sizes = [40, 8], strides = [1, 1]} : vector<40x48xf32> to vector<40x8xf32>
    %cst_22 = arith.constant dense<0.000000e+00> : vector<40x40xf32>
    %23 = tpu.matmul %20, %21, %cst_22 {dimension_numbers = #tpu.dot_dimension_numbers<[1], [1], [0], [0], [0, 0, 1, 0], [], []>} : vector<40x8xf32>, vector<40x8xf32>, vector<40x40xf32> -> vector<40x40xf32>
    %cst_23 = arith.constant 0.353553385 : f32
    %24 = vector.broadcast %cst_23 : f32 to vector<40x40xf32>
    %25 = arith.mulf %23, %24 : vector<40x40xf32>
    %26 = arith.addf %25, %8 : vector<40x40xf32>
    %cst_24 = arith.constant dense<0xFF800000> : vector<40xf32>
    %27 = vector.multi_reduction <maximumf>, %26, %cst_24 [1] : vector<40x40xf32> to vector<40xf32>
    %28 = vector.shape_cast %27 : vector<40xf32> to vector<40x1xf32>
    %29 = vector.broadcast %28 : vector<40x1xf32> to vector<40x40xf32>
    %30 = arith.subf %26, %29 : vector<40x40xf32>
    %31 = math.exp %30 : vector<40x40xf32>
    %cst_25 = arith.constant dense<0.000000e+00> : vector<40xf32>
    %32 = vector.multi_reduction <add>, %31, %cst_25 [1] : vector<40x40xf32> to vector<40xf32>
    %33 = vector.shape_cast %32 : vector<40xf32> to vector<40x1xf32>
    %34 = vector.broadcast %33 : vector<40x1xf32> to vector<40x40xf32>
    %35 = arith.divf %31, %34 : vector<40x40xf32>
    %cst_26 = arith.constant dense<0.000000e+00> : vector<40x8xf32>
    %36 = tpu.matmul %35, %22, %cst_26 {dimension_numbers = #tpu.dot_dimension_numbers<[1], [0], [0], [1], [0, 0, 1, 1], [], []>} : vector<40x40xf32>, vector<40x8xf32>, vector<40x8xf32> -> vector<40x8xf32>
    %37 = vector.extract_strided_slice %17 {offsets = [0, 0], sizes = [16, 8], strides = [1, 1]} : vector<16x16xf32> to vector<16x8xf32>
    %cst_27 = arith.constant dense<0.000000e+00> : vector<40x16xf32>
    %38 = tpu.matmul %36, %37, %cst_27 {dimension_numbers = #tpu.dot_dimension_numbers<[1], [1], [0], [0], [0, 0, 1, 0], [], []>} : vector<40x8xf32>, vector<16x8xf32>, vector<40x16xf32> -> vector<40x16xf32>
    %39 = vector.broadcast %19 : vector<1x16xf32> to vector<40x16xf32>
    %40 = arith.addf %39, %38 : vector<40x16xf32>
    %41 = vector.extract_strided_slice %15 {offsets = [0, 8], sizes = [40, 8], strides = [1, 1]} : vector<40x48xf32> to vector<40x8xf32>
    %42 = vector.extract_strided_slice %15 {offsets = [0, 24], sizes = [40, 8], strides = [1, 1]} : vector<40x48xf32> to vector<40x8xf32>
    %43 = vector.extract_strided_slice %15 {offsets = [0, 40], sizes = [40, 8], strides = [1, 1]} : vector<40x48xf32> to vector<40x8xf32>
    %cst_28 = arith.constant dense<0.000000e+00> : vector<40x40xf32>
    %44 = tpu.matmul %41, %42, %cst_28 {dimension_numbers = #tpu.dot_dimension_numbers<[1], [1], [0], [0], [0, 0, 1, 0], [], []>} : vector<40x8xf32>, vector<40x8xf32>, vector<40x40xf32> -> vector<40x40xf32>
    %cst_29 = arith.constant 0.353553385 : f32
    %45 = vector.broadcast %cst_29 : f32 to vector<40x40xf32>
    %46 = arith.mulf %44, %45 : vector<40x40xf32>
    %47 = arith.addf %46, %8 : vector<40x40xf32>
    %cst_30 = arith.constant dense<0xFF800000> : vector<40xf32>
    %48 = vector.multi_reduction <maximumf>, %47, %cst_30 [1] : vector<40x40xf32> to vector<40xf32>
    %49 = vector.shape_cast %48 : vector<40xf32> to vector<40x1xf32>
    %50 = vector.broadcast %49 : vector<40x1xf32> to vector<40x40xf32>
    %51 = arith.subf %47, %50 : vector<40x40xf32>
    %52 = math.exp %51 : vector<40x40xf32>
    %cst_31 = arith.constant dense<0.000000e+00> : vector<40xf32>
    %53 = vector.multi_reduction <add>, %52, %cst_31 [1] : vector<40x40xf32> to vector<40xf32>
    %54 = vector.shape_cast %53 : vector<40xf32> to vector<40x1xf32>
    %55 = vector.broadcast %54 : vector<40x1xf32> to vector<40x40xf32>
    %56 = arith.divf %52, %55 : vector<40x40xf32>
    %cst_32 = arith.constant dense<0.000000e+00> : vector<40x8xf32>
    %57 = tpu.matmul %56, %43, %cst_32 {dimension_numbers = #tpu.dot_dimension_numbers<[1], [0], [0], [1], [0, 0, 1, 1], [], []>} : vector<40x40xf32>, vector<40x8xf32>, vector<40x8xf32> -> vector<40x8xf32>
    %58 = vector.extract_strided_slice %17 {offsets = [0, 8], sizes = [16, 8], strides = [1, 1]} : vector<16x16xf32> to vector<16x8xf32>
    %cst_33 = arith.constant dense<0.000000e+00> : vector<40x16xf32>
    %59 = tpu.matmul %57, %58, %cst_33 {dimension_numbers = #tpu.dot_dimension_numbers<[1], [1], [0], [0], [0, 0, 1, 0], [], []>} : vector<40x8xf32>, vector<16x8xf32>, vector<40x16xf32> -> vector<40x16xf32>
    %60 = arith.addf %40, %59 : vector<40x16xf32>
    %c0_34 = arith.constant 0 : index
    %c0_35 = arith.constant 0 : index
    %c0_36 = arith.constant 0 : index
    %61 = vector.load %arg9[%c0_34, %c0_35, %c0_36] : memref<2x1x16xf32, #tpu.memory_space<vmem>>, vector<1x1x16xf32>
    %62 = vector.shape_cast %61 : vector<1x1x16xf32> to vector<1x16xf32>
    %c0_37 = arith.constant 0 : index
    %c0_38 = arith.constant 0 : index
    %c0_39 = arith.constant 0 : index
    %63 = vector.load %arg10[%c0_37, %c0_38, %c0_39] : memref<2x1x16xf32, #tpu.memory_space<vmem>>, vector<1x1x16xf32>
    %64 = vector.shape_cast %63 : vector<1x1x16xf32> to vector<1x16xf32>
    %65 = arith.addf %7, %60 : vector<40x16xf32>
    %cst_40 = arith.constant dense<0.000000e+00> : vector<16xf32>
    %66 = vector.multi_reduction <add>, %65, %cst_40 [0] : vector<40x16xf32> to vector<16xf32>
    %67 = vector.shape_cast %66 : vector<16xf32> to vector<1x16xf32>
    %cst_41 = arith.constant 4.000000e+01 : f32
    %68 = vector.broadcast %cst_41 : f32 to vector<1x16xf32>
    %69 = arith.divf %67, %68 : vector<1x16xf32>
    %70 = vector.broadcast %69 : vector<1x16xf32> to vector<40x16xf32>
    %71 = arith.subf %65, %70 : vector<40x16xf32>
    %72 = arith.mulf %71, %71 : vector<40x16xf32>
    %cst_42 = arith.constant dense<0.000000e+00> : vector<16xf32>
    %73 = vector.multi_reduction <add>, %72, %cst_42 [0] : vector<40x16xf32> to vector<16xf32>
    %74 = vector.shape_cast %73 : vector<16xf32> to vector<1x16xf32>
    %cst_43 = arith.constant 4.000000e+01 : f32
    %75 = vector.broadcast %cst_43 : f32 to vector<1x16xf32>
    %76 = arith.divf %74, %75 : vector<1x16xf32>
    %cst_44 = arith.constant 9.99999974E-6 : f32
    %77 = vector.broadcast %cst_44 : f32 to vector<1x16xf32>
    %78 = arith.addf %76, %77 : vector<1x16xf32>
    %79 = math.rsqrt %78 : vector<1x16xf32>
    %80 = vector.broadcast %79 : vector<1x16xf32> to vector<40x16xf32>
    %81 = arith.mulf %71, %80 : vector<40x16xf32>
    %82 = vector.broadcast %62 : vector<1x16xf32> to vector<40x16xf32>
    %83 = arith.mulf %81, %82 : vector<40x16xf32>
    %84 = vector.broadcast %64 : vector<1x16xf32> to vector<40x16xf32>
    %85 = arith.addf %83, %84 : vector<40x16xf32>
    %c0_45 = arith.constant 0 : index
    %c0_46 = arith.constant 0 : index
    %c0_47 = arith.constant 0 : index
    %86 = vector.load %arg11[%c0_45, %c0_46, %c0_47] : memref<2x32x16xf32, #tpu.memory_space<vmem>>, vector<1x32x16xf32>
    %87 = vector.shape_cast %86 : vector<1x32x16xf32> to vector<32x16xf32>
    %cst_48 = arith.constant dense<0.000000e+00> : vector<40x32xf32>
    %88 = tpu.matmul %85, %87, %cst_48 {dimension_numbers = #tpu.dot_dimension_numbers<[1], [1], [0], [0], [0, 0, 1, 0], [], []>} : vector<40x16xf32>, vector<32x16xf32>, vector<40x32xf32> -> vector<40x32xf32>
    %c0_49 = arith.constant 0 : index
    %c0_50 = arith.constant 0 : index
    %c0_51 = arith.constant 0 : index
    %89 = vector.load %arg12[%c0_49, %c0_50, %c0_51] : memref<2x1x32xf32, #tpu.memory_space<vmem>>, vector<1x1x32xf32>
    %90 = vector.shape_cast %89 : vector<1x1x32xf32> to vector<1x32xf32>
    %91 = vector.broadcast %90 : vector<1x32xf32> to vector<40x32xf32>
    %92 = arith.addf %88, %91 : vector<40x32xf32>
    %cst_52 = arith.constant 5.000000e-01 : f32
    %93 = vector.broadcast %cst_52 : f32 to vector<40x32xf32>
    %94 = arith.mulf %93, %92 : vector<40x32xf32>
    %cst_53 = arith.constant 0.707106769 : f32
    %95 = vector.broadcast %cst_53 : f32 to vector<40x32xf32>
    %96 = arith.mulf %92, %95 : vector<40x32xf32>
    %cst_54 = arith.constant -4.000000e+00 : f32
    %cst_55 = arith.constant 4.000000e+00 : f32
    %97 = vector.broadcast %cst_54 : f32 to vector<40x32xf32>
    %98 = arith.maximumf %97, %96 : vector<40x32xf32>
    %99 = vector.broadcast %cst_55 : f32 to vector<40x32xf32>
    %100 = arith.minimumf %99, %98 : vector<40x32xf32>
    %101 = arith.mulf %100, %100 : vector<40x32xf32>
    %cst_56 = arith.constant -2.72614237E-10 : f32
    %102 = vector.broadcast %cst_56 : f32 to vector<40x32xf32>
    %103 = arith.mulf %102, %101 : vector<40x32xf32>
    %cst_57 = arith.constant 2.77068146E-8 : f32
    %104 = vector.broadcast %cst_57 : f32 to vector<40x32xf32>
    %105 = arith.addf %103, %104 : vector<40x32xf32>
    %106 = arith.mulf %105, %101 : vector<40x32xf32>
    %cst_58 = arith.constant -2.10102394E-6 : f32
    %107 = vector.broadcast %cst_58 : f32 to vector<40x32xf32>
    %108 = arith.addf %106, %107 : vector<40x32xf32>
    %109 = arith.mulf %108, %101 : vector<40x32xf32>
    %cst_59 = arith.constant -5.69250624E-5 : f32
    %110 = vector.broadcast %cst_59 : f32 to vector<40x32xf32>
    %111 = arith.addf %109, %110 : vector<40x32xf32>
    %112 = arith.mulf %111, %101 : vector<40x32xf32>
    %cst_60 = arith.constant -7.34990637E-4 : f32
    %113 = vector.broadcast %cst_60 : f32 to vector<40x32xf32>
    %114 = arith.addf %112, %113 : vector<40x32xf32>
    %115 = arith.mulf %114, %101 : vector<40x32xf32>
    %cst_61 = arith.constant -2.954600e-03 : f32
    %116 = vector.broadcast %cst_61 : f32 to vector<40x32xf32>
    %117 = arith.addf %115, %116 : vector<40x32xf32>
    %118 = arith.mulf %117, %101 : vector<40x32xf32>
    %cst_62 = arith.constant -0.0160960332 : f32
    %119 = vector.broadcast %cst_62 : f32 to vector<40x32xf32>
    %120 = arith.addf %118, %119 : vector<40x32xf32>
    %cst_63 = arith.constant -1.45660715E-5 : f32
    %121 = vector.broadcast %cst_63 : f32 to vector<40x32xf32>
    %122 = arith.mulf %121, %101 : vector<40x32xf32>
    %cst_64 = arith.constant -2.13374049E-4 : f32
    %123 = vector.broadcast %cst_64 : f32 to vector<40x32xf32>
    %124 = arith.addf %122, %123 : vector<40x32xf32>
    %125 = arith.mulf %124, %101 : vector<40x32xf32>
    %cst_65 = arith.constant -0.00168282702 : f32
    %126 = vector.broadcast %cst_65 : f32 to vector<40x32xf32>
    %127 = arith.addf %125, %126 : vector<40x32xf32>
    %128 = arith.mulf %127, %101 : vector<40x32xf32>
    %cst_66 = arith.constant -0.00737332925 : f32
    %129 = vector.broadcast %cst_66 : f32 to vector<40x32xf32>
    %130 = arith.addf %128, %129 : vector<40x32xf32>
    %131 = arith.mulf %130, %101 : vector<40x32xf32>
    %cst_67 = arith.constant -0.0142647391 : f32
    %132 = vector.broadcast %cst_67 : f32 to vector<40x32xf32>
    %133 = arith.addf %131, %132 : vector<40x32xf32>
    %134 = arith.mulf %100, %120 : vector<40x32xf32>
    %135 = arith.divf %134, %133 : vector<40x32xf32>
    %cst_68 = arith.constant 1.000000e+00 : f32
    %136 = vector.broadcast %cst_68 : f32 to vector<40x32xf32>
    %137 = arith.addf %136, %135 : vector<40x32xf32>
    %138 = arith.mulf %94, %137 : vector<40x32xf32>
    %c0_69 = arith.constant 0 : index
    %c0_70 = arith.constant 0 : index
    %c0_71 = arith.constant 0 : index
    %139 = vector.load %arg13[%c0_69, %c0_70, %c0_71] : memref<2x16x32xf32, #tpu.memory_space<vmem>>, vector<1x16x32xf32>
    %140 = vector.shape_cast %139 : vector<1x16x32xf32> to vector<16x32xf32>
    %cst_72 = arith.constant dense<0.000000e+00> : vector<40x16xf32>
    %141 = tpu.matmul %138, %140, %cst_72 {dimension_numbers = #tpu.dot_dimension_numbers<[1], [1], [0], [0], [0, 0, 1, 0], [], []>} : vector<40x32xf32>, vector<16x32xf32>, vector<40x16xf32> -> vector<40x16xf32>
    %c0_73 = arith.constant 0 : index
    %c0_74 = arith.constant 0 : index
    %c0_75 = arith.constant 0 : index
    %142 = vector.load %arg14[%c0_73, %c0_74, %c0_75] : memref<2x1x16xf32, #tpu.memory_space<vmem>>, vector<1x1x16xf32>
    %143 = vector.shape_cast %142 : vector<1x1x16xf32> to vector<1x16xf32>
    %144 = vector.broadcast %143 : vector<1x16xf32> to vector<40x16xf32>
    %145 = arith.addf %141, %144 : vector<40x16xf32>
    %c0_76 = arith.constant 0 : index
    %c0_77 = arith.constant 0 : index
    %c0_78 = arith.constant 0 : index
    %146 = vector.load %arg15[%c0_76, %c0_77, %c0_78] : memref<2x1x16xf32, #tpu.memory_space<vmem>>, vector<1x1x16xf32>
    %147 = vector.shape_cast %146 : vector<1x1x16xf32> to vector<1x16xf32>
    %c0_79 = arith.constant 0 : index
    %c0_80 = arith.constant 0 : index
    %c0_81 = arith.constant 0 : index
    %148 = vector.load %arg16[%c0_79, %c0_80, %c0_81] : memref<2x1x16xf32, #tpu.memory_space<vmem>>, vector<1x1x16xf32>
    %149 = vector.shape_cast %148 : vector<1x1x16xf32> to vector<1x16xf32>
    %150 = arith.addf %85, %145 : vector<40x16xf32>
    %cst_82 = arith.constant dense<0.000000e+00> : vector<16xf32>
    %151 = vector.multi_reduction <add>, %150, %cst_82 [0] : vector<40x16xf32> to vector<16xf32>
    %152 = vector.shape_cast %151 : vector<16xf32> to vector<1x16xf32>
    %cst_83 = arith.constant 4.000000e+01 : f32
    %153 = vector.broadcast %cst_83 : f32 to vector<1x16xf32>
    %154 = arith.divf %152, %153 : vector<1x16xf32>
    %155 = vector.broadcast %154 : vector<1x16xf32> to vector<40x16xf32>
    %156 = arith.subf %150, %155 : vector<40x16xf32>
    %157 = arith.mulf %156, %156 : vector<40x16xf32>
    %cst_84 = arith.constant dense<0.000000e+00> : vector<16xf32>
    %158 = vector.multi_reduction <add>, %157, %cst_84 [0] : vector<40x16xf32> to vector<16xf32>
    %159 = vector.shape_cast %158 : vector<16xf32> to vector<1x16xf32>
    %cst_85 = arith.constant 4.000000e+01 : f32
    %160 = vector.broadcast %cst_85 : f32 to vector<1x16xf32>
    %161 = arith.divf %159, %160 : vector<1x16xf32>
    %cst_86 = arith.constant 9.99999974E-6 : f32
    %162 = vector.broadcast %cst_86 : f32 to vector<1x16xf32>
    %163 = arith.addf %161, %162 : vector<1x16xf32>
    %164 = math.rsqrt %163 : vector<1x16xf32>
    %165 = vector.broadcast %164 : vector<1x16xf32> to vector<40x16xf32>
    %166 = arith.mulf %156, %165 : vector<40x16xf32>
    %167 = vector.broadcast %147 : vector<1x16xf32> to vector<40x16xf32>
    %168 = arith.mulf %166, %167 : vector<40x16xf32>
    %169 = vector.broadcast %149 : vector<1x16xf32> to vector<40x16xf32>
    %170 = arith.addf %168, %169 : vector<40x16xf32>
    %c1 = arith.constant 1 : index
    %c0_87 = arith.constant 0 : index
    %c0_88 = arith.constant 0 : index
    %171 = vector.load %arg5[%c1, %c0_87, %c0_88] : memref<2x48x16xf32, #tpu.memory_space<vmem>>, vector<1x48x16xf32>
    %172 = vector.shape_cast %171 : vector<1x48x16xf32> to vector<48x16xf32>
    %cst_89 = arith.constant dense<0.000000e+00> : vector<40x48xf32>
    %173 = tpu.matmul %170, %172, %cst_89 {dimension_numbers = #tpu.dot_dimension_numbers<[1], [1], [0], [0], [0, 0, 1, 0], [], []>} : vector<40x16xf32>, vector<48x16xf32>, vector<40x48xf32> -> vector<40x48xf32>
    %c1_90 = arith.constant 1 : index
    %c0_91 = arith.constant 0 : index
    %c0_92 = arith.constant 0 : index
    %174 = vector.load %arg6[%c1_90, %c0_91, %c0_92] : memref<2x1x48xf32, #tpu.memory_space<vmem>>, vector<1x1x48xf32>
    %175 = vector.shape_cast %174 : vector<1x1x48xf32> to vector<1x48xf32>
    %176 = vector.broadcast %175 : vector<1x48xf32> to vector<40x48xf32>
    %177 = arith.addf %173, %176 : vector<40x48xf32>
    %c1_93 = arith.constant 1 : index
    %c0_94 = arith.constant 0 : index
    %c0_95 = arith.constant 0 : index
    %178 = vector.load %arg7[%c1_93, %c0_94, %c0_95] : memref<2x16x16xf32, #tpu.memory_space<vmem>>, vector<1x16x16xf32>
    %179 = vector.shape_cast %178 : vector<1x16x16xf32> to vector<16x16xf32>
    %c1_96 = arith.constant 1 : index
    %c0_97 = arith.constant 0 : index
    %c0_98 = arith.constant 0 : index
    %180 = vector.load %arg8[%c1_96, %c0_97, %c0_98] : memref<2x1x16xf32, #tpu.memory_space<vmem>>, vector<1x1x16xf32>
    %181 = vector.shape_cast %180 : vector<1x1x16xf32> to vector<1x16xf32>
    %182 = vector.extract_strided_slice %177 {offsets = [0, 0], sizes = [40, 8], strides = [1, 1]} : vector<40x48xf32> to vector<40x8xf32>
    %183 = vector.extract_strided_slice %177 {offsets = [0, 16], sizes = [40, 8], strides = [1, 1]} : vector<40x48xf32> to vector<40x8xf32>
    %184 = vector.extract_strided_slice %177 {offsets = [0, 32], sizes = [40, 8], strides = [1, 1]} : vector<40x48xf32> to vector<40x8xf32>
    %cst_99 = arith.constant dense<0.000000e+00> : vector<40x40xf32>
    %185 = tpu.matmul %182, %183, %cst_99 {dimension_numbers = #tpu.dot_dimension_numbers<[1], [1], [0], [0], [0, 0, 1, 0], [], []>} : vector<40x8xf32>, vector<40x8xf32>, vector<40x40xf32> -> vector<40x40xf32>
    %cst_100 = arith.constant 0.353553385 : f32
    %186 = vector.broadcast %cst_100 : f32 to vector<40x40xf32>
    %187 = arith.mulf %185, %186 : vector<40x40xf32>
    %188 = arith.addf %187, %25 : vector<40x40xf32>
    %189 = arith.addf %188, %8 : vector<40x40xf32>
    %cst_101 = arith.constant dense<0xFF800000> : vector<40xf32>
    %190 = vector.multi_reduction <maximumf>, %189, %cst_101 [1] : vector<40x40xf32> to vector<40xf32>
    %191 = vector.shape_cast %190 : vector<40xf32> to vector<40x1xf32>
    %192 = vector.broadcast %191 : vector<40x1xf32> to vector<40x40xf32>
    %193 = arith.subf %189, %192 : vector<40x40xf32>
    %194 = math.exp %193 : vector<40x40xf32>
    %cst_102 = arith.constant dense<0.000000e+00> : vector<40xf32>
    %195 = vector.multi_reduction <add>, %194, %cst_102 [1] : vector<40x40xf32> to vector<40xf32>
    %196 = vector.shape_cast %195 : vector<40xf32> to vector<40x1xf32>
    %197 = vector.broadcast %196 : vector<40x1xf32> to vector<40x40xf32>
    %198 = arith.divf %194, %197 : vector<40x40xf32>
    %cst_103 = arith.constant dense<0.000000e+00> : vector<40x8xf32>
    %199 = tpu.matmul %198, %184, %cst_103 {dimension_numbers = #tpu.dot_dimension_numbers<[1], [0], [0], [1], [0, 0, 1, 1], [], []>} : vector<40x40xf32>, vector<40x8xf32>, vector<40x8xf32> -> vector<40x8xf32>
    %200 = vector.extract_strided_slice %179 {offsets = [0, 0], sizes = [16, 8], strides = [1, 1]} : vector<16x16xf32> to vector<16x8xf32>
    %cst_104 = arith.constant dense<0.000000e+00> : vector<40x16xf32>
    %201 = tpu.matmul %199, %200, %cst_104 {dimension_numbers = #tpu.dot_dimension_numbers<[1], [1], [0], [0], [0, 0, 1, 0], [], []>} : vector<40x8xf32>, vector<16x8xf32>, vector<40x16xf32> -> vector<40x16xf32>
    %202 = vector.broadcast %181 : vector<1x16xf32> to vector<40x16xf32>
    %203 = arith.addf %202, %201 : vector<40x16xf32>
    %204 = vector.extract_strided_slice %177 {offsets = [0, 8], sizes = [40, 8], strides = [1, 1]} : vector<40x48xf32> to vector<40x8xf32>
    %205 = vector.extract_strided_slice %177 {offsets = [0, 24], sizes = [40, 8], strides = [1, 1]} : vector<40x48xf32> to vector<40x8xf32>
    %206 = vector.extract_strided_slice %177 {offsets = [0, 40], sizes = [40, 8], strides = [1, 1]} : vector<40x48xf32> to vector<40x8xf32>
    %cst_105 = arith.constant dense<0.000000e+00> : vector<40x40xf32>
    %207 = tpu.matmul %204, %205, %cst_105 {dimension_numbers = #tpu.dot_dimension_numbers<[1], [1], [0], [0], [0, 0, 1, 0], [], []>} : vector<40x8xf32>, vector<40x8xf32>, vector<40x40xf32> -> vector<40x40xf32>
    %cst_106 = arith.constant 0.353553385 : f32
    %208 = vector.broadcast %cst_106 : f32 to vector<40x40xf32>
    %209 = arith.mulf %207, %208 : vector<40x40xf32>
    %210 = arith.addf %209, %46 : vector<40x40xf32>
    %211 = arith.addf %210, %8 : vector<40x40xf32>
    %cst_107 = arith.constant dense<0xFF800000> : vector<40xf32>
    %212 = vector.multi_reduction <maximumf>, %211, %cst_107 [1] : vector<40x40xf32> to vector<40xf32>
    %213 = vector.shape_cast %212 : vector<40xf32> to vector<40x1xf32>
    %214 = vector.broadcast %213 : vector<40x1xf32> to vector<40x40xf32>
    %215 = arith.subf %211, %214 : vector<40x40xf32>
    %216 = math.exp %215 : vector<40x40xf32>
    %cst_108 = arith.constant dense<0.000000e+00> : vector<40xf32>
    %217 = vector.multi_reduction <add>, %216, %cst_108 [1] : vector<40x40xf32> to vector<40xf32>
    %218 = vector.shape_cast %217 : vector<40xf32> to vector<40x1xf32>
    %219 = vector.broadcast %218 : vector<40x1xf32> to vector<40x40xf32>
    %220 = arith.divf %216, %219 : vector<40x40xf32>
    %cst_109 = arith.constant dense<0.000000e+00> : vector<40x8xf32>
    %221 = tpu.matmul %220, %206, %cst_109 {dimension_numbers = #tpu.dot_dimension_numbers<[1], [0], [0], [1], [0, 0, 1, 1], [], []>} : vector<40x40xf32>, vector<40x8xf32>, vector<40x8xf32> -> vector<40x8xf32>
    %222 = vector.extract_strided_slice %179 {offsets = [0, 8], sizes = [16, 8], strides = [1, 1]} : vector<16x16xf32> to vector<16x8xf32>
    %cst_110 = arith.constant dense<0.000000e+00> : vector<40x16xf32>
    %223 = tpu.matmul %221, %222, %cst_110 {dimension_numbers = #tpu.dot_dimension_numbers<[1], [1], [0], [0], [0, 0, 1, 0], [], []>} : vector<40x8xf32>, vector<16x8xf32>, vector<40x16xf32> -> vector<40x16xf32>
    %224 = arith.addf %203, %223 : vector<40x16xf32>
    %c1_111 = arith.constant 1 : index
    %c0_112 = arith.constant 0 : index
    %c0_113 = arith.constant 0 : index
    %225 = vector.load %arg9[%c1_111, %c0_112, %c0_113] : memref<2x1x16xf32, #tpu.memory_space<vmem>>, vector<1x1x16xf32>
    %226 = vector.shape_cast %225 : vector<1x1x16xf32> to vector<1x16xf32>
    %c1_114 = arith.constant 1 : index
    %c0_115 = arith.constant 0 : index
    %c0_116 = arith.constant 0 : index
    %227 = vector.load %arg10[%c1_114, %c0_115, %c0_116] : memref<2x1x16xf32, #tpu.memory_space<vmem>>, vector<1x1x16xf32>
    %228 = vector.shape_cast %227 : vector<1x1x16xf32> to vector<1x16xf32>
    %229 = arith.addf %170, %224 : vector<40x16xf32>
    %cst_117 = arith.constant dense<0.000000e+00> : vector<16xf32>
    %230 = vector.multi_reduction <add>, %229, %cst_117 [0] : vector<40x16xf32> to vector<16xf32>
    %231 = vector.shape_cast %230 : vector<16xf32> to vector<1x16xf32>
    %cst_118 = arith.constant 4.000000e+01 : f32
    %232 = vector.broadcast %cst_118 : f32 to vector<1x16xf32>
    %233 = arith.divf %231, %232 : vector<1x16xf32>
    %234 = vector.broadcast %233 : vector<1x16xf32> to vector<40x16xf32>
    %235 = arith.subf %229, %234 : vector<40x16xf32>
    %236 = arith.mulf %235, %235 : vector<40x16xf32>
    %cst_119 = arith.constant dense<0.000000e+00> : vector<16xf32>
    %237 = vector.multi_reduction <add>, %236, %cst_119 [0] : vector<40x16xf32> to vector<16xf32>
    %238 = vector.shape_cast %237 : vector<16xf32> to vector<1x16xf32>
    %cst_120 = arith.constant 4.000000e+01 : f32
    %239 = vector.broadcast %cst_120 : f32 to vector<1x16xf32>
    %240 = arith.divf %238, %239 : vector<1x16xf32>
    %cst_121 = arith.constant 9.99999974E-6 : f32
    %241 = vector.broadcast %cst_121 : f32 to vector<1x16xf32>
    %242 = arith.addf %240, %241 : vector<1x16xf32>
    %243 = math.rsqrt %242 : vector<1x16xf32>
    %244 = vector.broadcast %243 : vector<1x16xf32> to vector<40x16xf32>
    %245 = arith.mulf %235, %244 : vector<40x16xf32>
    %246 = vector.broadcast %226 : vector<1x16xf32> to vector<40x16xf32>
    %247 = arith.mulf %245, %246 : vector<40x16xf32>
    %248 = vector.broadcast %228 : vector<1x16xf32> to vector<40x16xf32>
    %249 = arith.addf %247, %248 : vector<40x16xf32>
    %c1_122 = arith.constant 1 : index
    %c0_123 = arith.constant 0 : index
    %c0_124 = arith.constant 0 : index
    %250 = vector.load %arg11[%c1_122, %c0_123, %c0_124] : memref<2x32x16xf32, #tpu.memory_space<vmem>>, vector<1x32x16xf32>
    %251 = vector.shape_cast %250 : vector<1x32x16xf32> to vector<32x16xf32>
    %cst_125 = arith.constant dense<0.000000e+00> : vector<40x32xf32>
    %252 = tpu.matmul %249, %251, %cst_125 {dimension_numbers = #tpu.dot_dimension_numbers<[1], [1], [0], [0], [0, 0, 1, 0], [], []>} : vector<40x16xf32>, vector<32x16xf32>, vector<40x32xf32> -> vector<40x32xf32>
    %c1_126 = arith.constant 1 : index
    %c0_127 = arith.constant 0 : index
    %c0_128 = arith.constant 0 : index
    %253 = vector.load %arg12[%c1_126, %c0_127, %c0_128] : memref<2x1x32xf32, #tpu.memory_space<vmem>>, vector<1x1x32xf32>
    %254 = vector.shape_cast %253 : vector<1x1x32xf32> to vector<1x32xf32>
    %255 = vector.broadcast %254 : vector<1x32xf32> to vector<40x32xf32>
    %256 = arith.addf %252, %255 : vector<40x32xf32>
    %cst_129 = arith.constant 5.000000e-01 : f32
    %257 = vector.broadcast %cst_129 : f32 to vector<40x32xf32>
    %258 = arith.mulf %257, %256 : vector<40x32xf32>
    %cst_130 = arith.constant 0.707106769 : f32
    %259 = vector.broadcast %cst_130 : f32 to vector<40x32xf32>
    %260 = arith.mulf %256, %259 : vector<40x32xf32>
    %cst_131 = arith.constant -4.000000e+00 : f32
    %cst_132 = arith.constant 4.000000e+00 : f32
    %261 = vector.broadcast %cst_131 : f32 to vector<40x32xf32>
    %262 = arith.maximumf %261, %260 : vector<40x32xf32>
    %263 = vector.broadcast %cst_132 : f32 to vector<40x32xf32>
    %264 = arith.minimumf %263, %262 : vector<40x32xf32>
    %265 = arith.mulf %264, %264 : vector<40x32xf32>
    %cst_133 = arith.constant -2.72614237E-10 : f32
    %266 = vector.broadcast %cst_133 : f32 to vector<40x32xf32>
    %267 = arith.mulf %266, %265 : vector<40x32xf32>
    %cst_134 = arith.constant 2.77068146E-8 : f32
    %268 = vector.broadcast %cst_134 : f32 to vector<40x32xf32>
    %269 = arith.addf %267, %268 : vector<40x32xf32>
    %270 = arith.mulf %269, %265 : vector<40x32xf32>
    %cst_135 = arith.constant -2.10102394E-6 : f32
    %271 = vector.broadcast %cst_135 : f32 to vector<40x32xf32>
    %272 = arith.addf %270, %271 : vector<40x32xf32>
    %273 = arith.mulf %272, %265 : vector<40x32xf32>
    %cst_136 = arith.constant -5.69250624E-5 : f32
    %274 = vector.broadcast %cst_136 : f32 to vector<40x32xf32>
    %275 = arith.addf %273, %274 : vector<40x32xf32>
    %276 = arith.mulf %275, %265 : vector<40x32xf32>
    %cst_137 = arith.constant -7.34990637E-4 : f32
    %277 = vector.broadcast %cst_137 : f32 to vector<40x32xf32>
    %278 = arith.addf %276, %277 : vector<40x32xf32>
    %279 = arith.mulf %278, %265 : vector<40x32xf32>
    %cst_138 = arith.constant -2.954600e-03 : f32
    %280 = vector.broadcast %cst_138 : f32 to vector<40x32xf32>
    %281 = arith.addf %279, %280 : vector<40x32xf32>
    %282 = arith.mulf %281, %265 : vector<40x32xf32>
    %cst_139 = arith.constant -0.0160960332 : f32
    %283 = vector.broadcast %cst_139 : f32 to vector<40x32xf32>
    %284 = arith.addf %282, %283 : vector<40x32xf32>
    %cst_140 = arith.constant -1.45660715E-5 : f32
    %285 = vector.broadcast %cst_140 : f32 to vector<40x32xf32>
    %286 = arith.mulf %285, %265 : vector<40x32xf32>
    %cst_141 = arith.constant -2.13374049E-4 : f32
    %287 = vector.broadcast %cst_141 : f32 to vector<40x32xf32>
    %288 = arith.addf %286, %287 : vector<40x32xf32>
    %289 = arith.mulf %288, %265 : vector<40x32xf32>
    %cst_142 = arith.constant -0.00168282702 : f32
    %290 = vector.broadcast %cst_142 : f32 to vector<40x32xf32>
    %291 = arith.addf %289, %290 : vector<40x32xf32>
    %292 = arith.mulf %291, %265 : vector<40x32xf32>
    %cst_143 = arith.constant -0.00737332925 : f32
    %293 = vector.broadcast %cst_143 : f32 to vector<40x32xf32>
    %294 = arith.addf %292, %293 : vector<40x32xf32>
    %295 = arith.mulf %294, %265 : vector<40x32xf32>
    %cst_144 = arith.constant -0.0142647391 : f32
    %296 = vector.broadcast %cst_144 : f32 to vector<40x32xf32>
    %297 = arith.addf %295, %296 : vector<40x32xf32>
    %298 = arith.mulf %264, %284 : vector<40x32xf32>
    %299 = arith.divf %298, %297 : vector<40x32xf32>
    %cst_145 = arith.constant 1.000000e+00 : f32
    %300 = vector.broadcast %cst_145 : f32 to vector<40x32xf32>
    %301 = arith.addf %300, %299 : vector<40x32xf32>
    %302 = arith.mulf %258, %301 : vector<40x32xf32>
    %c1_146 = arith.constant 1 : index
    %c0_147 = arith.constant 0 : index
    %c0_148 = arith.constant 0 : index
    %303 = vector.load %arg13[%c1_146, %c0_147, %c0_148] : memref<2x16x32xf32, #tpu.memory_space<vmem>>, vector<1x16x32xf32>
    %304 = vector.shape_cast %303 : vector<1x16x32xf32> to vector<16x32xf32>
    %cst_149 = arith.constant dense<0.000000e+00> : vector<40x16xf32>
    %305 = tpu.matmul %302, %304, %cst_149 {dimension_numbers = #tpu.dot_dimension_numbers<[1], [1], [0], [0], [0, 0, 1, 0], [], []>} : vector<40x32xf32>, vector<16x32xf32>, vector<40x16xf32> -> vector<40x16xf32>
    %c1_150 = arith.constant 1 : index
    %c0_151 = arith.constant 0 : index
    %c0_152 = arith.constant 0 : index
    %306 = vector.load %arg14[%c1_150, %c0_151, %c0_152] : memref<2x1x16xf32, #tpu.memory_space<vmem>>, vector<1x1x16xf32>
    %307 = vector.shape_cast %306 : vector<1x1x16xf32> to vector<1x16xf32>
    %308 = vector.broadcast %307 : vector<1x16xf32> to vector<40x16xf32>
    %309 = arith.addf %305, %308 : vector<40x16xf32>
    %c1_153 = arith.constant 1 : index
    %c0_154 = arith.constant 0 : index
    %c0_155 = arith.constant 0 : index
    %310 = vector.load %arg15[%c1_153, %c0_154, %c0_155] : memref<2x1x16xf32, #tpu.memory_space<vmem>>, vector<1x1x16xf32>
    %311 = vector.shape_cast %310 : vector<1x1x16xf32> to vector<1x16xf32>
    %c1_156 = arith.constant 1 : index
    %c0_157 = arith.constant 0 : index
    %c0_158 = arith.constant 0 : index
    %312 = vector.load %arg16[%c1_156, %c0_157, %c0_158] : memref<2x1x16xf32, #tpu.memory_space<vmem>>, vector<1x1x16xf32>
    %313 = vector.shape_cast %312 : vector<1x1x16xf32> to vector<1x16xf32>
    %314 = arith.addf %249, %309 : vector<40x16xf32>
    %cst_159 = arith.constant dense<0.000000e+00> : vector<16xf32>
    %315 = vector.multi_reduction <add>, %314, %cst_159 [0] : vector<40x16xf32> to vector<16xf32>
    %316 = vector.shape_cast %315 : vector<16xf32> to vector<1x16xf32>
    %cst_160 = arith.constant 4.000000e+01 : f32
    %317 = vector.broadcast %cst_160 : f32 to vector<1x16xf32>
    %318 = arith.divf %316, %317 : vector<1x16xf32>
    %319 = vector.broadcast %318 : vector<1x16xf32> to vector<40x16xf32>
    %320 = arith.subf %314, %319 : vector<40x16xf32>
    %321 = arith.mulf %320, %320 : vector<40x16xf32>
    %cst_161 = arith.constant dense<0.000000e+00> : vector<16xf32>
    %322 = vector.multi_reduction <add>, %321, %cst_161 [0] : vector<40x16xf32> to vector<16xf32>
    %323 = vector.shape_cast %322 : vector<16xf32> to vector<1x16xf32>
    %cst_162 = arith.constant 4.000000e+01 : f32
    %324 = vector.broadcast %cst_162 : f32 to vector<1x16xf32>
    %325 = arith.divf %323, %324 : vector<1x16xf32>
    %cst_163 = arith.constant 9.99999974E-6 : f32
    %326 = vector.broadcast %cst_163 : f32 to vector<1x16xf32>
    %327 = arith.addf %325, %326 : vector<1x16xf32>
    %328 = math.rsqrt %327 : vector<1x16xf32>
    %329 = vector.broadcast %328 : vector<1x16xf32> to vector<40x16xf32>
    %330 = arith.mulf %320, %329 : vector<40x16xf32>
    %331 = vector.broadcast %311 : vector<1x16xf32> to vector<40x16xf32>
    %332 = arith.mulf %330, %331 : vector<40x16xf32>
    %333 = vector.broadcast %313 : vector<1x16xf32> to vector<40x16xf32>
    %334 = arith.addf %332, %333 : vector<40x16xf32>
    %c0_164 = arith.constant 0 : index
    %c0_165 = arith.constant 0 : index
    %335 = vector.load %arg18[%c0_164, %c0_165] : memref<1x8xf32, #tpu.memory_space<vmem>>, vector<1x8xf32>
    %336 = vector.extract_strided_slice %334 {offsets = [0, 0], sizes = [8, 16], strides = [1, 1]} : vector<40x16xf32> to vector<8x16xf32>
    %c0_166 = arith.constant 0 : index
    %c0_167 = arith.constant 0 : index
    %c0_168 = arith.constant 0 : index
    %337 = vector.load %arg17[%c0_166, %c0_167, %c0_168] : memref<5x8x16xf32, #tpu.memory_space<vmem>>, vector<1x8x16xf32>
    %338 = vector.shape_cast %337 : vector<1x8x16xf32> to vector<8x16xf32>
    %cst_169 = arith.constant dense<0.000000e+00> : vector<8x8xf32>
    %339 = tpu.matmul %336, %338, %cst_169 {dimension_numbers = #tpu.dot_dimension_numbers<[1], [1], [0], [0], [0, 0, 1, 0], [], []>} : vector<8x16xf32>, vector<8x16xf32>, vector<8x8xf32> -> vector<8x8xf32>
    %340 = vector.broadcast %335 : vector<1x8xf32> to vector<8x8xf32>
    %341 = arith.addf %340, %339 : vector<8x8xf32>
    %342 = vector.extract_strided_slice %334 {offsets = [8, 0], sizes = [8, 16], strides = [1, 1]} : vector<40x16xf32> to vector<8x16xf32>
    %c1_170 = arith.constant 1 : index
    %c0_171 = arith.constant 0 : index
    %c0_172 = arith.constant 0 : index
    %343 = vector.load %arg17[%c1_170, %c0_171, %c0_172] : memref<5x8x16xf32, #tpu.memory_space<vmem>>, vector<1x8x16xf32>
    %344 = vector.shape_cast %343 : vector<1x8x16xf32> to vector<8x16xf32>
    %cst_173 = arith.constant dense<0.000000e+00> : vector<8x8xf32>
    %345 = tpu.matmul %342, %344, %cst_173 {dimension_numbers = #tpu.dot_dimension_numbers<[1], [1], [0], [0], [0, 0, 1, 0], [], []>} : vector<8x16xf32>, vector<8x16xf32>, vector<8x8xf32> -> vector<8x8xf32>
    %346 = arith.addf %341, %345 : vector<8x8xf32>
    %347 = vector.extract_strided_slice %334 {offsets = [16, 0], sizes = [8, 16], strides = [1, 1]} : vector<40x16xf32> to vector<8x16xf32>
    %c2 = arith.constant 2 : index
    %c0_174 = arith.constant 0 : index
    %c0_175 = arith.constant 0 : index
    %348 = vector.load %arg17[%c2, %c0_174, %c0_175] : memref<5x8x16xf32, #tpu.memory_space<vmem>>, vector<1x8x16xf32>
    %349 = vector.shape_cast %348 : vector<1x8x16xf32> to vector<8x16xf32>
    %cst_176 = arith.constant dense<0.000000e+00> : vector<8x8xf32>
    %350 = tpu.matmul %347, %349, %cst_176 {dimension_numbers = #tpu.dot_dimension_numbers<[1], [1], [0], [0], [0, 0, 1, 0], [], []>} : vector<8x16xf32>, vector<8x16xf32>, vector<8x8xf32> -> vector<8x8xf32>
    %351 = arith.addf %346, %350 : vector<8x8xf32>
    %352 = vector.extract_strided_slice %334 {offsets = [24, 0], sizes = [8, 16], strides = [1, 1]} : vector<40x16xf32> to vector<8x16xf32>
    %c3 = arith.constant 3 : index
    %c0_177 = arith.constant 0 : index
    %c0_178 = arith.constant 0 : index
    %353 = vector.load %arg17[%c3, %c0_177, %c0_178] : memref<5x8x16xf32, #tpu.memory_space<vmem>>, vector<1x8x16xf32>
    %354 = vector.shape_cast %353 : vector<1x8x16xf32> to vector<8x16xf32>
    %cst_179 = arith.constant dense<0.000000e+00> : vector<8x8xf32>
    %355 = tpu.matmul %352, %354, %cst_179 {dimension_numbers = #tpu.dot_dimension_numbers<[1], [1], [0], [0], [0, 0, 1, 0], [], []>} : vector<8x16xf32>, vector<8x16xf32>, vector<8x8xf32> -> vector<8x8xf32>
    %356 = arith.addf %351, %355 : vector<8x8xf32>
    %357 = vector.extract_strided_slice %334 {offsets = [32, 0], sizes = [8, 16], strides = [1, 1]} : vector<40x16xf32> to vector<8x16xf32>
    %c4 = arith.constant 4 : index
    %c0_180 = arith.constant 0 : index
    %c0_181 = arith.constant 0 : index
    %358 = vector.load %arg17[%c4, %c0_180, %c0_181] : memref<5x8x16xf32, #tpu.memory_space<vmem>>, vector<1x8x16xf32>
    %359 = vector.shape_cast %358 : vector<1x8x16xf32> to vector<8x16xf32>
    %cst_182 = arith.constant dense<0.000000e+00> : vector<8x8xf32>
    %360 = tpu.matmul %357, %359, %cst_182 {dimension_numbers = #tpu.dot_dimension_numbers<[1], [1], [0], [0], [0, 0, 1, 0], [], []>} : vector<8x16xf32>, vector<8x16xf32>, vector<8x8xf32> -> vector<8x8xf32>
    %361 = arith.addf %356, %360 : vector<8x8xf32>
    %c0_183 = arith.constant 0 : index
    %c0_184 = arith.constant 0 : index
    %362 = vector.load %arg19[%c0_183, %c0_184] : memref<8x8xf32, #tpu.memory_space<vmem>>, vector<8x8xf32>
    tpu.vector_store %arg19[%c0_183, %c0_184], %361 {strides = array<i32>} : memref<8x8xf32, #tpu.memory_space<vmem>>, vector<8x8xf32>,
    return
  }
}

</mosaic_0001>

<llo_original>
// kernel: patchtst_forward.1
$region0: #{patchtst_forward.1}
  #allocation0 [shape = 'u32[]', space=smem, size = 0x4, offset = 0x4, fixed_abs, tag = 'smem constant byte address 0x4 - core index']
  #allocation1 [shape = 'u32[144,128]{1,0:T(1,128)}', space=vmem, size = 0x12000, scoped, tag = 'internal scratch']
  %s0 = inlined_call_operand.vmem [shape: f32[40,4], index: 0, kind: input, shape index: {}]
  %s1 = inlined_call_operand.vmem [shape: f32[16,4], index: 1, kind: input, shape index: {}]
  %s2 = inlined_call_operand.vmem [shape: f32[1,16], index: 2, kind: input, shape index: {}]
  %s3 = inlined_call_operand.vmem [shape: f32[40,16], index: 3, kind: input, shape index: {}]
  %s4 = inlined_call_operand.vmem [shape: f32[40,40], index: 4, kind: input, shape index: {}]
  %s5 = inlined_call_operand.vmem [shape: f32[2,48,16], index: 5, kind: input, shape index: {}]
  %s6 = inlined_call_operand.vmem [shape: f32[2,1,48], index: 6, kind: input, shape index: {}]
  %s7 = inlined_call_operand.vmem [shape: f32[2,16,16], index: 7, kind: input, shape index: {}]
  %s8 = inlined_call_operand.vmem [shape: f32[2,1,16], index: 8, kind: input, shape index: {}]
  %s9 = inlined_call_operand.vmem [shape: f32[2,1,16], index: 9, kind: input, shape index: {}]
  %s10 = inlined_call_operand.vmem [shape: f32[2,1,16], index: 10, kind: input, shape index: {}]
  %s11 = inlined_call_operand.vmem [shape: f32[2,32,16], index: 11, kind: input, shape index: {}]
  %s12 = inlined_call_operand.vmem [shape: f32[2,1,32], index: 12, kind: input, shape index: {}]
  %s13 = inlined_call_operand.vmem [shape: f32[2,16,32], index: 13, kind: input, shape index: {}]
  %s14 = inlined_call_operand.vmem [shape: f32[2,1,16], index: 14, kind: input, shape index: {}]
  %s15 = inlined_call_operand.vmem [shape: f32[2,1,16], index: 15, kind: input, shape index: {}]
  %s16 = inlined_call_operand.vmem [shape: f32[2,1,16], index: 16, kind: input, shape index: {}]
  %s17 = inlined_call_operand.vmem [shape: f32[5,8,16], index: 17, kind: input, shape index: {}]
  %s18 = inlined_call_operand.vmem [shape: f32[1,8], index: 18, kind: input, shape index: {}]
  %s19 = inlined_call_operand.vmem [shape: f32[8,8], index: 19, kind: output, shape index: {}]
  %s20 = sld [smem:[#allocation0]]
  $region86: #{patchtst_forward.1} parent=0
    _
  %s22 = ssub.s32 1, %s20
  %s23 = scalar_select 0, %s22, %s20
  // Predicated region
  $region2: #{patchtst_forward.1} parent=0 // pred_check
    _
  $region3: #{patchtst_forward.1} parent=0 // pred_check_branch
    %25 = sbr.rel (0) target = $region5
  $region4: #{patchtst_forward.1} parent=0 // pred_region
    _
  $region5: #{patchtst_forward.1} parent=0 // pred_fallthru
    _
  // Predicated region
  $region6: #{patchtst_forward.1} parent=0 // pred_check
    _
  $region7: #{patchtst_forward.1} parent=0 // pred_check_branch
    %27 = sbr.rel (0) target = $region9
  $region8: #{patchtst_forward.1} parent=0 // pred_region
    _
  $region9: #{patchtst_forward.1} parent=0 // pred_fallthru
    _
  // Predicated region
  $region10: #{patchtst_forward.1} parent=0 // pred_check
    _
  $region11: #{patchtst_forward.1} parent=0 // pred_check_branch
    %29 = sbr.rel (0) target = $region13
  $region12: #{patchtst_forward.1} parent=0 // pred_region
    _
  $region13: #{patchtst_forward.1} parent=0 // pred_fallthru
    _
  // Predicated region
  $region14: #{patchtst_forward.1} parent=0 // pred_check
    _
  $region15: #{patchtst_forward.1} parent=0 // pred_check_branch
    %31 = sbr.rel (0) target = $region17
  $region16: #{patchtst_forward.1} parent=0 // pred_region
    _
  $region17: #{patchtst_forward.1} parent=0 // pred_fallthru
    _
  // Predicated region
  $region18: #{patchtst_forward.1} parent=0 // pred_check
    _
  $region19: #{patchtst_forward.1} parent=0 // pred_check_branch
    %33 = sbr.rel (0) target = $region21
  $region20: #{patchtst_forward.1} parent=0 // pred_region
    _
  $region21: #{patchtst_forward.1} parent=0 // pred_fallthru
    _
  // Predicated region
  $region22: #{patchtst_forward.1} parent=0 // pred_check
    _
  $region23: #{patchtst_forward.1} parent=0 // pred_check_branch
    %35 = sbr.rel (0) target = $region25
  $region24: #{patchtst_forward.1} parent=0 // pred_region
    _
  $region25: #{patchtst_forward.1} parent=0 // pred_fallthru
    _
  // Predicated region
  $region26: #{patchtst_forward.1} parent=0 // pred_check
    _
  $region27: #{patchtst_forward.1} parent=0 // pred_check_branch
    %37 = sbr.rel (0) target = $region29
  $region28: #{patchtst_forward.1} parent=0 // pred_region
    _
  $region29: #{patchtst_forward.1} parent=0 // pred_fallthru
    _
  // Predicated region
  $region30: #{patchtst_forward.1} parent=0 // pred_check
    _
  $region31: #{patchtst_forward.1} parent=0 // pred_check_branch
    %39 = sbr.rel (0) target = $region33
  $region32: #{patchtst_forward.1} parent=0 // pred_region
    _
  $region33: #{patchtst_forward.1} parent=0 // pred_fallthru
    _
  // Predicated region
  $region34: #{patchtst_forward.1} parent=0 // pred_check
    _
  $region35: #{patchtst_forward.1} parent=0 // pred_check_branch
    %41 = sbr.rel (0) target = $region37
  $region36: #{patchtst_forward.1} parent=0 // pred_region
    _
  $region37: #{patchtst_forward.1} parent=0 // pred_fallthru
    _
  // Predicated region
  $region38: #{patchtst_forward.1} parent=0 // pred_check
    _
  $region39: #{patchtst_forward.1} parent=0 // pred_check_branch
    %43 = sbr.rel (0) target = $region41
  $region40: #{patchtst_forward.1} parent=0 // pred_region
    _
  $region41: #{patchtst_forward.1} parent=0 // pred_fallthru
    _
  // Predicated region
  $region42: #{patchtst_forward.1} parent=0 // pred_check
    _
  $region43: #{patchtst_forward.1} parent=0 // pred_check_branch
    %45 = sbr.rel (0) target = $region45
  $region44: #{patchtst_forward.1} parent=0 // pred_region
    _
  $region45: #{patchtst_forward.1} parent=0 // pred_fallthru
    _
  // Predicated region
  $region46: #{patchtst_forward.1} parent=0 // pred_check
    _
  $region47: #{patchtst_forward.1} parent=0 // pred_check_branch
    %47 = sbr.rel (0) target = $region49
  $region48: #{patchtst_forward.1} parent=0 // pred_region
    _
  $region49: #{patchtst_forward.1} parent=0 // pred_fallthru
    _
  // Predicated region
  $region50: #{patchtst_forward.1} parent=0 // pred_check
    _
  $region51: #{patchtst_forward.1} parent=0 // pred_check_branch
    %49 = sbr.rel (0) target = $region53
  $region52: #{patchtst_forward.1} parent=0 // pred_region
    _
  $region53: #{patchtst_forward.1} parent=0 // pred_fallthru
    _
  // Predicated region
  $region54: #{patchtst_forward.1} parent=0 // pred_check
    _
  $region55: #{patchtst_forward.1} parent=0 // pred_check_branch
    %51 = sbr.rel (0) target = $region57
  $region56: #{patchtst_forward.1} parent=0 // pred_region
    _
  $region57: #{patchtst_forward.1} parent=0 // pred_fallthru
    _
  // Predicated region
  $region58: #{patchtst_forward.1} parent=0 // pred_check
    _
  $region59: #{patchtst_forward.1} parent=0 // pred_check_branch
    %53 = sbr.rel (0) target = $region61
  $region60: #{patchtst_forward.1} parent=0 // pred_region
    _
  $region61: #{patchtst_forward.1} parent=0 // pred_fallthru
    _
  // Predicated region
  $region62: #{patchtst_forward.1} parent=0 // pred_check
    _
  $region63: #{patchtst_forward.1} parent=0 // pred_check_branch
    %55 = sbr.rel (0) target = $region65
  $region64: #{patchtst_forward.1} parent=0 // pred_region
    _
  $region65: #{patchtst_forward.1} parent=0 // pred_fallthru
    _
  // Predicated region
  $region66: #{patchtst_forward.1} parent=0 // pred_check
    _
  $region67: #{patchtst_forward.1} parent=0 // pred_check_branch
    %57 = sbr.rel (0) target = $region69
  $region68: #{patchtst_forward.1} parent=0 // pred_region
    _
  $region69: #{patchtst_forward.1} parent=0 // pred_fallthru
    _
  // Predicated region
  $region70: #{patchtst_forward.1} parent=0 // pred_check
    _
  $region71: #{patchtst_forward.1} parent=0 // pred_check_branch
    %59 = sbr.rel (0) target = $region73
  $region72: #{patchtst_forward.1} parent=0 // pred_region
    _
  $region73: #{patchtst_forward.1} parent=0 // pred_fallthru
    _
  // Predicated region
  $region74: #{patchtst_forward.1} parent=0 // pred_check
    _
  $region75: #{patchtst_forward.1} parent=0 // pred_check_branch
    %61 = sbr.rel (0) target = $region77
  $region76: #{patchtst_forward.1} parent=0 // pred_region
    _
  $region77: #{patchtst_forward.1} parent=0 // pred_fallthru
    _
  %v62 = vld [vmem:[%s0] sm:$0xff]
  %v63 = vld [vmem:[%s0 + $0x8] sm:$0xff]
  %v64 = vld [vmem:[%s0 + $0x10] sm:$0xff]
  %v65 = vld [vmem:[%s0 + $0x18] sm:$0xff]
  %v66 = vld [vmem:[%s0 + $0x20] sm:$0xff]
  %v67 = vld [vmem:[%s1] sm:$0xff]
  %v68 = vld [vmem:[%s1 + $0x8] sm:$0xff]
  %v69 = vld [vmem:[%s2] sm:$0x1]
  %v71 = vlaneseq
  %v72 = vshrl.u32 %v71, 7
  %v73 = vsub.s32 0, %v72
  %v74 = vrot.slane %v69, %v73
  %vm76 = vcmask 31744
  %v78 = vsel %vm76, %v62, 0
  %v81 = vsel %vm76, %v63, 0
  %v84 = vsel %vm76, %v64, 0
  %v87 = vsel %vm76, %v65, 0
  %v90 = vsel %vm76, %v66, 0
  %v93 = vsel %vm76, %v67, 0
  %v96 = vsel %vm76, %v68, 0
  %98 = vmatprep.subr.mxu0 0.0
  %99 = vmatpush1.xpose.msra.mxu0 %v93
  %100 = vmatprep.subr.mxu0 0.0
  %101 = vmatpush1.xpose.msra.mxu0 %v96
  %102 = vmatprep.subr.mxu0 0.0
  %103 = vmatpush1.xpose.msra.mxu0 0.0
  %104 = vmatprep.subr.mxu0 0.0
  %105 = vmatpush1.xpose.msra.mxu0 0.0
  %106 = vmatprep.subr.mxu0 0.0
  %107 = vmatpush1.xpose.msra.mxu0 0.0
  %108 = vmatprep.subr.mxu0 0.0
  %109 = vmatpush1.xpose.msra.mxu0 0.0
  %110 = vmatprep.subr.mxu0 0.0
  %111 = vmatpush1.xpose.msra.mxu0 0.0
  %112 = vmatprep.subr.mxu0 0.0
  %113 = vmatpush1.xpose.msra.mxu0 0.0
  %114 = vmatprep.subr.mxu0 0.0
  %115 = vmatpush1.xpose.msra.mxu0 0.0
  %116 = vmatprep.subr.mxu0 0.0
  %117 = vmatpush1.xpose.msra.mxu0 0.0
  %118 = vmatprep.subr.mxu0 0.0
  %119 = vmatpush1.xpose.msra.mxu0 0.0
  %120 = vmatprep.subr.mxu0 0.0
  %121 = vmatpush1.xpose.msra.mxu0 0.0
  %122 = vmatprep.subr.mxu0 0.0
  %123 = vmatpush1.xpose.msra.mxu0 0.0
  %124 = vmatprep.subr.mxu0 0.0
  %125 = vmatpush1.xpose.msra.mxu0 0.0
  %126 = vmatprep.subr.mxu0 0.0
  %127 = vmatpush1.xpose.msra.mxu0 0.0
  %128 = vmatprep.subr.mxu0 0.0
  %129 = vmatpush1.xpose.msra.mxu0 0.0
  %130 = vmatprep.subr.mxu0 0.0
  %131 = vmatpush1.xpose.msra.mxu0 0.0
  %132 = vmatprep.subr.mxu0 0.0
  %133 = vmatpush1.xpose.msra.mxu0 0.0
  %134 = vmatprep.subr.mxu0 0.0
  %135 = vmatpush1.xpose.msra.mxu0 0.0
  %136 = vmatprep.subr.mxu0 0.0
  %137 = vmatpush1.xpose.msra.mxu0 0.0
  %138 = vmatprep.subr.mxu0 0.0
  %139 = vmatpush1.xpose.msra.mxu0 0.0
  %140 = vmatprep.subr.mxu0 0.0
  %141 = vmatpush1.xpose.msra.mxu0 0.0
  %142 = vmatprep.subr.mxu0 0.0
  %143 = vmatpush1.xpose.msra.mxu0 0.0
  %144 = vmatprep.subr.mxu0 0.0
  %145 = vmatpush1.xpose.msra.mxu0 0.0
  %146 = vmatprep.subr.mxu0 0.0
  %147 = vmatpush1.xpose.msra.mxu0 0.0
  %148 = vmatprep.subr.mxu0 0.0
  %149 = vmatpush1.xpose.msra.mxu0 0.0
  %150 = vmatprep.subr.mxu0 0.0
  %151 = vmatpush1.xpose.msra.mxu0 0.0
  %152 = vmatprep.subr.mxu0 0.0
  %153 = vmatpush1.xpose.msra.mxu0 0.0
  %154 = vmatprep.subr.mxu0 0.0
  %155 = vmatpush1.xpose.msra.mxu0 0.0
  %156 = vmatprep.subr.mxu0 0.0
  %157 = vmatpush1.xpose.msra.mxu0 0.0
  %158 = vmatprep.subr.mxu0 0.0
  %159 = vmatpush1.xpose.msra.mxu0 0.0
  %160 = vmatprep.subr.mxu0 0.0
  %161 = vmatpush1.xpose.msra.mxu0 0.0
  %162 = vmatprep.mubr.f32.mxu0 0.0
  %163 = vmatmul.mubr.f32.gmra.mrb[0].mxu0 %v78
  %v164 = vpop.f32.mrb[0].mxu0
  %v165 = vadd.f32 %v74, %v164
  %v166 = vpop.f32.mrb[0].mxu0
  %167 = vmatprep.mubr.f32.mxu0 0.0
  %168 = vmatmul.mubr.f32.gmra.mrb[0].mxu0 %v81
  %v169 = vpop.f32.mrb[0].mxu0
  %v170 = vadd.f32 %v74, %v169
  %v171 = vpop.f32.mrb[0].mxu0
  %172 = vmatprep.mubr.f32.mxu0 0.0
  %173 = vmatmul.mubr.f32.gmra.mrb[0].mxu0 %v84
  %v174 = vpop.f32.mrb[0].mxu0
  %v175 = vadd.f32 %v74, %v174
  %v176 = vpop.f32.mrb[0].mxu0
  %177 = vmatprep.mubr.f32.mxu0 0.0
  %178 = vmatmul.mubr.f32.gmra.mrb[0].mxu0 %v87
  %v179 = vpop.f32.mrb[0].mxu0
  %v180 = vadd.f32 %v74, %v179
  %v181 = vpop.f32.mrb[0].mxu0
  %182 = vmatprep.mubr.f32.mxu0 0.0
  %183 = vmatmul.mubr.f32.gmra.mrb[0].mxu0 %v90
  %v184 = vpop.f32.mrb[0].mxu0
  %v185 = vadd.f32 %v74, %v184
  %v186 = vpop.f32.mrb[0].mxu0
  %187 = vdwg.mxu0
  %v188 = vld [vmem:[%s3] sm:$0xff]
  %v189 = vld [vmem:[%s3 + $0x8] sm:$0xff]
  %v190 = vld [vmem:[%s3 + $0x10] sm:$0xff]
  %v191 = vld [vmem:[%s3 + $0x18] sm:$0xff]
  %v192 = vld [vmem:[%s3 + $0x20] sm:$0xff]
  %v193 = vadd.f32 %v165, %v188
  %v194 = vadd.f32 %v170, %v189
  %v195 = vadd.f32 %v175, %v190
  %v196 = vadd.f32 %v180, %v191
  %v197 = vadd.f32 %v185, %v192
  %v198 = vld [vmem:[%s4] sm:$0xff]
  %v199 = vld [vmem:[%s4 + $0x8] sm:$0xff]
  %v200 = vld [vmem:[%s4 + $0x10] sm:$0xff]
  %v201 = vld [vmem:[%s4 + $0x18] sm:$0xff]
  %v202 = vld [vmem:[%s4 + $0x20] sm:$0xff]
  %v203 = vld [vmem:[%s5] sm:$0xff]
  %v204 = vld [vmem:[%s5 + $0x8] sm:$0xff]
  %v205 = vld [vmem:[%s5 + $0x10] sm:$0xff]
  %v206 = vld [vmem:[%s5 + $0x18] sm:$0xff]
  %v207 = vld [vmem:[%s5 + $0x20] sm:$0xff]
  %v208 = vld [vmem:[%s5 + $0x28] sm:$0xff]
  %v209 = vld [vmem:[%s6] sm:$0x1]
  %v211 = vlaneseq
  %v212 = vshrl.u32 %v211, 7
  %v213 = vsub.s32 0, %v212
  %v214 = vrot.slane %v209, %v213
  %vm216 = vcmask 130048
  %v218 = vsel %vm216, %v193, 0
  %v221 = vsel %vm216, %v194, 0
  %v224 = vsel %vm216, %v195, 0
  %v227 = vsel %vm216, %v196, 0
  %v230 = vsel %vm216, %v197, 0
  %v233 = vsel %vm216, %v203, 0
  %v236 = vsel %vm216, %v204, 0
  %v239 = vsel %vm216, %v205, 0
  %v242 = vsel %vm216, %v206, 0
  %v245 = vsel %vm216, %v207, 0
  %v248 = vsel %vm216, %v208, 0
  %250 = vmatprep.subr.mxu0 0.0
  %251 = vmatpush1.xpose.msra.mxu0 %v233
  %252 = vmatprep.subr.mxu0 0.0
  %253 = vmatpush1.xpose.msra.mxu0 %v236
  %254 = vmatprep.subr.mxu0 0.0
  %255 = vmatpush1.xpose.msra.mxu0 %v239
  %256 = vmatprep.subr.mxu0 0.0
  %257 = vmatpush1.xpose.msra.mxu0 %v242
  %258 = vmatprep.subr.mxu0 0.0
  %259 = vmatpush1.xpose.msra.mxu0 %v245
  %260 = vmatprep.subr.mxu0 0.0
  %261 = vmatpush1.xpose.msra.mxu0 %v248
  %262 = vmatprep.subr.mxu0 0.0
  %263 = vmatpush1.xpose.msra.mxu0 0.0
  %264 = vmatprep.subr.mxu0 0.0
  %265 = vmatpush1.xpose.msra.mxu0 0.0
  %266 = vmatprep.subr.mxu0 0.0
  %267 = vmatpush1.xpose.msra.mxu0 0.0
  %268 = vmatprep.subr.mxu0 0.0
  %269 = vmatpush1.xpose.msra.mxu0 0.0
  %270 = vmatprep.subr.mxu0 0.0
  %271 = vmatpush1.xpose.msra.mxu0 0.0
  %272 = vmatprep.subr.mxu0 0.0
  %273 = vmatpush1.xpose.msra.mxu0 0.0
  %274 = vmatprep.subr.mxu0 0.0
  %275 = vmatpush1.xpose.msra.mxu0 0.0
  %276 = vmatprep.subr.mxu0 0.0
  %277 = vmatpush1.xpose.msra.mxu0 0.0
  %278 = vmatprep.subr.mxu0 0.0
  %279 = vmatpush1.xpose.msra.mxu0 0.0
  %280 = vmatprep.subr.mxu0 0.0
  %281 = vmatpush1.xpose.msra.mxu0 0.0
  %282 = vmatprep.subr.mxu0 0.0
  %283 = vmatpush1.xpose.msra.mxu0 0.0
  %284 = vmatprep.subr.mxu0 0.0
  %285 = vmatpush1.xpose.msra.mxu0 0.0
  %286 = vmatprep.subr.mxu0 0.0
  %287 = vmatpush1.xpose.msra.mxu0 0.0
  %288 = vmatprep.subr.mxu0 0.0
  %289 = vmatpush1.xpose.msra.mxu0 0.0
  %290 = vmatprep.subr.mxu0 0.0
  %291 = vmatpush1.xpose.msra.mxu0 0.0
  %292 = vmatprep.subr.mxu0 0.0
  %293 = vmatpush1.xpose.msra.mxu0 0.0
  %294 = vmatprep.subr.mxu0 0.0
  %295 = vmatpush1.xpose.msra.mxu0 0.0
  %296 = vmatprep.subr.mxu0 0.0
  %297 = vmatpush1.xpose.msra.mxu0 0.0
  %298 = vmatprep.subr.mxu0 0.0
  %299 = vmatpush1.xpose.msra.mxu0 0.0
  %300 = vmatprep.subr.mxu0 0.0
  %301 = vmatpush1.xpose.msra.mxu0 0.0
  %302 = vmatprep.subr.mxu0 0.0
  %303 = vmatpush1.xpose.msra.mxu0 0.0
  %304 = vmatprep.subr.mxu0 0.0
  %305 = vmatpush1.xpose.msra.mxu0 0.0
  %306 = vmatprep.subr.mxu0 0.0
  %307 = vmatpush1.xpose.msra.mxu0 0.0
  %308 = vmatprep.subr.mxu0 0.0
  %309 = vmatpush1.xpose.msra.mxu0 0.0
  %310 = vmatprep.subr.mxu0 0.0
  %311 = vmatpush1.xpose.msra.mxu0 0.0
  %312 = vmatprep.subr.mxu0 0.0
  %313 = vmatpush1.xpose.msra.mxu0 0.0
  %314 = vmatprep.mubr.f32.mxu0 0.0
  %315 = vmatmul.mubr.f32.gmra.mrb[0].mxu0 %v218
  %v316 = vpop.f32.mrb[0].mxu0
  %v317 = vadd.f32 %v214, %v316
  %v318 = vpop.f32.mrb[0].mxu0
  %319 = vmatprep.mubr.f32.mxu0 0.0
  %320 = vmatmul.mubr.f32.gmra.mrb[0].mxu0 %v221
  %v321 = vpop.f32.mrb[0].mxu0
  %v322 = vadd.f32 %v214, %v321
  %v323 = vpop.f32.mrb[0].mxu0
  %324 = vmatprep.mubr.f32.mxu0 0.0
  %325 = vmatmul.mubr.f32.gmra.mrb[0].mxu0 %v224
  %v326 = vpop.f32.mrb[0].mxu0
  %v327 = vadd.f32 %v214, %v326
  %v328 = vpop.f32.mrb[0].mxu0
  %329 = vmatprep.mubr.f32.mxu0 0.0
  %330 = vmatmul.mubr.f32.gmra.mrb[0].mxu0 %v227
  %v331 = vpop.f32.mrb[0].mxu0
  %v332 = vadd.f32 %v214, %v331
  %v333 = vpop.f32.mrb[0].mxu0
  %334 = vmatprep.mubr.f32.mxu0 0.0
  %335 = vmatmul.mubr.f32.gmra.mrb[0].mxu0 %v230
  %v336 = vpop.f32.mrb[0].mxu0
  %v337 = vadd.f32 %v214, %v336
  %v338 = vpop.f32.mrb[0].mxu0
  %339 = vdwg.mxu0
  %v340 = vld [vmem:[%s7] sm:$0xff]
  %v341 = vld [vmem:[%s7 + $0x8] sm:$0xff]
  %v342 = vld [vmem:[%s8] sm:$0x1]
  %348 = vrot.lane.b32.xlu0 %v317, 112
  %v349 = vpop.permute.xlu0 %348
  %350 = vrot.lane.b32.xlu0 %v322, 112
  %v351 = vpop.permute.xlu0 %350
  %352 = vrot.lane.b32.xlu0 %v327, 112
  %v353 = vpop.permute.xlu0 %352
  %354 = vrot.lane.b32.xlu0 %v332, 112
  %v355 = vpop.permute.xlu0 %354
  %356 = vrot.lane.b32.xlu0 %v337, 112
  %v357 = vpop.permute.xlu0 %356
  %vm358 = vcmask 64512
  %v359 = vsel %vm358, %v317, 0
  %v361 = vsel %vm358, %v322, 0
  %v363 = vsel %vm358, %v327, 0
  %v365 = vsel %vm358, %v332, 0
  %v367 = vsel %vm358, %v337, 0
  %v369 = vsel %vm358, %v349, 0
  %v371 = vsel %vm358, %v351, 0
  %v373 = vsel %vm358, %v353, 0
  %v375 = vsel %vm358, %v355, 0
  %v377 = vsel %vm358, %v357, 0
  %379 = vmatprep.subr.mxu0 0.0
  %380 = vmatpush1.xpose.msra.mxu0 %v369
  %381 = vmatprep.subr.mxu0 0.0
  %382 = vmatpush1.xpose.msra.mxu0 %v371
  %383 = vmatprep.subr.mxu0 0.0
  %384 = vmatpush1.xpose.msra.mxu0 %v373
  %385 = vmatprep.subr.mxu0 0.0
  %386 = vmatpush1.xpose.msra.mxu0 %v375
  %387 = vmatprep.subr.mxu0 0.0
  %388 = vmatpush1.xpose.msra.mxu0 %v377
  %389 = vmatprep.subr.mxu0 0.0
  %390 = vmatpush1.xpose.msra.mxu0 0.0
  %391 = vmatprep.subr.mxu0 0.0
  %392 = vmatpush1.xpose.msra.mxu0 0.0
  %393 = vmatprep.subr.mxu0 0.0
  %394 = vmatpush1.xpose.msra.mxu0 0.0
  %395 = vmatprep.subr.mxu0 0.0
  %396 = vmatpush1.xpose.msra.mxu0 0.0
  %397 = vmatprep.subr.mxu0 0.0
  %398 = vmatpush1.xpose.msra.mxu0 0.0
  %399 = vmatprep.subr.mxu0 0.0
  %400 = vmatpush1.xpose.msra.mxu0 0.0
  %401 = vmatprep.subr.mxu0 0.0
  %402 = vmatpush1.xpose.msra.mxu0 0.0
  %403 = vmatprep.subr.mxu0 0.0
  %404 = vmatpush1.xpose.msra.mxu0 0.0
  %405 = vmatprep.subr.mxu0 0.0
  %406 = vmatpush1.xpose.msra.mxu0 0.0
  %407 = vmatprep.subr.mxu0 0.0
  %408 = vmatpush1.xpose.msra.mxu0 0.0
  %409 = vmatprep.subr.mxu0 0.0
  %410 = vmatpush1.xpose.msra.mxu0 0.0
  %411 = vmatprep.subr.mxu0 0.0
  %412 = vmatpush1.xpose.msra.mxu0 0.0
  %413 = vmatprep.subr.mxu0 0.0
  %414 = vmatpush1.xpose.msra.mxu0 0.0
  %415 = vmatprep.subr.mxu0 0.0
  %416 = vmatpush1.xpose.msra.mxu0 0.0
  %417 = vmatprep.subr.mxu0 0.0
  %418 = vmatpush1.xpose.msra.mxu0 0.0
  %419 = vmatprep.subr.mxu0 0.0
  %420 = vmatpush1.xpose.msra.mxu0 0.0
  %421 = vmatprep.subr.mxu0 0.0
  %422 = vmatpush1.xpose.msra.mxu0 0.0
  %423 = vmatprep.subr.mxu0 0.0
  %424 = vmatpush1.xpose.msra.mxu0 0.0
  %425 = vmatprep.subr.mxu0 0.0
  %426 = vmatpush1.xpose.msra.mxu0 0.0
  %427 = vmatprep.subr.mxu0 0.0
  %428 = vmatpush1.xpose.msra.mxu0 0.0
  %429 = vmatprep.subr.mxu0 0.0
  %430 = vmatpush1.xpose.msra.mxu0 0.0
  %431 = vmatprep.subr.mxu0 0.0
  %432 = vmatpush1.xpose.msra.mxu0 0.0
  %433 = vmatprep.subr.mxu0 0.0
  %434 = vmatpush1.xpose.msra.mxu0 0.0
  %435 = vmatprep.subr.mxu0 0.0
  %436 = vmatpush1.xpose.msra.mxu0 0.0
  %437 = vmatprep.subr.mxu0 0.0
  %438 = vmatpush1.xpose.msra.mxu0 0.0
  %439 = vmatprep.subr.mxu0 0.0
  %440 = vmatpush1.xpose.msra.mxu0 0.0
  %441 = vmatprep.subr.mxu0 0.0
  %442 = vmatpush1.xpose.msra.mxu0 0.0
  %443 = vmatprep.mubr.f32.mxu0 0.0
  %444 = vmatmul.mubr.f32.gmra.mrb[0].mxu0 %v359
  %v445 = vpop.f32.mrb[0].mxu0
  %v446 = vadd.f32 0.0, %v445
  %v447 = vpop.f32.mrb[0].mxu0
  %448 = vmatprep.mubr.f32.mxu0 0.0
  %449 = vmatmul.mubr.f32.gmra.mrb[0].mxu0 %v361
  %v450 = vpop.f32.mrb[0].mxu0
  %v451 = vadd.f32 0.0, %v450
  %v452 = vpop.f32.mrb[0].mxu0
  %453 = vmatprep.mubr.f32.mxu0 0.0
  %454 = vmatmul.mubr.f32.gmra.mrb[0].mxu0 %v363
  %v455 = vpop.f32.mrb[0].mxu0
  %v456 = vadd.f32 0.0, %v455
  %v457 = vpop.f32.mrb[0].mxu0
  %458 = vmatprep.mubr.f32.mxu0 0.0
  %459 = vmatmul.mubr.f32.gmra.mrb[0].mxu0 %v365
  %v460 = vpop.f32.mrb[0].mxu0
  %v461 = vadd.f32 0.0, %v460
  %v462 = vpop.f32.mrb[0].mxu0
  %463 = vmatprep.mubr.f32.mxu0 0.0
  %464 = vmatmul.mubr.f32.gmra.mrb[0].mxu0 %v367
  %v465 = vpop.f32.mrb[0].mxu0
  %v466 = vadd.f32 0.0, %v465
  %v467 = vpop.f32.mrb[0].mxu0
  %468 = vdwg.mxu0
  %v469 = vmul.f32 %v446, 0.35355338
  %v470 = vmul.f32 %v451, 0.35355338
  %v471 = vmul.f32 %v456, 0.35355338
  %v472 = vmul.f32 %v461, 0.35355338
  %v473 = vmul.f32 %v466, 0.35355338
  %v474 = vadd.f32 %v469, %v198
  %v475 = vadd.f32 %v470, %v199
  %v476 = vadd.f32 %v471, %v200
  %v477 = vadd.f32 %v472, %v201
  %v478 = vadd.f32 %v473, %v202
  %vm479 = vcmask 326656
  %v480 = vsel %vm479, %v474, -inf
  %481 = vmax.xlane.f32.xlu0 %v480
  %v482 = vpop.xlane.xlu0 %481
  %v483 = vsel %vm479, %v475, -inf
  %484 = vmax.xlane.f32.xlu0 %v483
  %v485 = vpop.xlane.xlu0 %484
  %v486 = vsel %vm479, %v476, -inf
  %487 = vmax.xlane.f32.xlu0 %v486
  %v488 = vpop.xlane.xlu0 %487
  %v489 = vsel %vm479, %v477, -inf
  %490 = vmax.xlane.f32.xlu0 %v489
  %v491 = vpop.xlane.xlu0 %490
  %v492 = vsel %vm479, %v478, -inf
  %493 = vmax.xlane.f32.xlu0 %v492
  %v494 = vpop.xlane.xlu0 %493
  %v495 = vsub.f32 %v474, %v482
  %v496 = vsub.f32 %v475, %v485
  %v497 = vsub.f32 %v476, %v488
  %v498 = vsub.f32 %v477, %v491
  %v499 = vsub.f32 %v478, %v494
  %v500 = vmul.f32 %v495, 1.442695
  %v501 = vpow.pop %v500
  %v502 = vmul.f32 %v496, 1.442695
  %v503 = vpow.pop %v502
  %v504 = vmul.f32 %v497, 1.442695
  %v505 = vpow.pop %v504
  %v506 = vmul.f32 %v498, 1.442695
  %v507 = vpow.pop %v506
  %v508 = vmul.f32 %v499, 1.442695
  %v509 = vpow.pop %v508
  %v510 = vsel %vm479, %v501, 0.0
  %511 = vadd.xlane.f32.xlu0 %v510
  %v512 = vpop.xlane.xlu0 %511
  %v513 = vsel %vm479, %v503, 0.0
  %514 = vadd.xlane.f32.xlu0 %v513
  %v515 = vpop.xlane.xlu0 %514
  %v516 = vsel %vm479, %v505, 0.0
  %517 = vadd.xlane.f32.xlu0 %v516
  %v518 = vpop.xlane.xlu0 %517
  %v519 = vsel %vm479, %v507, 0.0
  %520 = vadd.xlane.f32.xlu0 %v519
  %v521 = vpop.xlane.xlu0 %520
  %v522 = vsel %vm479, %v509, 0.0
  %523 = vadd.xlane.f32.xlu0 %v522
  %v524 = vpop.xlane.xlu0 %523
  %v525 = vrcp.pop %v512
  %v526 = vmul.f32 %v501, %v525
  %v527 = vrcp.pop %v515
  %v528 = vmul.f32 %v503, %v527
  %v529 = vrcp.pop %v518
  %v530 = vmul.f32 %v505, %v529
  %v531 = vrcp.pop %v521
  %v532 = vmul.f32 %v507, %v531
  %v533 = vrcp.pop %v524
  %v534 = vmul.f32 %v509, %v533
  %535 = vrot.lane.b32.xlu0 %v317, 96
  %v536 = vpop.permute.xlu0 %535
  %537 = vrot.lane.b32.xlu0 %v322, 96
  %v538 = vpop.permute.xlu0 %537
  %539 = vrot.lane.b32.xlu0 %v327, 96
  %v540 = vpop.permute.xlu0 %539
  %541 = vrot.lane.b32.xlu0 %v332, 96
  %v542 = vpop.permute.xlu0 %541
  %543 = vrot.lane.b32.xlu0 %v337, 96
  %v544 = vpop.permute.xlu0 %543
  %v551 = vsel %vm479, %v526, 0
  %v554 = vsel %vm479, %v528, 0
  %v557 = vsel %vm479, %v530, 0
  %v560 = vsel %vm479, %v532, 0
  %v563 = vsel %vm479, %v534, 0
  %565 = vmatprep.subr.mxu0 0.0
  %566 = vmatpush1.msra.mxu0 %v536
  %567 = vmatprep.subr.mxu0 0.0
  %568 = vmatpush1.msra.mxu0 %v538
  %569 = vmatprep.subr.mxu0 0.0
  %570 = vmatpush1.msra.mxu0 %v540
  %571 = vmatprep.subr.mxu0 0.0
  %572 = vmatpush1.msra.mxu0 %v542
  %573 = vmatprep.subr.mxu0 0.0
  %574 = vmatpush1.msra.mxu0 %v544
  %575 = vmatprep.subr.mxu0 0.0
  %576 = vmatpush1.msra.mxu0 0.0
  %577 = vmatprep.subr.mxu0 0.0
  %578 = vmatpush1.msra.mxu0 0.0
  %579 = vmatprep.subr.mxu0 0.0
  %580 = vmatpush1.msra.mxu0 0.0
  %581 = vmatprep.subr.mxu0 0.0
  %582 = vmatpush1.msra.mxu0 0.0
  %583 = vmatprep.subr.mxu0 0.0
  %584 = vmatpush1.msra.mxu0 0.0
  %585 = vmatprep.subr.mxu0 0.0
  %586 = vmatpush1.msra.mxu0 0.0
  %587 = vmatprep.subr.mxu0 0.0
  %588 = vmatpush1.msra.mxu0 0.0
  %589 = vmatprep.subr.mxu0 0.0
  %590 = vmatpush1.msra.mxu0 0.0
  %591 = vmatprep.subr.mxu0 0.0
  %592 = vmatpush1.msra.mxu0 0.0
  %593 = vmatprep.subr.mxu0 0.0
  %594 = vmatpush1.msra.mxu0 0.0
  %595 = vmatprep.subr.mxu0 0.0
  %596 = vmatpush1.msra.mxu0 0.0
  %597 = vmatprep.subr.mxu0 0.0
  %598 = vmatpush1.msra.mxu0 0.0
  %599 = vmatprep.subr.mxu0 0.0
  %600 = vmatpush1.msra.mxu0 0.0
  %601 = vmatprep.subr.mxu0 0.0
  %602 = vmatpush1.msra.mxu0 0.0
  %603 = vmatprep.subr.mxu0 0.0
  %604 = vmatpush1.msra.mxu0 0.0
  %605 = vmatprep.subr.mxu0 0.0
  %606 = vmatpush1.msra.mxu0 0.0
  %607 = vmatprep.subr.mxu0 0.0
  %608 = vmatpush1.msra.mxu0 0.0
  %609 = vmatprep.subr.mxu0 0.0
  %610 = vmatpush1.msra.mxu0 0.0
  %611 = vmatprep.subr.mxu0 0.0
  %612 = vmatpush1.msra.mxu0 0.0
  %613 = vmatprep.subr.mxu0 0.0
  %614 = vmatpush1.msra.mxu0 0.0
  %615 = vmatprep.subr.mxu0 0.0
  %616 = vmatpush1.msra.mxu0 0.0
  %617 = vmatprep.subr.mxu0 0.0
  %618 = vmatpush1.msra.mxu0 0.0
  %619 = vmatprep.subr.mxu0 0.0
  %620 = vmatpush1.msra.mxu0 0.0
  %621 = vmatprep.subr.mxu0 0.0
  %622 = vmatpush1.msra.mxu0 0.0
  %623 = vmatprep.subr.mxu0 0.0
  %624 = vmatpush1.msra.mxu0 0.0
  %625 = vmatprep.subr.mxu0 0.0
  %626 = vmatpush1.msra.mxu0 0.0
  %627 = vmatprep.subr.mxu0 0.0
  %628 = vmatpush1.msra.mxu0 0.0
  %629 = vmatprep.mubr.f32.mxu0 0.0
  %630 = vmatmul.mubr.f32.gmra.mrb[0].mxu0 %v551
  %v631 = vpop.f32.mrb[0].mxu0
  %v632 = vadd.f32 0.0, %v631
  %v633 = vpop.f32.mrb[0].mxu0
  %634 = vmatprep.mubr.f32.mxu0 0.0
  %635 = vmatmul.mubr.f32.gmra.mrb[0].mxu0 %v554
  %v636 = vpop.f32.mrb[0].mxu0
  %v637 = vadd.f32 0.0, %v636
  %v638 = vpop.f32.mrb[0].mxu0
  %639 = vmatprep.mubr.f32.mxu0 0.0
  %640 = vmatmul.mubr.f32.gmra.mrb[0].mxu0 %v557
  %v641 = vpop.f32.mrb[0].mxu0
  %v642 = vadd.f32 0.0, %v641
  %v643 = vpop.f32.mrb[0].mxu0
  %644 = vmatprep.mubr.f32.mxu0 0.0
  %645 = vmatmul.mubr.f32.gmra.mrb[0].mxu0 %v560
  %v646 = vpop.f32.mrb[0].mxu0
  %v647 = vadd.f32 0.0, %v646
  %v648 = vpop.f32.mrb[0].mxu0
  %649 = vmatprep.mubr.f32.mxu0 0.0
  %650 = vmatmul.mubr.f32.gmra.mrb[0].mxu0 %v563
  %v651 = vpop.f32.mrb[0].mxu0
  %v652 = vadd.f32 0.0, %v651
  %v653 = vpop.f32.mrb[0].mxu0
  %654 = vdwg.mxu0
  %v656 = vsel %vm358, %v632, 0
  %v659 = vsel %vm358, %v637, 0
  %v662 = vsel %vm358, %v642, 0
  %v665 = vsel %vm358, %v647, 0
  %v668 = vsel %vm358, %v652, 0
  %v671 = vsel %vm358, %v340, 0
  %v674 = vsel %vm358, %v341, 0
  %676 = vmatprep.subr.mxu0 0.0
  %677 = vmatpush1.xpose.msra.mxu0 %v671
  %678 = vmatprep.subr.mxu0 0.0
  %679 = vmatpush1.xpose.msra.mxu0 %v674
  %680 = vmatprep.subr.mxu0 0.0
  %681 = vmatpush1.xpose.msra.mxu0 0.0
  %682 = vmatprep.subr.mxu0 0.0
  %683 = vmatpush1.xpose.msra.mxu0 0.0
  %684 = vmatprep.subr.mxu0 0.0
  %685 = vmatpush1.xpose.msra.mxu0 0.0
  %686 = vmatprep.subr.mxu0 0.0
  %687 = vmatpush1.xpose.msra.mxu0 0.0
  %688 = vmatprep.subr.mxu0 0.0
  %689 = vmatpush1.xpose.msra.mxu0 0.0
  %690 = vmatprep.subr.mxu0 0.0
  %691 = vmatpush1.xpose.msra.mxu0 0.0
  %692 = vmatprep.subr.mxu0 0.0
  %693 = vmatpush1.xpose.msra.mxu0 0.0
  %694 = vmatprep.subr.mxu0 0.0
  %695 = vmatpush1.xpose.msra.mxu0 0.0
  %696 = vmatprep.subr.mxu0 0.0
  %697 = vmatpush1.xpose.msra.mxu0 0.0
  %698 = vmatprep.subr.mxu0 0.0
  %699 = vmatpush1.xpose.msra.mxu0 0.0
  %700 = vmatprep.subr.mxu0 0.0
  %701 = vmatpush1.xpose.msra.mxu0 0.0
  %702 = vmatprep.subr.mxu0 0.0
  %703 = vmatpush1.xpose.msra.mxu0 0.0
  %704 = vmatprep.subr.mxu0 0.0
  %705 = vmatpush1.xpose.msra.mxu0 0.0
  %706 = vmatprep.subr.mxu0 0.0
  %707 = vmatpush1.xpose.msra.mxu0 0.0
  %708 = vmatprep.subr.mxu0 0.0
  %709 = vmatpush1.xpose.msra.mxu0 0.0
  %710 = vmatprep.subr.mxu0 0.0
  %711 = vmatpush1.xpose.msra.mxu0 0.0
  %712 = vmatprep.subr.mxu0 0.0
  %713 = vmatpush1.xpose.msra.mxu0 0.0
  %714 = vmatprep.subr.mxu0 0.0
  %715 = vmatpush1.xpose.msra.mxu0 0.0
  %716 = vmatprep.subr.mxu0 0.0
  %717 = vmatpush1.xpose.msra.mxu0 0.0
  %718 = vmatprep.subr.mxu0 0.0
  %719 = vmatpush1.xpose.msra.mxu0 0.0
  %720 = vmatprep.subr.mxu0 0.0
  %721 = vmatpush1.xpose.msra.mxu0 0.0
  %722 = vmatprep.subr.mxu0 0.0
  %723 = vmatpush1.xpose.msra.mxu0 0.0
  %724 = vmatprep.subr.mxu0 0.0
  %725 = vmatpush1.xpose.msra.mxu0 0.0
  %726 = vmatprep.subr.mxu0 0.0
  %727 = vmatpush1.xpose.msra.mxu0 0.0
  %728 = vmatprep.subr.mxu0 0.0
  %729 = vmatpush1.xpose.msra.mxu0 0.0
  %730 = vmatprep.subr.mxu0 0.0
  %731 = vmatpush1.xpose.msra.mxu0 0.0
  %732 = vmatprep.subr.mxu0 0.0
  %733 = vmatpush1.xpose.msra.mxu0 0.0
  %734 = vmatprep.subr.mxu0 0.0
  %735 = vmatpush1.xpose.msra.mxu0 0.0
  %736 = vmatprep.subr.mxu0 0.0
  %737 = vmatpush1.xpose.msra.mxu0 0.0
  %738 = vmatprep.subr.mxu0 0.0
  %739 = vmatpush1.xpose.msra.mxu0 0.0
  %740 = vmatprep.mubr.f32.mxu0 0.0
  %741 = vmatmul.mubr.f32.gmra.mrb[0].mxu0 %v656
  %v742 = vpop.f32.mrb[0].mxu0
  %v743 = vadd.f32 0.0, %v742
  %v744 = vpop.f32.mrb[0].mxu0
  %745 = vmatprep.mubr.f32.mxu0 0.0
  %746 = vmatmul.mubr.f32.gmra.mrb[0].mxu0 %v659
  %v747 = vpop.f32.mrb[0].mxu0
  %v748 = vadd.f32 0.0, %v747
  %v749 = vpop.f32.mrb[0].mxu0
  %750 = vmatprep.mubr.f32.mxu0 0.0
  %751 = vmatmul.mubr.f32.gmra.mrb[0].mxu0 %v662
  %v752 = vpop.f32.mrb[0].mxu0
  %v753 = vadd.f32 0.0, %v752
  %v754 = vpop.f32.mrb[0].mxu0
  %755 = vmatprep.mubr.f32.mxu0 0.0
  %756 = vmatmul.mubr.f32.gmra.mrb[0].mxu0 %v665
  %v757 = vpop.f32.mrb[0].mxu0
  %v758 = vadd.f32 0.0, %v757
  %v759 = vpop.f32.mrb[0].mxu0
  %760 = vmatprep.mubr.f32.mxu0 0.0
  %761 = vmatmul.mubr.f32.gmra.mrb[0].mxu0 %v668
  %v762 = vpop.f32.mrb[0].mxu0
  %v763 = vadd.f32 0.0, %v762
  %v764 = vpop.f32.mrb[0].mxu0
  %765 = vdwg.mxu0
  %v767 = vlaneseq
  %v768 = vshrl.u32 %v767, 7
  %v769 = vsub.s32 0, %v768
  %v770 = vrot.slane %v342, %v769
  %v772 = vadd.f32 %v770, %v743
  %v773 = vadd.f32 %v770, %v748
  %v774 = vadd.f32 %v770, %v753
  %v775 = vadd.f32 %v770, %v758
  %v776 = vadd.f32 %v770, %v763
  %777 = vrot.lane.b32.xlu0 %v317, 120
  %v778 = vpop.permute.xlu0 %777
  %779 = vrot.lane.b32.xlu0 %v322, 120
  %v780 = vpop.permute.xlu0 %779
  %781 = vrot.lane.b32.xlu0 %v327, 120
  %v782 = vpop.permute.xlu0 %781
  %783 = vrot.lane.b32.xlu0 %v332, 120
  %v784 = vpop.permute.xlu0 %783
  %785 = vrot.lane.b32.xlu0 %v337, 120
  %v786 = vpop.permute.xlu0 %785
  %787 = vrot.lane.b32.xlu0 %v317, 104
  %v788 = vpop.permute.xlu0 %787
  %789 = vrot.lane.b32.xlu0 %v322, 104
  %v790 = vpop.permute.xlu0 %789
  %791 = vrot.lane.b32.xlu0 %v327, 104
  %v792 = vpop.permute.xlu0 %791
  %793 = vrot.lane.b32.xlu0 %v332, 104
  %v794 = vpop.permute.xlu0 %793
  %795 = vrot.lane.b32.xlu0 %v337, 104
  %v796 = vpop.permute.xlu0 %795
  %v797 = vsel %vm358, %v778, 0
  %v799 = vsel %vm358, %v780, 0
  %v801 = vsel %vm358, %v782, 0
  %v803 = vsel %vm358, %v784, 0
  %v805 = vsel %vm358, %v786, 0
  %v807 = vsel %vm358, %v788, 0
  %v809 = vsel %vm358, %v790, 0
  %v811 = vsel %vm358, %v792, 0
  %v813 = vsel %vm358, %v794, 0
  %v815 = vsel %vm358, %v796, 0
  %817 = vmatprep.subr.mxu0 0.0
  %818 = vmatpush1.xpose.msra.mxu0 %v807
  %819 = vmatprep.subr.mxu0 0.0
  %820 = vmatpush1.xpose.msra.mxu0 %v809
  %821 = vmatprep.subr.mxu0 0.0
  %822 = vmatpush1.xpose.msra.mxu0 %v811
  %823 = vmatprep.subr.mxu0 0.0
  %824 = vmatpush1.xpose.msra.mxu0 %v813
  %825 = vmatprep.subr.mxu0 0.0
  %826 = vmatpush1.xpose.msra.mxu0 %v815
  %827 = vmatprep.subr.mxu0 0.0
  %828 = vmatpush1.xpose.msra.mxu0 0.0
  %829 = vmatprep.subr.mxu0 0.0
  %830 = vmatpush1.xpose.msra.mxu0 0.0
  %831 = vmatprep.subr.mxu0 0.0
  %832 = vmatpush1.xpose.msra.mxu0 0.0
  %833 = vmatprep.subr.mxu0 0.0
  %834 = vmatpush1.xpose.msra.mxu0 0.0
  %835 = vmatprep.subr.mxu0 0.0
  %836 = vmatpush1.xpose.msra.mxu0 0.0
  %837 = vmatprep.subr.mxu0 0.0
  %838 = vmatpush1.xpose.msra.mxu0 0.0
  %839 = vmatprep.subr.mxu0 0.0
  %840 = vmatpush1.xpose.msra.mxu0 0.0
  %841 = vmatprep.subr.mxu0 0.0
  %842 = vmatpush1.xpose.msra.mxu0 0.0
  %843 = vmatprep.subr.mxu0 0.0
  %844 = vmatpush1.xpose.msra.mxu0 0.0
  %845 = vmatprep.subr.mxu0 0.0
  %846 = vmatpush1.xpose.msra.mxu0 0.0
  %847 = vmatprep.subr.mxu0 0.0
  %848 = vmatpush1.xpose.msra.mxu0 0.0
  %849 = vmatprep.subr.mxu0 0.0
  %850 = vmatpush1.xpose.msra.mxu0 0.0
  %851 = vmatprep.subr.mxu0 0.0
  %852 = vmatpush1.xpose.msra.mxu0 0.0
  %853 = vmatprep.subr.mxu0 0.0
  %854 = vmatpush1.xpose.msra.mxu0 0.0
  %855 = vmatprep.subr.mxu0 0.0
  %856 = vmatpush1.xpose.msra.mxu0 0.0
  %857 = vmatprep.subr.mxu0 0.0
  %858 = vmatpush1.xpose.msra.mxu0 0.0
  %859 = vmatprep.subr.mxu0 0.0
  %860 = vmatpush1.xpose.msra.mxu0 0.0
  %861 = vmatprep.subr.mxu0 0.0
  %862 = vmatpush1.xpose.msra.mxu0 0.0
  %863 = vmatprep.subr.mxu0 0.0
  %864 = vmatpush1.xpose.msra.mxu0 0.0
  %865 = vmatprep.subr.mxu0 0.0
  %866 = vmatpush1.xpose.msra.mxu0 0.0
  %867 = vmatprep.subr.mxu0 0.0
  %868 = vmatpush1.xpose.msra.mxu0 0.0
  %869 = vmatprep.subr.mxu0 0.0
  %870 = vmatpush1.xpose.msra.mxu0 0.0
  %871 = vmatprep.subr.mxu0 0.0
  %872 = vmatpush1.xpose.msra.mxu0 0.0
  %873 = vmatprep.subr.mxu0 0.0
  %874 = vmatpush1.xpose.msra.mxu0 0.0
  %875 = vmatprep.subr.mxu0 0.0
  %876 = vmatpush1.xpose.msra.mxu0 0.0
  %877 = vmatprep.subr.mxu0 0.0
  %878 = vmatpush1.xpose.msra.mxu0 0.0
  %879 = vmatprep.subr.mxu0 0.0
  %880 = vmatpush1.xpose.msra.mxu0 0.0
  %881 = vmatprep.mubr.f32.mxu0 0.0
  %882 = vmatmul.mubr.f32.gmra.mrb[0].mxu0 %v797
  %v883 = vpop.f32.mrb[0].mxu0
  %v884 = vadd.f32 0.0, %v883
  %v885 = vpop.f32.mrb[0].mxu0
  %886 = vmatprep.mubr.f32.mxu0 0.0
  %887 = vmatmul.mubr.f32.gmra.mrb[0].mxu0 %v799
  %v888 = vpop.f32.mrb[0].mxu0
  %v889 = vadd.f32 0.0, %v888
  %v890 = vpop.f32.mrb[0].mxu0
  %891 = vmatprep.mubr.f32.mxu0 0.0
  %892 = vmatmul.mubr.f32.gmra.mrb[0].mxu0 %v801
  %v893 = vpop.f32.mrb[0].mxu0
  %v894 = vadd.f32 0.0, %v893
  %v895 = vpop.f32.mrb[0].mxu0
  %896 = vmatprep.mubr.f32.mxu0 0.0
  %897 = vmatmul.mubr.f32.gmra.mrb[0].mxu0 %v803
  %v898 = vpop.f32.mrb[0].mxu0
  %v899 = vadd.f32 0.0, %v898
  %v900 = vpop.f32.mrb[0].mxu0
  %901 = vmatprep.mubr.f32.mxu0 0.0
  %902 = vmatmul.mubr.f32.gmra.mrb[0].mxu0 %v805
  %v903 = vpop.f32.mrb[0].mxu0
  %v904 = vadd.f32 0.0, %v903
  %v905 = vpop.f32.mrb[0].mxu0
  %906 = vdwg.mxu0
  %v907 = vmul.f32 %v884, 0.35355338
  %v908 = vmul.f32 %v889, 0.35355338
  %v909 = vmul.f32 %v894, 0.35355338
  %v910 = vmul.f32 %v899, 0.35355338
  %v911 = vmul.f32 %v904, 0.35355338
  %v912 = vadd.f32 %v907, %v198
  %v913 = vadd.f32 %v908, %v199
  %v914 = vadd.f32 %v909, %v200
  %v915 = vadd.f32 %v910, %v201
  %v916 = vadd.f32 %v911, %v202
  %v917 = vsel %vm479, %v912, -inf
  %918 = vmax.xlane.f32.xlu0 %v917
  %v919 = vpop.xlane.xlu0 %918
  %v920 = vsel %vm479, %v913, -inf
  %921 = vmax.xlane.f32.xlu0 %v920
  %v922 = vpop.xlane.xlu0 %921
  %v923 = vsel %vm479, %v914, -inf
  %924 = vmax.xlane.f32.xlu0 %v923
  %v925 = vpop.xlane.xlu0 %924
  %v926 = vsel %vm479, %v915, -inf
  %927 = vmax.xlane.f32.xlu0 %v926
  %v928 = vpop.xlane.xlu0 %927
  %v929 = vsel %vm479, %v916, -inf
  %930 = vmax.xlane.f32.xlu0 %v929
  %v931 = vpop.xlane.xlu0 %930
  %v932 = vsub.f32 %v912, %v919
  %v933 = vsub.f32 %v913, %v922
  %v934 = vsub.f32 %v914, %v925
  %v935 = vsub.f32 %v915, %v928
  %v936 = vsub.f32 %v916, %v931
  %v937 = vmul.f32 %v932, 1.442695
  %v938 = vpow.pop %v937
  %v939 = vmul.f32 %v933, 1.442695
  %v940 = vpow.pop %v939
  %v941 = vmul.f32 %v934, 1.442695
  %v942 = vpow.pop %v941
  %v943 = vmul.f32 %v935, 1.442695
  %v944 = vpow.pop %v943
  %v945 = vmul.f32 %v936, 1.442695
  %v946 = vpow.pop %v945
  %v947 = vsel %vm479, %v938, 0.0
  %948 = vadd.xlane.f32.xlu0 %v947
  %v949 = vpop.xlane.xlu0 %948
  %v950 = vsel %vm479, %v940, 0.0
  %951 = vadd.xlane.f32.xlu0 %v950
  %v952 = vpop.xlane.xlu0 %951
  %v953 = vsel %vm479, %v942, 0.0
  %954 = vadd.xlane.f32.xlu0 %v953
  %v955 = vpop.xlane.xlu0 %954
  %v956 = vsel %vm479, %v944, 0.0
  %957 = vadd.xlane.f32.xlu0 %v956
  %v958 = vpop.xlane.xlu0 %957
  %v959 = vsel %vm479, %v946, 0.0
  %960 = vadd.xlane.f32.xlu0 %v959
  %v961 = vpop.xlane.xlu0 %960
  %v962 = vrcp.pop %v949
  %v963 = vmul.f32 %v938, %v962
  %v964 = vrcp.pop %v952
  %v965 = vmul.f32 %v940, %v964
  %v966 = vrcp.pop %v955
  %v967 = vmul.f32 %v942, %v966
  %v968 = vrcp.pop %v958
  %v969 = vmul.f32 %v944, %v968
  %v970 = vrcp.pop %v961
  %v971 = vmul.f32 %v946, %v970
  %972 = vrot.lane.b32.xlu0 %v317, 88
  %v973 = vpop.permute.xlu0 %972
  %974 = vrot.lane.b32.xlu0 %v322, 88
  %v975 = vpop.permute.xlu0 %974
  %976 = vrot.lane.b32.xlu0 %v327, 88
  %v977 = vpop.permute.xlu0 %976
  %978 = vrot.lane.b32.xlu0 %v332, 88
  %v979 = vpop.permute.xlu0 %978
  %980 = vrot.lane.b32.xlu0 %v337, 88
  %v981 = vpop.permute.xlu0 %980
  %v988 = vsel %vm479, %v963, 0
  %v991 = vsel %vm479, %v965, 0
  %v994 = vsel %vm479, %v967, 0
  %v997 = vsel %vm479, %v969, 0
  %v1000 = vsel %vm479, %v971, 0
  %1002 = vmatprep.subr.mxu0 0.0
  %1003 = vmatpush1.msra.mxu0 %v973
  %1004 = vmatprep.subr.mxu0 0.0
  %1005 = vmatpush1.msra.mxu0 %v975
  %1006 = vmatprep.subr.mxu0 0.0
  %1007 = vmatpush1.msra.mxu0 %v977
  %1008 = vmatprep.subr.mxu0 0.0
  %1009 = vmatpush1.msra.mxu0 %v979
  %1010 = vmatprep.subr.mxu0 0.0
  %1011 = vmatpush1.msra.mxu0 %v981
  %1012 = vmatprep.subr.mxu0 0.0
  %1013 = vmatpush1.msra.mxu0 0.0
  %1014 = vmatprep.subr.mxu0 0.0
  %1015 = vmatpush1.msra.mxu0 0.0
  %1016 = vmatprep.subr.mxu0 0.0
  %1017 = vmatpush1.msra.mxu0 0.0
  %1018 = vmatprep.subr.mxu0 0.0
  %1019 = vmatpush1.msra.mxu0 0.0
  %1020 = vmatprep.subr.mxu0 0.0
  %1021 = vmatpush1.msra.mxu0 0.0
  %1022 = vmatprep.subr.mxu0 0.0
  %1023 = vmatpush1.msra.mxu0 0.0
  %1024 = vmatprep.subr.mxu0 0.0
  %1025 = vmatpush1.msra.mxu0 0.0
  %1026 = vmatprep.subr.mxu0 0.0
  %1027 = vmatpush1.msra.mxu0 0.0
  %1028 = vmatprep.subr.mxu0 0.0
  %1029 = vmatpush1.msra.mxu0 0.0
  %1030 = vmatprep.subr.mxu0 0.0
  %1031 = vmatpush1.msra.mxu0 0.0
  %1032 = vmatprep.subr.mxu0 0.0
  %1033 = vmatpush1.msra.mxu0 0.0
  %1034 = vmatprep.subr.mxu0 0.0
  %1035 = vmatpush1.msra.mxu0 0.0
  %1036 = vmatprep.subr.mxu0 0.0
  %1037 = vmatpush1.msra.mxu0 0.0
  %1038 = vmatprep.subr.mxu0 0.0
  %1039 = vmatpush1.msra.mxu0 0.0
  %1040 = vmatprep.subr.mxu0 0.0
  %1041 = vmatpush1.msra.mxu0 0.0
  %1042 = vmatprep.subr.mxu0 0.0
  %1043 = vmatpush1.msra.mxu0 0.0
  %1044 = vmatprep.subr.mxu0 0.0
  %1045 = vmatpush1.msra.mxu0 0.0
  %1046 = vmatprep.subr.mxu0 0.0
  %1047 = vmatpush1.msra.mxu0 0.0
  %1048 = vmatprep.subr.mxu0 0.0
  %1049 = vmatpush1.msra.mxu0 0.0
  %1050 = vmatprep.subr.mxu0 0.0
  %1051 = vmatpush1.msra.mxu0 0.0
  %1052 = vmatprep.subr.mxu0 0.0
  %1053 = vmatpush1.msra.mxu0 0.0
  %1054 = vmatprep.subr.mxu0 0.0
  %1055 = vmatpush1.msra.mxu0 0.0
  %1056 = vmatprep.subr.mxu0 0.0
  %1057 = vmatpush1.msra.mxu0 0.0
  %1058 = vmatprep.subr.mxu0 0.0
  %1059 = vmatpush1.msra.mxu0 0.0
  %1060 = vmatprep.subr.mxu0 0.0
  %1061 = vmatpush1.msra.mxu0 0.0
  %1062 = vmatprep.subr.mxu0 0.0
  %1063 = vmatpush1.msra.mxu0 0.0
  %1064 = vmatprep.subr.mxu0 0.0
  %1065 = vmatpush1.msra.mxu0 0.0
  %1066 = vmatprep.mubr.f32.mxu0 0.0
  %1067 = vmatmul.mubr.f32.gmra.mrb[0].mxu0 %v988
  %v1068 = vpop.f32.mrb[0].mxu0
  %v1069 = vadd.f32 0.0, %v1068
  %v1070 = vpop.f32.mrb[0].mxu0
  %1071 = vmatprep.mubr.f32.mxu0 0.0
  %1072 = vmatmul.mubr.f32.gmra.mrb[0].mxu0 %v991
  %v1073 = vpop.f32.mrb[0].mxu0
  %v1074 = vadd.f32 0.0, %v1073
  %v1075 = vpop.f32.mrb[0].mxu0
  %1076 = vmatprep.mubr.f32.mxu0 0.0
  %1077 = vmatmul.mubr.f32.gmra.mrb[0].mxu0 %v994
  %v1078 = vpop.f32.mrb[0].mxu0
  %v1079 = vadd.f32 0.0, %v1078
  %v1080 = vpop.f32.mrb[0].mxu0
  %1081 = vmatprep.mubr.f32.mxu0 0.0
  %1082 = vmatmul.mubr.f32.gmra.mrb[0].mxu0 %v997
  %v1083 = vpop.f32.mrb[0].mxu0
  %v1084 = vadd.f32 0.0, %v1083
  %v1085 = vpop.f32.mrb[0].mxu0
  %1086 = vmatprep.mubr.f32.mxu0 0.0
  %1087 = vmatmul.mubr.f32.gmra.mrb[0].mxu0 %v1000
  %v1088 = vpop.f32.mrb[0].mxu0
  %v1089 = vadd.f32 0.0, %v1088
  %v1090 = vpop.f32.mrb[0].mxu0
  %1091 = vdwg.mxu0
  %1092 = vrot.lane.b32.xlu0 %v340, 120
  %v1093 = vpop.permute.xlu0 %1092
  %1094 = vrot.lane.b32.xlu0 %v341, 120
  %v1095 = vpop.permute.xlu0 %1094
  %v1097 = vsel %vm358, %v1069, 0
  %v1100 = vsel %vm358, %v1074, 0
  %v1103 = vsel %vm358, %v1079, 0
  %v1106 = vsel %vm358, %v1084, 0
  %v1109 = vsel %vm358, %v1089, 0
  %v1111 = vsel %vm358, %v1093, 0
  %v1113 = vsel %vm358, %v1095, 0
  %1115 = vmatprep.subr.mxu0 0.0
  %1116 = vmatpush1.xpose.msra.mxu0 %v1111
  %1117 = vmatprep.subr.mxu0 0.0
  %1118 = vmatpush1.xpose.msra.mxu0 %v1113
  %1119 = vmatprep.subr.mxu0 0.0
  %1120 = vmatpush1.xpose.msra.mxu0 0.0
  %1121 = vmatprep.subr.mxu0 0.0
  %1122 = vmatpush1.xpose.msra.mxu0 0.0
  %1123 = vmatprep.subr.mxu0 0.0
  %1124 = vmatpush1.xpose.msra.mxu0 0.0
  %1125 = vmatprep.subr.mxu0 0.0
  %1126 = vmatpush1.xpose.msra.mxu0 0.0
  %1127 = vmatprep.subr.mxu0 0.0
  %1128 = vmatpush1.xpose.msra.mxu0 0.0
  %1129 = vmatprep.subr.mxu0 0.0
  %1130 = vmatpush1.xpose.msra.mxu0 0.0
  %1131 = vmatprep.subr.mxu0 0.0
  %1132 = vmatpush1.xpose.msra.mxu0 0.0
  %1133 = vmatprep.subr.mxu0 0.0
  %1134 = vmatpush1.xpose.msra.mxu0 0.0
  %1135 = vmatprep.subr.mxu0 0.0
  %1136 = vmatpush1.xpose.msra.mxu0 0.0
  %1137 = vmatprep.subr.mxu0 0.0
  %1138 = vmatpush1.xpose.msra.mxu0 0.0
  %1139 = vmatprep.subr.mxu0 0.0
  %1140 = vmatpush1.xpose.msra.mxu0 0.0
  %1141 = vmatprep.subr.mxu0 0.0
  %1142 = vmatpush1.xpose.msra.mxu0 0.0
  %1143 = vmatprep.subr.mxu0 0.0
  %1144 = vmatpush1.xpose.msra.mxu0 0.0
  %1145 = vmatprep.subr.mxu0 0.0
  %1146 = vmatpush1.xpose.msra.mxu0 0.0
  %1147 = vmatprep.subr.mxu0 0.0
  %1148 = vmatpush1.xpose.msra.mxu0 0.0
  %1149 = vmatprep.subr.mxu0 0.0
  %1150 = vmatpush1.xpose.msra.mxu0 0.0
  %1151 = vmatprep.subr.mxu0 0.0
  %1152 = vmatpush1.xpose.msra.mxu0 0.0
  %1153 = vmatprep.subr.mxu0 0.0
  %1154 = vmatpush1.xpose.msra.mxu0 0.0
  %1155 = vmatprep.subr.mxu0 0.0
  %1156 = vmatpush1.xpose.msra.mxu0 0.0
  %1157 = vmatprep.subr.mxu0 0.0
  %1158 = vmatpush1.xpose.msra.mxu0 0.0
  %1159 = vmatprep.subr.mxu0 0.0
  %1160 = vmatpush1.xpose.msra.mxu0 0.0
  %1161 = vmatprep.subr.mxu0 0.0
  %1162 = vmatpush1.xpose.msra.mxu0 0.0
  %1163 = vmatprep.subr.mxu0 0.0
  %1164 = vmatpush1.xpose.msra.mxu0 0.0
  %1165 = vmatprep.subr.mxu0 0.0
  %1166 = vmatpush1.xpose.msra.mxu0 0.0
  %1167 = vmatprep.subr.mxu0 0.0
  %1168 = vmatpush1.xpose.msra.mxu0 0.0
  %1169 = vmatprep.subr.mxu0 0.0
  %1170 = vmatpush1.xpose.msra.mxu0 0.0
  %1171 = vmatprep.subr.mxu0 0.0
  %1172 = vmatpush1.xpose.msra.mxu0 0.0
  %1173 = vmatprep.subr.mxu0 0.0
  %1174 = vmatpush1.xpose.msra.mxu0 0.0
  %1175 = vmatprep.subr.mxu0 0.0
  %1176 = vmatpush1.xpose.msra.mxu0 0.0
  %1177 = vmatprep.subr.mxu0 0.0
  %1178 = vmatpush1.xpose.msra.mxu0 0.0
  %1179 = vmatprep.mubr.f32.mxu0 0.0
  %1180 = vmatmul.mubr.f32.gmra.mrb[0].mxu0 %v1097
  %v1181 = vpop.f32.mrb[0].mxu0
  %v1182 = vadd.f32 0.0, %v1181
  %v1183 = vpop.f32.mrb[0].mxu0
  %1184 = vmatprep.mubr.f32.mxu0 0.0
  %1185 = vmatmul.mubr.f32.gmra.mrb[0].mxu0 %v1100
  %v1186 = vpop.f32.mrb[0].mxu0
  %v1187 = vadd.f32 0.0, %v1186
  %v1188 = vpop.f32.mrb[0].mxu0
  %1189 = vmatprep.mubr.f32.mxu0 0.0
  %1190 = vmatmul.mubr.f32.gmra.mrb[0].mxu0 %v1103
  %v1191 = vpop.f32.mrb[0].mxu0
  %v1192 = vadd.f32 0.0, %v1191
  %v1193 = vpop.f32.mrb[0].mxu0
  %1194 = vmatprep.mubr.f32.mxu0 0.0
  %1195 = vmatmul.mubr.f32.gmra.mrb[0].mxu0 %v1106
  %v1196 = vpop.f32.mrb[0].mxu0
  %v1197 = vadd.f32 0.0, %v1196
  %v1198 = vpop.f32.mrb[0].mxu0
  %1199 = vmatprep.mubr.f32.mxu0 0.0
  %1200 = vmatmul.mubr.f32.gmra.mrb[0].mxu0 %v1109
  %v1201 = vpop.f32.mrb[0].mxu0
  %v1202 = vadd.f32 0.0, %v1201
  %v1203 = vpop.f32.mrb[0].mxu0
  %1204 = vdwg.mxu0
  %v1205 = vadd.f32 %v772, %v1182
  %v1206 = vadd.f32 %v773, %v1187
  %v1207 = vadd.f32 %v774, %v1192
  %v1208 = vadd.f32 %v775, %v1197
  %v1209 = vadd.f32 %v776, %v1202
  %v1210 = vld [vmem:[%s9] sm:$0x1]
  %v1211 = vld [vmem:[%s10] sm:$0x1]
  %v1212 = vadd.f32 %v193, %v1205
  %v1213 = vadd.f32 %v194, %v1206
  %v1214 = vadd.f32 %v195, %v1207
  %v1215 = vadd.f32 %v196, %v1208
  %v1216 = vadd.f32 %v197, %v1209
  %v1217 = vsel %vm216, %v1212, 0.0
  %v1218 = vsel %vm216, %v1213, 0.0
  %v1219 = vadd.f32 %v1217, %v1218
  %v1220 = vsel %vm216, %v1214, 0.0
  %v1221 = vadd.f32 %v1219, %v1220
  %v1222 = vsel %vm216, %v1215, 0.0
  %v1223 = vadd.f32 %v1221, %v1222
  %v1224 = vsel %vm216, %v1216, 0.0
  %v1225 = vadd.f32 %v1223, %v1224
  %v1226 = vrot.slane %v1225, 4
  %v1227 = vadd.f32 %v1225, %v1226
  %v1228 = vrot.slane %v1227, 2
  %v1229 = vadd.f32 %v1227, %v1228
  %v1230 = vrot.slane %v1229, 1
  %v1231 = vadd.f32 %v1229, %v1230
  %v1232 = vrcp.pop 40.0
  %v1233 = vmul.f32 %v1231, %v1232
  %v1234 = vsub.f32 %v1212, %v1233
  %v1235 = vsub.f32 %v1213, %v1233
  %v1236 = vsub.f32 %v1214, %v1233
  %v1237 = vsub.f32 %v1215, %v1233
  %v1238 = vsub.f32 %v1216, %v1233
  %v1239 = vmul.f32 %v1234, %v1234
  %v1240 = vmul.f32 %v1235, %v1235
  %v1241 = vmul.f32 %v1236, %v1236
  %v1242 = vmul.f32 %v1237, %v1237
  %v1243 = vmul.f32 %v1238, %v1238
  %v1244 = vsel %vm216, %v1239, 0.0
  %v1245 = vsel %vm216, %v1240, 0.0
  %v1246 = vadd.f32 %v1244, %v1245
  %v1247 = vsel %vm216, %v1241, 0.0
  %v1248 = vadd.f32 %v1246, %v1247
  %v1249 = vsel %vm216, %v1242, 0.0
  %v1250 = vadd.f32 %v1248, %v1249
  %v1251 = vsel %vm216, %v1243, 0.0
  %v1252 = vadd.f32 %v1250, %v1251
  %v1253 = vrot.slane %v1252, 4
  %v1254 = vadd.f32 %v1252, %v1253
  %v1255 = vrot.slane %v1254, 2
  %v1256 = vadd.f32 %v1254, %v1255
  %v1257 = vrot.slane %v1256, 1
  %v1258 = vadd.f32 %v1256, %v1257
  %v1259 = vmul.f32 %v1258, %v1232
  %v1260 = vadd.f32 %v1259, 1e-05
  %v1261 = vrsqrt.pop %v1260
  %v1262 = vmul.f32 %v1234, %v1261
  %v1263 = vmul.f32 %v1235, %v1261
  %v1264 = vmul.f32 %v1236, %v1261
  %v1265 = vmul.f32 %v1237, %v1261
  %v1266 = vmul.f32 %v1238, %v1261
  %v1268 = vlaneseq
  %v1269 = vshrl.u32 %v1268, 7
  %v1270 = vsub.s32 0, %v1269
  %v1271 = vrot.slane %v1210, %v1270
  %v1273 = vmul.f32 %v1262, %v1271
  %v1274 = vmul.f32 %v1263, %v1271
  %v1275 = vmul.f32 %v1264, %v1271
  %v1276 = vmul.f32 %v1265, %v1271
  %v1277 = vmul.f32 %v1266, %v1271
  %v1279 = vlaneseq
  %v1280 = vshrl.u32 %v1279, 7
  %v1281 = vsub.s32 0, %v1280
  %v1282 = vrot.slane %v1211, %v1281
  %v1284 = vadd.f32 %v1273, %v1282
  %v1285 = vadd.f32 %v1274, %v1282
  %v1286 = vadd.f32 %v1275, %v1282
  %v1287 = vadd.f32 %v1276, %v1282
  %v1288 = vadd.f32 %v1277, %v1282
  %v1289 = vld [vmem:[%s11] sm:$0xff]
  %v1290 = vld [vmem:[%s11 + $0x8] sm:$0xff]
  %v1291 = vld [vmem:[%s11 + $0x10] sm:$0xff]
  %v1292 = vld [vmem:[%s11 + $0x18] sm:$0xff]
  %v1293 = vld [vmem:[%s12] sm:$0x1]
  %v1295 = vlaneseq
  %v1296 = vshrl.u32 %v1295, 7
  %v1297 = vsub.s32 0, %v1296
  %v1298 = vrot.slane %v1293, %v1297
  %v1301 = vsel %vm216, %v1284, 0
  %v1304 = vsel %vm216, %v1285, 0
  %v1307 = vsel %vm216, %v1286, 0
  %v1310 = vsel %vm216, %v1287, 0
  %v1313 = vsel %vm216, %v1288, 0
  %v1316 = vsel %vm216, %v1289, 0
  %v1319 = vsel %vm216, %v1290, 0
  %v1322 = vsel %vm216, %v1291, 0
  %v1325 = vsel %vm216, %v1292, 0
  %1327 = vmatprep.subr.mxu0 0.0
  %1328 = vmatpush1.xpose.msra.mxu0 %v1316
  %1329 = vmatprep.subr.mxu0 0.0
  %1330 = vmatpush1.xpose.msra.mxu0 %v1319
  %1331 = vmatprep.subr.mxu0 0.0
  %1332 = vmatpush1.xpose.msra.mxu0 %v1322
  %1333 = vmatprep.subr.mxu0 0.0
  %1334 = vmatpush1.xpose.msra.mxu0 %v1325
  %1335 = vmatprep.subr.mxu0 0.0
  %1336 = vmatpush1.xpose.msra.mxu0 0.0
  %1337 = vmatprep.subr.mxu0 0.0
  %1338 = vmatpush1.xpose.msra.mxu0 0.0
  %1339 = vmatprep.subr.mxu0 0.0
  %1340 = vmatpush1.xpose.msra.mxu0 0.0
  %1341 = vmatprep.subr.mxu0 0.0
  %1342 = vmatpush1.xpose.msra.mxu0 0.0
  %1343 = vmatprep.subr.mxu0 0.0
  %1344 = vmatpush1.xpose.msra.mxu0 0.0
  %1345 = vmatprep.subr.mxu0 0.0
  %1346 = vmatpush1.xpose.msra.mxu0 0.0
  %1347 = vmatprep.subr.mxu0 0.0
  %1348 = vmatpush1.xpose.msra.mxu0 0.0
  %1349 = vmatprep.subr.mxu0 0.0
  %1350 = vmatpush1.xpose.msra.mxu0 0.0
  %1351 = vmatprep.subr.mxu0 0.0
  %1352 = vmatpush1.xpose.msra.mxu0 0.0
  %1353 = vmatprep.subr.mxu0 0.0
  %1354 = vmatpush1.xpose.msra.mxu0 0.0
  %1355 = vmatprep.subr.mxu0 0.0
  %1356 = vmatpush1.xpose.msra.mxu0 0.0
  %1357 = vmatprep.subr.mxu0 0.0
  %1358 = vmatpush1.xpose.msra.mxu0 0.0
  %1359 = vmatprep.subr.mxu0 0.0
  %1360 = vmatpush1.xpose.msra.mxu0 0.0
  %1361 = vmatprep.subr.mxu0 0.0
  %1362 = vmatpush1.xpose.msra.mxu0 0.0
  %1363 = vmatprep.subr.mxu0 0.0
  %1364 = vmatpush1.xpose.msra.mxu0 0.0
  %1365 = vmatprep.subr.mxu0 0.0
  %1366 = vmatpush1.xpose.msra.mxu0 0.0
  %1367 = vmatprep.subr.mxu0 0.0
  %1368 = vmatpush1.xpose.msra.mxu0 0.0
  %1369 = vmatprep.subr.mxu0 0.0
  %1370 = vmatpush1.xpose.msra.mxu0 0.0
  %1371 = vmatprep.subr.mxu0 0.0
  %1372 = vmatpush1.xpose.msra.mxu0 0.0
  %1373 = vmatprep.subr.mxu0 0.0
  %1374 = vmatpush1.xpose.msra.mxu0 0.0
  %1375 = vmatprep.subr.mxu0 0.0
  %1376 = vmatpush1.xpose.msra.mxu0 0.0
  %1377 = vmatprep.subr.mxu0 0.0
  %1378 = vmatpush1.xpose.msra.mxu0 0.0
  %1379 = vmatprep.subr.mxu0 0.0
  %1380 = vmatpush1.xpose.msra.mxu0 0.0
  %1381 = vmatprep.subr.mxu0 0.0
  %1382 = vmatpush1.xpose.msra.mxu0 0.0
  %1383 = vmatprep.subr.mxu0 0.0
  %1384 = vmatpush1.xpose.msra.mxu0 0.0
  %1385 = vmatprep.subr.mxu0 0.0
  %1386 = vmatpush1.xpose.msra.mxu0 0.0
  %1387 = vmatprep.subr.mxu0 0.0
  %1388 = vmatpush1.xpose.msra.mxu0 0.0
  %1389 = vmatprep.subr.mxu0 0.0
  %1390 = vmatpush1.xpose.msra.mxu0 0.0
  %1391 = vmatprep.mubr.f32.mxu0 0.0
  %1392 = vmatmul.mubr.f32.gmra.mrb[0].mxu0 %v1301
  %v1393 = vpop.f32.mrb[0].mxu0
  %v1394 = vadd.f32 %v1298, %v1393
  %v1395 = vpop.f32.mrb[0].mxu0
  %1396 = vmatprep.mubr.f32.mxu0 0.0
  %1397 = vmatmul.mubr.f32.gmra.mrb[0].mxu0 %v1304
  %v1398 = vpop.f32.mrb[0].mxu0
  %v1399 = vadd.f32 %v1298, %v1398
  %v1400 = vpop.f32.mrb[0].mxu0
  %1401 = vmatprep.mubr.f32.mxu0 0.0
  %1402 = vmatmul.mubr.f32.gmra.mrb[0].mxu0 %v1307
  %v1403 = vpop.f32.mrb[0].mxu0
  %v1404 = vadd.f32 %v1298, %v1403
  %v1405 = vpop.f32.mrb[0].mxu0
  %1406 = vmatprep.mubr.f32.mxu0 0.0
  %1407 = vmatmul.mubr.f32.gmra.mrb[0].mxu0 %v1310
  %v1408 = vpop.f32.mrb[0].mxu0
  %v1409 = vadd.f32 %v1298, %v1408
  %v1410 = vpop.f32.mrb[0].mxu0
  %1411 = vmatprep.mubr.f32.mxu0 0.0
  %1412 = vmatmul.mubr.f32.gmra.mrb[0].mxu0 %v1313
  %v1413 = vpop.f32.mrb[0].mxu0
  %v1414 = vadd.f32 %v1298, %v1413
  %v1415 = vpop.f32.mrb[0].mxu0
  %1416 = vdwg.mxu0
  %v1417 = vmul.f32 %v1394, 0.5
  %v1418 = vmul.f32 %v1399, 0.5
  %v1419 = vmul.f32 %v1404, 0.5
  %v1420 = vmul.f32 %v1409, 0.5
  %v1421 = vmul.f32 %v1414, 0.5
  %v1422 = vmul.f32 %v1394, 0.70710677
  %v1423 = vmul.f32 %v1399, 0.70710677
  %v1424 = vmul.f32 %v1404, 0.70710677
  %v1425 = vmul.f32 %v1409, 0.70710677
  %v1426 = vmul.f32 %v1414, 0.70710677
  %v1427 = vmax.f32 %v1422, -4.0
  %v1428 = vmax.f32 %v1423, -4.0
  %v1429 = vmax.f32 %v1424, -4.0
  %v1430 = vmax.f32 %v1425, -4.0
  %v1431 = vmax.f32 %v1426, -4.0
  %v1432 = vmin.f32 %v1427, 4.0
  %v1433 = vmin.f32 %v1428, 4.0
  %v1434 = vmin.f32 %v1429, 4.0
  %v1435 = vmin.f32 %v1430, 4.0
  %v1436 = vmin.f32 %v1431, 4.0
  %v1437 = vmul.f32 %v1432, %v1432
  %v1438 = vmul.f32 %v1433, %v1433
  %v1439 = vmul.f32 %v1434, %v1434
  %v1440 = vmul.f32 %v1435, %v1435
  %v1441 = vmul.f32 %v1436, %v1436
  %v1442 = vmul.f32 %v1437, -2.7261424e-10
  %v1443 = vmul.f32 %v1438, -2.7261424e-10
  %v1444 = vmul.f32 %v1439, -2.7261424e-10
  %v1445 = vmul.f32 %v1440, -2.7261424e-10
  %v1446 = vmul.f32 %v1441, -2.7261424e-10
  %v1447 = vadd.f32 %v1442, 2.7706815e-08
  %v1448 = vadd.f32 %v1443, 2.7706815e-08
  %v1449 = vadd.f32 %v1444, 2.7706815e-08
  %v1450 = vadd.f32 %v1445, 2.7706815e-08
  %v1451 = vadd.f32 %v1446, 2.7706815e-08
  %v1452 = vmul.f32 %v1447, %v1437
  %v1453 = vmul.f32 %v1448, %v1438
  %v1454 = vmul.f32 %v1449, %v1439
  %v1455 = vmul.f32 %v1450, %v1440
  %v1456 = vmul.f32 %v1451, %v1441
  %v1457 = vadd.f32 %v1452, -2.101024e-06
  %v1458 = vadd.f32 %v1453, -2.101024e-06
  %v1459 = vadd.f32 %v1454, -2.101024e-06
  %v1460 = vadd.f32 %v1455, -2.101024e-06
  %v1461 = vadd.f32 %v1456, -2.101024e-06
  %v1462 = vmul.f32 %v1457, %v1437
  %v1463 = vmul.f32 %v1458, %v1438
  %v1464 = vmul.f32 %v1459, %v1439
  %v1465 = vmul.f32 %v1460, %v1440
  %v1466 = vmul.f32 %v1461, %v1441
  %v1467 = vadd.f32 %v1462, -5.6925062e-05
  %v1468 = vadd.f32 %v1463, -5.6925062e-05
  %v1469 = vadd.f32 %v1464, -5.6925062e-05
  %v1470 = vadd.f32 %v1465, -5.6925062e-05
  %v1471 = vadd.f32 %v1466, -5.6925062e-05
  %v1472 = vmul.f32 %v1467, %v1437
  %v1473 = vmul.f32 %v1468, %v1438
  %v1474 = vmul.f32 %v1469, %v1439
  %v1475 = vmul.f32 %v1470, %v1440
  %v1476 = vmul.f32 %v1471, %v1441
  %v1477 = vadd.f32 %v1472, -0.00073499064
  %v1478 = vadd.f32 %v1473, -0.00073499064
  %v1479 = vadd.f32 %v1474, -0.00073499064
  %v1480 = vadd.f32 %v1475, -0.00073499064
  %v1481 = vadd.f32 %v1476, -0.00073499064
  %v1482 = vmul.f32 %v1477, %v1437
  %v1483 = vmul.f32 %v1478, %v1438
  %v1484 = vmul.f32 %v1479, %v1439
  %v1485 = vmul.f32 %v1480, %v1440
  %v1486 = vmul.f32 %v1481, %v1441
  %v1487 = vadd.f32 %v1482, -0.0029546
  %v1488 = vadd.f32 %v1483, -0.0029546
  %v1489 = vadd.f32 %v1484, -0.0029546
  %v1490 = vadd.f32 %v1485, -0.0029546
  %v1491 = vadd.f32 %v1486, -0.0029546
  %v1492 = vmul.f32 %v1487, %v1437
  %v1493 = vmul.f32 %v1488, %v1438
  %v1494 = vmul.f32 %v1489, %v1439
  %v1495 = vmul.f32 %v1490, %v1440
  %v1496 = vmul.f32 %v1491, %v1441
  %v1497 = vadd.f32 %v1492, -0.016096033
  %v1498 = vadd.f32 %v1493, -0.016096033
  %v1499 = vadd.f32 %v1494, -0.016096033
  %v1500 = vadd.f32 %v1495, -0.016096033
  %v1501 = vadd.f32 %v1496, -0.016096033
  %v1502 = vmul.f32 %v1437, -1.45660715e-05
  %v1503 = vmul.f32 %v1438, -1.45660715e-05
  %v1504 = vmul.f32 %v1439, -1.45660715e-05
  %v1505 = vmul.f32 %v1440, -1.45660715e-05
  %v1506 = vmul.f32 %v1441, -1.45660715e-05
  %v1507 = vadd.f32 %v1502, -0.00021337405
  %v1508 = vadd.f32 %v1503, -0.00021337405
  %v1509 = vadd.f32 %v1504, -0.00021337405
  %v1510 = vadd.f32 %v1505, -0.00021337405
  %v1511 = vadd.f32 %v1506, -0.00021337405
  %v1512 = vmul.f32 %v1507, %v1437
  %v1513 = vmul.f32 %v1508, %v1438
  %v1514 = vmul.f32 %v1509, %v1439
  %v1515 = vmul.f32 %v1510, %v1440
  %v1516 = vmul.f32 %v1511, %v1441
  %v1517 = vadd.f32 %v1512, -0.001682827
  %v1518 = vadd.f32 %v1513, -0.001682827
  %v1519 = vadd.f32 %v1514, -0.001682827
  %v1520 = vadd.f32 %v1515, -0.001682827
  %v1521 = vadd.f32 %v1516, -0.001682827
  %v1522 = vmul.f32 %v1517, %v1437
  %v1523 = vmul.f32 %v1518, %v1438
  %v1524 = vmul.f32 %v1519, %v1439
  %v1525 = vmul.f32 %v1520, %v1440
  %v1526 = vmul.f32 %v1521, %v1441
  %v1527 = vadd.f32 %v1522, -0.0073733293
  %v1528 = vadd.f32 %v1523, -0.0073733293
  %v1529 = vadd.f32 %v1524, -0.0073733293
  %v1530 = vadd.f32 %v1525, -0.0073733293
  %v1531 = vadd.f32 %v1526, -0.0073733293
  %v1532 = vmul.f32 %v1527, %v1437
  %v1533 = vmul.f32 %v1528, %v1438
  %v1534 = vmul.f32 %v1529, %v1439
  %v1535 = vmul.f32 %v1530, %v1440
  %v1536 = vmul.f32 %v1531, %v1441
  %v1537 = vadd.f32 %v1532, -0.014264739
  %v1538 = vadd.f32 %v1533, -0.014264739
  %v1539 = vadd.f32 %v1534, -0.014264739
  %v1540 = vadd.f32 %v1535, -0.014264739
  %v1541 = vadd.f32 %v1536, -0.014264739
  %v1542 = vmul.f32 %v1432, %v1497
  %v1543 = vmul.f32 %v1433, %v1498
  %v1544 = vmul.f32 %v1434, %v1499
  %v1545 = vmul.f32 %v1435, %v1500
  %v1546 = vmul.f32 %v1436, %v1501
  %v1547 = vrcp.pop %v1537
  %v1548 = vmul.f32 %v1542, %v1547
  %v1549 = vrcp.pop %v1538
  %v1550 = vmul.f32 %v1543, %v1549
  %v1551 = vrcp.pop %v1539
  %v1552 = vmul.f32 %v1544, %v1551
  %v1553 = vrcp.pop %v1540
  %v1554 = vmul.f32 %v1545, %v1553
  %v1555 = vrcp.pop %v1541
  %v1556 = vmul.f32 %v1546, %v1555
  %v1557 = vadd.f32 %v1548, 1.0
  %v1558 = vadd.f32 %v1550, 1.0
  %v1559 = vadd.f32 %v1552, 1.0
  %v1560 = vadd.f32 %v1554, 1.0
  %v1561 = vadd.f32 %v1556, 1.0
  %v1562 = vmul.f32 %v1417, %v1557
  %v1563 = vmul.f32 %v1418, %v1558
  %v1564 = vmul.f32 %v1419, %v1559
  %v1565 = vmul.f32 %v1420, %v1560
  %v1566 = vmul.f32 %v1421, %v1561
  %v1567 = vld [vmem:[%s13] sm:$0xff]
  %v1568 = vld [vmem:[%s13 + $0x8] sm:$0xff]
  %v1569 = vld [vmem:[%s14] sm:$0x1]
  %v1571 = vlaneseq
  %v1572 = vshrl.u32 %v1571, 7
  %v1573 = vsub.s32 0, %v1572
  %v1574 = vrot.slane %v1569, %v1573
  %vm1576 = vcmask 261120
  %v1578 = vsel %vm1576, %v1562, 0
  %v1581 = vsel %vm1576, %v1563, 0
  %v1584 = vsel %vm1576, %v1564, 0
  %v1587 = vsel %vm1576, %v1565, 0
  %v1590 = vsel %vm1576, %v1566, 0
  %v1593 = vsel %vm1576, %v1567, 0
  %v1596 = vsel %vm1576, %v1568, 0
  %1598 = vmatprep.subr.mxu0 0.0
  %1599 = vmatpush1.xpose.msra.mxu0 %v1593
  %1600 = vmatprep.subr.mxu0 0.0
  %1601 = vmatpush1.xpose.msra.mxu0 %v1596
  %1602 = vmatprep.subr.mxu0 0.0
  %1603 = vmatpush1.xpose.msra.mxu0 0.0
  %1604 = vmatprep.subr.mxu0 0.0
  %1605 = vmatpush1.xpose.msra.mxu0 0.0
  %1606 = vmatprep.subr.mxu0 0.0
  %1607 = vmatpush1.xpose.msra.mxu0 0.0
  %1608 = vmatprep.subr.mxu0 0.0
  %1609 = vmatpush1.xpose.msra.mxu0 0.0
  %1610 = vmatprep.subr.mxu0 0.0
  %1611 = vmatpush1.xpose.msra.mxu0 0.0
  %1612 = vmatprep.subr.mxu0 0.0
  %1613 = vmatpush1.xpose.msra.mxu0 0.0
  %1614 = vmatprep.subr.mxu0 0.0
  %1615 = vmatpush1.xpose.msra.mxu0 0.0
  %1616 = vmatprep.subr.mxu0 0.0
  %1617 = vmatpush1.xpose.msra.mxu0 0.0
  %1618 = vmatprep.subr.mxu0 0.0
  %1619 = vmatpush1.xpose.msra.mxu0 0.0
  %1620 = vmatprep.subr.mxu0 0.0
  %1621 = vmatpush1.xpose.msra.mxu0 0.0
  %1622 = vmatprep.subr.mxu0 0.0
  %1623 = vmatpush1.xpose.msra.mxu0 0.0
  %1624 = vmatprep.subr.mxu0 0.0
  %1625 = vmatpush1.xpose.msra.mxu0 0.0
  %1626 = vmatprep.subr.mxu0 0.0
  %1627 = vmatpush1.xpose.msra.mxu0 0.0
  %1628 = vmatprep.subr.mxu0 0.0
  %1629 = vmatpush1.xpose.msra.mxu0 0.0
  %1630 = vmatprep.subr.mxu0 0.0
  %1631 = vmatpush1.xpose.msra.mxu0 0.0
  %1632 = vmatprep.subr.mxu0 0.0
  %1633 = vmatpush1.xpose.msra.mxu0 0.0
  %1634 = vmatprep.subr.mxu0 0.0
  %1635 = vmatpush1.xpose.msra.mxu0 0.0
  %1636 = vmatprep.subr.mxu0 0.0
  %1637 = vmatpush1.xpose.msra.mxu0 0.0
  %1638 = vmatprep.subr.mxu0 0.0
  %1639 = vmatpush1.xpose.msra.mxu0 0.0
  %1640 = vmatprep.subr.mxu0 0.0
  %1641 = vmatpush1.xpose.msra.mxu0 0.0
  %1642 = vmatprep.subr.mxu0 0.0
  %1643 = vmatpush1.xpose.msra.mxu0 0.0
  %1644 = vmatprep.subr.mxu0 0.0
  %1645 = vmatpush1.xpose.msra.mxu0 0.0
  %1646 = vmatprep.subr.mxu0 0.0
  %1647 = vmatpush1.xpose.msra.mxu0 0.0
  %1648 = vmatprep.subr.mxu0 0.0
  %1649 = vmatpush1.xpose.msra.mxu0 0.0
  %1650 = vmatprep.subr.mxu0 0.0
  %1651 = vmatpush1.xpose.msra.mxu0 0.0
  %1652 = vmatprep.subr.mxu0 0.0
  %1653 = vmatpush1.xpose.msra.mxu0 0.0
  %1654 = vmatprep.subr.mxu0 0.0
  %1655 = vmatpush1.xpose.msra.mxu0 0.0
  %1656 = vmatprep.subr.mxu0 0.0
  %1657 = vmatpush1.xpose.msra.mxu0 0.0
  %1658 = vmatprep.subr.mxu0 0.0
  %1659 = vmatpush1.xpose.msra.mxu0 0.0
  %1660 = vmatprep.subr.mxu0 0.0
  %1661 = vmatpush1.xpose.msra.mxu0 0.0
  %1662 = vmatprep.mubr.f32.mxu0 0.0
  %1663 = vmatmul.mubr.f32.gmra.mrb[0].mxu0 %v1578
  %v1664 = vpop.f32.mrb[0].mxu0
  %v1665 = vadd.f32 %v1574, %v1664
  %v1666 = vpop.f32.mrb[0].mxu0
  %1667 = vmatprep.mubr.f32.mxu0 0.0
  %1668 = vmatmul.mubr.f32.gmra.mrb[0].mxu0 %v1581
  %v1669 = vpop.f32.mrb[0].mxu0
  %v1670 = vadd.f32 %v1574, %v1669
  %v1671 = vpop.f32.mrb[0].mxu0
  %1672 = vmatprep.mubr.f32.mxu0 0.0
  %1673 = vmatmul.mubr.f32.gmra.mrb[0].mxu0 %v1584
  %v1674 = vpop.f32.mrb[0].mxu0
  %v1675 = vadd.f32 %v1574, %v1674
  %v1676 = vpop.f32.mrb[0].mxu0
  %1677 = vmatprep.mubr.f32.mxu0 0.0
  %1678 = vmatmul.mubr.f32.gmra.mrb[0].mxu0 %v1587
  %v1679 = vpop.f32.mrb[0].mxu0
  %v1680 = vadd.f32 %v1574, %v1679
  %v1681 = vpop.f32.mrb[0].mxu0
  %1682 = vmatprep.mubr.f32.mxu0 0.0
  %1683 = vmatmul.mubr.f32.gmra.mrb[0].mxu0 %v1590
  %v1684 = vpop.f32.mrb[0].mxu0
  %v1685 = vadd.f32 %v1574, %v1684
  %v1686 = vpop.f32.mrb[0].mxu0
  %1687 = vdwg.mxu0
  %v1688 = vld [vmem:[%s15] sm:$0x1]
  %v1689 = vld [vmem:[%s16] sm:$0x1]
  %v1690 = vadd.f32 %v1284, %v1665
  %v1691 = vadd.f32 %v1285, %v1670
  %v1692 = vadd.f32 %v1286, %v1675
  %v1693 = vadd.f32 %v1287, %v1680
  %v1694 = vadd.f32 %v1288, %v1685
  %v1695 = vsel %vm216, %v1690, 0.0
  %v1696 = vsel %vm216, %v1691, 0.0
  %v1697 = vadd.f32 %v1695, %v1696
  %v1698 = vsel %vm216, %v1692, 0.0
  %v1699 = vadd.f32 %v1697, %v1698
  %v1700 = vsel %vm216, %v1693, 0.0
  %v1701 = vadd.f32 %v1699, %v1700
  %v1702 = vsel %vm216, %v1694, 0.0
  %v1703 = vadd.f32 %v1701, %v1702
  %v1704 = vrot.slane %v1703, 4
  %v1705 = vadd.f32 %v1703, %v1704
  %v1706 = vrot.slane %v1705, 2
  %v1707 = vadd.f32 %v1705, %v1706
  %v1708 = vrot.slane %v1707, 1
  %v1709 = vadd.f32 %v1707, %v1708
  %v1710 = vmul.f32 %v1709, %v1232
  %v1711 = vsub.f32 %v1690, %v1710
  %v1712 = vsub.f32 %v1691, %v1710
  %v1713 = vsub.f32 %v1692, %v1710
  %v1714 = vsub.f32 %v1693, %v1710
  %v1715 = vsub.f32 %v1694, %v1710
  %v1716 = vmul.f32 %v1711, %v1711
  %v1717 = vmul.f32 %v1712, %v1712
  %v1718 = vmul.f32 %v1713, %v1713
  %v1719 = vmul.f32 %v1714, %v1714
  %v1720 = vmul.f32 %v1715, %v1715
  %v1721 = vsel %vm216, %v1716, 0.0
  %v1722 = vsel %vm216, %v1717, 0.0
  %v1723 = vadd.f32 %v1721, %v1722
  %v1724 = vsel %vm216, %v1718, 0.0
  %v1725 = vadd.f32 %v1723, %v1724
  %v1726 = vsel %vm216, %v1719, 0.0
  %v1727 = vadd.f32 %v1725, %v1726
  %v1728 = vsel %vm216, %v1720, 0.0
  %v1729 = vadd.f32 %v1727, %v1728
  %v1730 = vrot.slane %v1729, 4
  %v1731 = vadd.f32 %v1729, %v1730
  %v1732 = vrot.slane %v1731, 2
  %v1733 = vadd.f32 %v1731, %v1732
  %v1734 = vrot.slane %v1733, 1
  %v1735 = vadd.f32 %v1733, %v1734
  %v1736 = vmul.f32 %v1735, %v1232
  %v1737 = vadd.f32 %v1736, 1e-05
  %v1738 = vrsqrt.pop %v1737
  %v1739 = vmul.f32 %v1711, %v1738
  %v1740 = vmul.f32 %v1712, %v1738
  %v1741 = vmul.f32 %v1713, %v1738
  %v1742 = vmul.f32 %v1714, %v1738
  %v1743 = vmul.f32 %v1715, %v1738
  %v1745 = vlaneseq
  %v1746 = vshrl.u32 %v1745, 7
  %v1747 = vsub.s32 0, %v1746
  %v1748 = vrot.slane %v1688, %v1747
  %v1750 = vmul.f32 %v1739, %v1748
  %v1751 = vmul.f32 %v1740, %v1748
  %v1752 = vmul.f32 %v1741, %v1748
  %v1753 = vmul.f32 %v1742, %v1748
  %v1754 = vmul.f32 %v1743, %v1748
  %v1756 = vlaneseq
  %v1757 = vshrl.u32 %v1756, 7
  %v1758 = vsub.s32 0, %v1757
  %v1759 = vrot.slane %v1689, %v1758
  %v1761 = vadd.f32 %v1750, %v1759
  %v1762 = vadd.f32 %v1751, %v1759
  %v1763 = vadd.f32 %v1752, %v1759
  %v1764 = vadd.f32 %v1753, %v1759
  %v1765 = vadd.f32 %v1754, %v1759
  %s1766 = scalar_lea.vmem %s5, 48
  %v1767 = vld [vmem:[%s1766] sm:$0xff]
  %v1768 = vld [vmem:[%s1766 + $0x8] sm:$0xff]
  %v1769 = vld [vmem:[%s1766 + $0x10] sm:$0xff]
  %v1770 = vld [vmem:[%s1766 + $0x18] sm:$0xff]
  %v1771 = vld [vmem:[%s1766 + $0x20] sm:$0xff]
  %v1772 = vld [vmem:[%s1766 + $0x28] sm:$0xff]
  %s1773 = scalar_lea.vmem %s6, 1
  %v1774 = vld [vmem:[%s1773] sm:$0x1]
  %v1776 = vlaneseq
  %v1777 = vshrl.u32 %v1776, 7
  %v1778 = vsub.s32 0, %v1777
  %v1779 = vrot.slane %v1774, %v1778
  %v1782 = vsel %vm216, %v1761, 0
  %v1785 = vsel %vm216, %v1762, 0
  %v1788 = vsel %vm216, %v1763, 0
  %v1791 = vsel %vm216, %v1764, 0
  %v1794 = vsel %vm216, %v1765, 0
  %v1797 = vsel %vm216, %v1767, 0
  %v1800 = vsel %vm216, %v1768, 0
  %v1803 = vsel %vm216, %v1769, 0
  %v1806 = vsel %vm216, %v1770, 0
  %v1809 = vsel %vm216, %v1771, 0
  %v1812 = vsel %vm216, %v1772, 0
  %1814 = vmatprep.subr.mxu0 0.0
  %1815 = vmatpush1.xpose.msra.mxu0 %v1797
  %1816 = vmatprep.subr.mxu0 0.0
  %1817 = vmatpush1.xpose.msra.mxu0 %v1800
  %1818 = vmatprep.subr.mxu0 0.0
  %1819 = vmatpush1.xpose.msra.mxu0 %v1803
  %1820 = vmatprep.subr.mxu0 0.0
  %1821 = vmatpush1.xpose.msra.mxu0 %v1806
  %1822 = vmatprep.subr.mxu0 0.0
  %1823 = vmatpush1.xpose.msra.mxu0 %v1809
  %1824 = vmatprep.subr.mxu0 0.0
  %1825 = vmatpush1.xpose.msra.mxu0 %v1812
  %1826 = vmatprep.subr.mxu0 0.0
  %1827 = vmatpush1.xpose.msra.mxu0 0.0
  %1828 = vmatprep.subr.mxu0 0.0
  %1829 = vmatpush1.xpose.msra.mxu0 0.0
  %1830 = vmatprep.subr.mxu0 0.0
  %1831 = vmatpush1.xpose.msra.mxu0 0.0
  %1832 = vmatprep.subr.mxu0 0.0
  %1833 = vmatpush1.xpose.msra.mxu0 0.0
  %1834 = vmatprep.subr.mxu0 0.0
  %1835 = vmatpush1.xpose.msra.mxu0 0.0
  %1836 = vmatprep.subr.mxu0 0.0
  %1837 = vmatpush1.xpose.msra.mxu0 0.0
  %1838 = vmatprep.subr.mxu0 0.0
  %1839 = vmatpush1.xpose.msra.mxu0 0.0
  %1840 = vmatprep.subr.mxu0 0.0
  %1841 = vmatpush1.xpose.msra.mxu0 0.0
  %1842 = vmatprep.subr.mxu0 0.0
  %1843 = vmatpush1.xpose.msra.mxu0 0.0
  %1844 = vmatprep.subr.mxu0 0.0
  %1845 = vmatpush1.xpose.msra.mxu0 0.0
  %1846 = vmatprep.subr.mxu0 0.0
  %1847 = vmatpush1.xpose.msra.mxu0 0.0
  %1848 = vmatprep.subr.mxu0 0.0
  %1849 = vmatpush1.xpose.msra.mxu0 0.0
  %1850 = vmatprep.subr.mxu0 0.0
  %1851 = vmatpush1.xpose.msra.mxu0 0.0
  %1852 = vmatprep.subr.mxu0 0.0
  %1853 = vmatpush1.xpose.msra.mxu0 0.0
  %1854 = vmatprep.subr.mxu0 0.0
  %1855 = vmatpush1.xpose.msra.mxu0 0.0
  %1856 = vmatprep.subr.mxu0 0.0
  %1857 = vmatpush1.xpose.msra.mxu0 0.0
  %1858 = vmatprep.subr.mxu0 0.0
  %1859 = vmatpush1.xpose.msra.mxu0 0.0
  %1860 = vmatprep.subr.mxu0 0.0
  %1861 = vmatpush1.xpose.msra.mxu0 0.0
  %1862 = vmatprep.subr.mxu0 0.0
  %1863 = vmatpush1.xpose.msra.mxu0 0.0
  %1864 = vmatprep.subr.mxu0 0.0
  %1865 = vmatpush1.xpose.msra.mxu0 0.0
  %1866 = vmatprep.subr.mxu0 0.0
  %1867 = vmatpush1.xpose.msra.mxu0 0.0
  %1868 = vmatprep.subr.mxu0 0.0
  %1869 = vmatpush1.xpose.msra.mxu0 0.0
  %1870 = vmatprep.subr.mxu0 0.0
  %1871 = vmatpush1.xpose.msra.mxu0 0.0
  %1872 = vmatprep.subr.mxu0 0.0
  %1873 = vmatpush1.xpose.msra.mxu0 0.0
  %1874 = vmatprep.subr.mxu0 0.0
  %1875 = vmatpush1.xpose.msra.mxu0 0.0
  %1876 = vmatprep.subr.mxu0 0.0
  %1877 = vmatpush1.xpose.msra.mxu0 0.0
  %1878 = vmatprep.mubr.f32.mxu0 0.0
  %1879 = vmatmul.mubr.f32.gmra.mrb[0].mxu0 %v1782
  %v1880 = vpop.f32.mrb[0].mxu0
  %v1881 = vadd.f32 %v1779, %v1880
  %v1882 = vpop.f32.mrb[0].mxu0
  %1883 = vmatprep.mubr.f32.mxu0 0.0
  %1884 = vmatmul.mubr.f32.gmra.mrb[0].mxu0 %v1785
  %v1885 = vpop.f32.mrb[0].mxu0
  %v1886 = vadd.f32 %v1779, %v1885
  %v1887 = vpop.f32.mrb[0].mxu0
  %1888 = vmatprep.mubr.f32.mxu0 0.0
  %1889 = vmatmul.mubr.f32.gmra.mrb[0].mxu0 %v1788
  %v1890 = vpop.f32.mrb[0].mxu0
  %v1891 = vadd.f32 %v1779, %v1890
  %v1892 = vpop.f32.mrb[0].mxu0
  %1893 = vmatprep.mubr.f32.mxu0 0.0
  %1894 = vmatmul.mubr.f32.gmra.mrb[0].mxu0 %v1791
  %v1895 = vpop.f32.mrb[0].mxu0
  %v1896 = vadd.f32 %v1779, %v1895
  %v1897 = vpop.f32.mrb[0].mxu0
  %1898 = vmatprep.mubr.f32.mxu0 0.0
  %1899 = vmatmul.mubr.f32.gmra.mrb[0].mxu0 %v1794
  %v1900 = vpop.f32.mrb[0].mxu0
  %v1901 = vadd.f32 %v1779, %v1900
  %v1902 = vpop.f32.mrb[0].mxu0
  %1903 = vdwg.mxu0
  %s1904 = scalar_lea.vmem %s7, 16
  %v1905 = vld [vmem:[%s1904] sm:$0xff]
  %v1906 = vld [vmem:[%s1904 + $0x8] sm:$0xff]
  %s1907 = scalar_lea.vmem %s8, 1
  %v1908 = vld [vmem:[%s1907] sm:$0x1]
  %1914 = vrot.lane.b32.xlu0 %v1881, 112
  %v1915 = vpop.permute.xlu0 %1914
  %1916 = vrot.lane.b32.xlu0 %v1886, 112
  %v1917 = vpop.permute.xlu0 %1916
  %1918 = vrot.lane.b32.xlu0 %v1891, 112
  %v1919 = vpop.permute.xlu0 %1918
  %1920 = vrot.lane.b32.xlu0 %v1896, 112
  %v1921 = vpop.permute.xlu0 %1920
  %1922 = vrot.lane.b32.xlu0 %v1901, 112
  %v1923 = vpop.permute.xlu0 %1922
  %v1924 = vsel %vm358, %v1881, 0
  %v1926 = vsel %vm358, %v1886, 0
  %v1928 = vsel %vm358, %v1891, 0
  %v1930 = vsel %vm358, %v1896, 0
  %v1932 = vsel %vm358, %v1901, 0
  %v1934 = vsel %vm358, %v1915, 0
  %v1936 = vsel %vm358, %v1917, 0
  %v1938 = vsel %vm358, %v1919, 0
  %v1940 = vsel %vm358, %v1921, 0
  %v1942 = vsel %vm358, %v1923, 0
  %1944 = vmatprep.subr.mxu0 0.0
  %1945 = vmatpush1.xpose.msra.mxu0 %v1934
  %1946 = vmatprep.subr.mxu0 0.0
  %1947 = vmatpush1.xpose.msra.mxu0 %v1936
  %1948 = vmatprep.subr.mxu0 0.0
  %1949 = vmatpush1.xpose.msra.mxu0 %v1938
  %1950 = vmatprep.subr.mxu0 0.0
  %1951 = vmatpush1.xpose.msra.mxu0 %v1940
  %1952 = vmatprep.subr.mxu0 0.0
  %1953 = vmatpush1.xpose.msra.mxu0 %v1942
  %1954 = vmatprep.subr.mxu0 0.0
  %1955 = vmatpush1.xpose.msra.mxu0 0.0
  %1956 = vmatprep.subr.mxu0 0.0
  %1957 = vmatpush1.xpose.msra.mxu0 0.0
  %1958 = vmatprep.subr.mxu0 0.0
  %1959 = vmatpush1.xpose.msra.mxu0 0.0
  %1960 = vmatprep.subr.mxu0 0.0
  %1961 = vmatpush1.xpose.msra.mxu0 0.0
  %1962 = vmatprep.subr.mxu0 0.0
  %1963 = vmatpush1.xpose.msra.mxu0 0.0
  %1964 = vmatprep.subr.mxu0 0.0
  %1965 = vmatpush1.xpose.msra.mxu0 0.0
  %1966 = vmatprep.subr.mxu0 0.0
  %1967 = vmatpush1.xpose.msra.mxu0 0.0
  %1968 = vmatprep.subr.mxu0 0.0
  %1969 = vmatpush1.xpose.msra.mxu0 0.0
  %1970 = vmatprep.subr.mxu0 0.0
  %1971 = vmatpush1.xpose.msra.mxu0 0.0
  %1972 = vmatprep.subr.mxu0 0.0
  %1973 = vmatpush1.xpose.msra.mxu0 0.0
  %1974 = vmatprep.subr.mxu0 0.0
  %1975 = vmatpush1.xpose.msra.mxu0 0.0
  %1976 = vmatprep.subr.mxu0 0.0
  %1977 = vmatpush1.xpose.msra.mxu0 0.0
  %1978 = vmatprep.subr.mxu0 0.0
  %1979 = vmatpush1.xpose.msra.mxu0 0.0
  %1980 = vmatprep.subr.mxu0 0.0
  %1981 = vmatpush1.xpose.msra.mxu0 0.0
  %1982 = vmatprep.subr.mxu0 0.0
  %1983 = vmatpush1.xpose.msra.mxu0 0.0
  %1984 = vmatprep.subr.mxu0 0.0
  %1985 = vmatpush1.xpose.msra.mxu0 0.0
  %1986 = vmatprep.subr.mxu0 0.0
  %1987 = vmatpush1.xpose.msra.mxu0 0.0
  %1988 = vmatprep.subr.mxu0 0.0
  %1989 = vmatpush1.xpose.msra.mxu0 0.0
  %1990 = vmatprep.subr.mxu0 0.0
  %1991 = vmatpush1.xpose.msra.mxu0 0.0
  %1992 = vmatprep.subr.mxu0 0.0
  %1993 = vmatpush1.xpose.msra.mxu0 0.0
  %1994 = vmatprep.subr.mxu0 0.0
  %1995 = vmatpush1.xpose.msra.mxu0 0.0
  %1996 = vmatprep.subr.mxu0 0.0
  %1997 = vmatpush1.xpose.msra.mxu0 0.0
  %1998 = vmatprep.subr.mxu0 0.0
  %1999 = vmatpush1.xpose.msra.mxu0 0.0
  %2000 = vmatprep.subr.mxu0 0.0
  %2001 = vmatpush1.xpose.msra.mxu0 0.0
  %2002 = vmatprep.subr.mxu0 0.0
  %2003 = vmatpush1.xpose.msra.mxu0 0.0
  %2004 = vmatprep.subr.mxu0 0.0
  %2005 = vmatpush1.xpose.msra.mxu0 0.0
  %2006 = vmatprep.subr.mxu0 0.0
  %2007 = vmatpush1.xpose.msra.mxu0 0.0
  %2008 = vmatprep.mubr.f32.mxu0 0.0
  %2009 = vmatmul.mubr.f32.gmra.mrb[0].mxu0 %v1924
  %v2010 = vpop.f32.mrb[0].mxu0
  %v2011 = vadd.f32 0.0, %v2010
  %v2012 = vpop.f32.mrb[0].mxu0
  %2013 = vmatprep.mubr.f32.mxu0 0.0
  %2014 = vmatmul.mubr.f32.gmra.mrb[0].mxu0 %v1926
  %v2015 = vpop.f32.mrb[0].mxu0
  %v2016 = vadd.f32 0.0, %v2015
  %v2017 = vpop.f32.mrb[0].mxu0
  %2018 = vmatprep.mubr.f32.mxu0 0.0
  %2019 = vmatmul.mubr.f32.gmra.mrb[0].mxu0 %v1928
  %v2020 = vpop.f32.mrb[0].mxu0
  %v2021 = vadd.f32 0.0, %v2020
  %v2022 = vpop.f32.mrb[0].mxu0
  %2023 = vmatprep.mubr.f32.mxu0 0.0
  %2024 = vmatmul.mubr.f32.gmra.mrb[0].mxu0 %v1930
  %v2025 = vpop.f32.mrb[0].mxu0
  %v2026 = vadd.f32 0.0, %v2025
  %v2027 = vpop.f32.mrb[0].mxu0
  %2028 = vmatprep.mubr.f32.mxu0 0.0
  %2029 = vmatmul.mubr.f32.gmra.mrb[0].mxu0 %v1932
  %v2030 = vpop.f32.mrb[0].mxu0
  %v2031 = vadd.f32 0.0, %v2030
  %v2032 = vpop.f32.mrb[0].mxu0
  %2033 = vdwg.mxu0
  %v2034 = vmul.f32 %v2011, 0.35355338
  %v2035 = vmul.f32 %v2016, 0.35355338
  %v2036 = vmul.f32 %v2021, 0.35355338
  %v2037 = vmul.f32 %v2026, 0.35355338
  %v2038 = vmul.f32 %v2031, 0.35355338
  %v2039 = vadd.f32 %v2034, %v469
  %v2040 = vadd.f32 %v2035, %v470
  %v2041 = vadd.f32 %v2036, %v471
  %v2042 = vadd.f32 %v2037, %v472
  %v2043 = vadd.f32 %v2038, %v473
  %v2044 = vadd.f32 %v2039, %v198
  %v2045 = vadd.f32 %v2040, %v199
  %v2046 = vadd.f32 %v2041, %v200
  %v2047 = vadd.f32 %v2042, %v201
  %v2048 = vadd.f32 %v2043, %v202
  %v2049 = vsel %vm479, %v2044, -inf
  %2050 = vmax.xlane.f32.xlu0 %v2049
  %v2051 = vpop.xlane.xlu0 %2050
  %v2052 = vsel %vm479, %v2045, -inf
  %2053 = vmax.xlane.f32.xlu0 %v2052
  %v2054 = vpop.xlane.xlu0 %2053
  %v2055 = vsel %vm479, %v2046, -inf
  %2056 = vmax.xlane.f32.xlu0 %v2055
  %v2057 = vpop.xlane.xlu0 %2056
  %v2058 = vsel %vm479, %v2047, -inf
  %2059 = vmax.xlane.f32.xlu0 %v2058
  %v2060 = vpop.xlane.xlu0 %2059
  %v2061 = vsel %vm479, %v2048, -inf
  %2062 = vmax.xlane.f32.xlu0 %v2061
  %v2063 = vpop.xlane.xlu0 %2062
  %v2064 = vsub.f32 %v2044, %v2051
  %v2065 = vsub.f32 %v2045, %v2054
  %v2066 = vsub.f32 %v2046, %v2057
  %v2067 = vsub.f32 %v2047, %v2060
  %v2068 = vsub.f32 %v2048, %v2063
  %v2069 = vmul.f32 %v2064, 1.442695
  %v2070 = vpow.pop %v2069
  %v2071 = vmul.f32 %v2065, 1.442695
  %v2072 = vpow.pop %v2071
  %v2073 = vmul.f32 %v2066, 1.442695
  %v2074 = vpow.pop %v2073
  %v2075 = vmul.f32 %v2067, 1.442695
  %v2076 = vpow.pop %v2075
  %v2077 = vmul.f32 %v2068, 1.442695
  %v2078 = vpow.pop %v2077
  %v2079 = vsel %vm479, %v2070, 0.0
  %2080 = vadd.xlane.f32.xlu0 %v2079
  %v2081 = vpop.xlane.xlu0 %2080
  %v2082 = vsel %vm479, %v2072, 0.0
  %2083 = vadd.xlane.f32.xlu0 %v2082
  %v2084 = vpop.xlane.xlu0 %2083
  %v2085 = vsel %vm479, %v2074, 0.0
  %2086 = vadd.xlane.f32.xlu0 %v2085
  %v2087 = vpop.xlane.xlu0 %2086
  %v2088 = vsel %vm479, %v2076, 0.0
  %2089 = vadd.xlane.f32.xlu0 %v2088
  %v2090 = vpop.xlane.xlu0 %2089
  %v2091 = vsel %vm479, %v2078, 0.0
  %2092 = vadd.xlane.f32.xlu0 %v2091
  %v2093 = vpop.xlane.xlu0 %2092
  %v2094 = vrcp.pop %v2081
  %v2095 = vmul.f32 %v2070, %v2094
  %v2096 = vrcp.pop %v2084
  %v2097 = vmul.f32 %v2072, %v2096
  %v2098 = vrcp.pop %v2087
  %v2099 = vmul.f32 %v2074, %v2098
  %v2100 = vrcp.pop %v2090
  %v2101 = vmul.f32 %v2076, %v2100
  %v2102 = vrcp.pop %v2093
  %v2103 = vmul.f32 %v2078, %v2102
  %2104 = vrot.lane.b32.xlu0 %v1881, 96
  %v2105 = vpop.permute.xlu0 %2104
  %2106 = vrot.lane.b32.xlu0 %v1886, 96
  %v2107 = vpop.permute.xlu0 %2106
  %2108 = vrot.lane.b32.xlu0 %v1891, 96
  %v2109 = vpop.permute.xlu0 %2108
  %2110 = vrot.lane.b32.xlu0 %v1896, 96
  %v2111 = vpop.permute.xlu0 %2110
  %2112 = vrot.lane.b32.xlu0 %v1901, 96
  %v2113 = vpop.permute.xlu0 %2112
  %v2120 = vsel %vm479, %v2095, 0
  %v2123 = vsel %vm479, %v2097, 0
  %v2126 = vsel %vm479, %v2099, 0
  %v2129 = vsel %vm479, %v2101, 0
  %v2132 = vsel %vm479, %v2103, 0
  %2134 = vmatprep.subr.mxu0 0.0
  %2135 = vmatpush1.msra.mxu0 %v2105
  %2136 = vmatprep.subr.mxu0 0.0
  %2137 = vmatpush1.msra.mxu0 %v2107
  %2138 = vmatprep.subr.mxu0 0.0
  %2139 = vmatpush1.msra.mxu0 %v2109
  %2140 = vmatprep.subr.mxu0 0.0
  %2141 = vmatpush1.msra.mxu0 %v2111
  %2142 = vmatprep.subr.mxu0 0.0
  %2143 = vmatpush1.msra.mxu0 %v2113
  %2144 = vmatprep.subr.mxu0 0.0
  %2145 = vmatpush1.msra.mxu0 0.0
  %2146 = vmatprep.subr.mxu0 0.0
  %2147 = vmatpush1.msra.mxu0 0.0
  %2148 = vmatprep.subr.mxu0 0.0
  %2149 = vmatpush1.msra.mxu0 0.0
  %2150 = vmatprep.subr.mxu0 0.0
  %2151 = vmatpush1.msra.mxu0 0.0
  %2152 = vmatprep.subr.mxu0 0.0
  %2153 = vmatpush1.msra.mxu0 0.0
  %2154 = vmatprep.subr.mxu0 0.0
  %2155 = vmatpush1.msra.mxu0 0.0
  %2156 = vmatprep.subr.mxu0 0.0
  %2157 = vmatpush1.msra.mxu0 0.0
  %2158 = vmatprep.subr.mxu0 0.0
  %2159 = vmatpush1.msra.mxu0 0.0
  %2160 = vmatprep.subr.mxu0 0.0
  %2161 = vmatpush1.msra.mxu0 0.0
  %2162 = vmatprep.subr.mxu0 0.0
  %2163 = vmatpush1.msra.mxu0 0.0
  %2164 = vmatprep.subr.mxu0 0.0
  %2165 = vmatpush1.msra.mxu0 0.0
  %2166 = vmatprep.subr.mxu0 0.0
  %2167 = vmatpush1.msra.mxu0 0.0
  %2168 = vmatprep.subr.mxu0 0.0
  %2169 = vmatpush1.msra.mxu0 0.0
  %2170 = vmatprep.subr.mxu0 0.0
  %2171 = vmatpush1.msra.mxu0 0.0
  %2172 = vmatprep.subr.mxu0 0.0
  %2173 = vmatpush1.msra.mxu0 0.0
  %2174 = vmatprep.subr.mxu0 0.0
  %2175 = vmatpush1.msra.mxu0 0.0
  %2176 = vmatprep.subr.mxu0 0.0
  %2177 = vmatpush1.msra.mxu0 0.0
  %2178 = vmatprep.subr.mxu0 0.0
  %2179 = vmatpush1.msra.mxu0 0.0
  %2180 = vmatprep.subr.mxu0 0.0
  %2181 = vmatpush1.msra.mxu0 0.0
  %2182 = vmatprep.subr.mxu0 0.0
  %2183 = vmatpush1.msra.mxu0 0.0
  %2184 = vmatprep.subr.mxu0 0.0
  %2185 = vmatpush1.msra.mxu0 0.0
  %2186 = vmatprep.subr.mxu0 0.0
  %2187 = vmatpush1.msra.mxu0 0.0
  %2188 = vmatprep.subr.mxu0 0.0
  %2189 = vmatpush1.msra.mxu0 0.0
  %2190 = vmatprep.subr.mxu0 0.0
  %2191 = vmatpush1.msra.mxu0 0.0
  %2192 = vmatprep.subr.mxu0 0.0
  %2193 = vmatpush1.msra.mxu0 0.0
  %2194 = vmatprep.subr.mxu0 0.0
  %2195 = vmatpush1.msra.mxu0 0.0
  %2196 = vmatprep.subr.mxu0 0.0
  %2197 = vmatpush1.msra.mxu0 0.0
  %2198 = vmatprep.mubr.f32.mxu0 0.0
  %2199 = vmatmul.mubr.f32.gmra.mrb[0].mxu0 %v2120
  %v2200 = vpop.f32.mrb[0].mxu0
  %v2201 = vadd.f32 0.0, %v2200
  %v2202 = vpop.f32.mrb[0].mxu0
  %2203 = vmatprep.mubr.f32.mxu0 0.0
  %2204 = vmatmul.mubr.f32.gmra.mrb[0].mxu0 %v2123
  %v2205 = vpop.f32.mrb[0].mxu0
  %v2206 = vadd.f32 0.0, %v2205
  %v2207 = vpop.f32.mrb[0].mxu0
  %2208 = vmatprep.mubr.f32.mxu0 0.0
  %2209 = vmatmul.mubr.f32.gmra.mrb[0].mxu0 %v2126
  %v2210 = vpop.f32.mrb[0].mxu0
  %v2211 = vadd.f32 0.0, %v2210
  %v2212 = vpop.f32.mrb[0].mxu0
  %2213 = vmatprep.mubr.f32.mxu0 0.0
  %2214 = vmatmul.mubr.f32.gmra.mrb[0].mxu0 %v2129
  %v2215 = vpop.f32.mrb[0].mxu0
  %v2216 = vadd.f32 0.0, %v2215
  %v2217 = vpop.f32.mrb[0].mxu0
  %2218 = vmatprep.mubr.f32.mxu0 0.0
  %2219 = vmatmul.mubr.f32.gmra.mrb[0].mxu0 %v2132
  %v2220 = vpop.f32.mrb[0].mxu0
  %v2221 = vadd.f32 0.0, %v2220
  %v2222 = vpop.f32.mrb[0].mxu0
  %2223 = vdwg.mxu0
  %v2225 = vsel %vm358, %v2201, 0
  %v2228 = vsel %vm358, %v2206, 0
  %v2231 = vsel %vm358, %v2211, 0
  %v2234 = vsel %vm358, %v2216, 0
  %v2237 = vsel %vm358, %v2221, 0
  %v2240 = vsel %vm358, %v1905, 0
  %v2243 = vsel %vm358, %v1906, 0
  %2245 = vmatprep.subr.mxu0 0.0
  %2246 = vmatpush1.xpose.msra.mxu0 %v2240
  %2247 = vmatprep.subr.mxu0 0.0
  %2248 = vmatpush1.xpose.msra.mxu0 %v2243
  %2249 = vmatprep.subr.mxu0 0.0
  %2250 = vmatpush1.xpose.msra.mxu0 0.0
  %2251 = vmatprep.subr.mxu0 0.0
  %2252 = vmatpush1.xpose.msra.mxu0 0.0
  %2253 = vmatprep.subr.mxu0 0.0
  %2254 = vmatpush1.xpose.msra.mxu0 0.0
  %2255 = vmatprep.subr.mxu0 0.0
  %2256 = vmatpush1.xpose.msra.mxu0 0.0
  %2257 = vmatprep.subr.mxu0 0.0
  %2258 = vmatpush1.xpose.msra.mxu0 0.0
  %2259 = vmatprep.subr.mxu0 0.0
  %2260 = vmatpush1.xpose.msra.mxu0 0.0
  %2261 = vmatprep.subr.mxu0 0.0
  %2262 = vmatpush1.xpose.msra.mxu0 0.0
  %2263 = vmatprep.subr.mxu0 0.0
  %2264 = vmatpush1.xpose.msra.mxu0 0.0
  %2265 = vmatprep.subr.mxu0 0.0
  %2266 = vmatpush1.xpose.msra.mxu0 0.0
  %2267 = vmatprep.subr.mxu0 0.0
  %2268 = vmatpush1.xpose.msra.mxu0 0.0
  %2269 = vmatprep.subr.mxu0 0.0
  %2270 = vmatpush1.xpose.msra.mxu0 0.0
  %2271 = vmatprep.subr.mxu0 0.0
  %2272 = vmatpush1.xpose.msra.mxu0 0.0
  %2273 = vmatprep.subr.mxu0 0.0
  %2274 = vmatpush1.xpose.msra.mxu0 0.0
  %2275 = vmatprep.subr.mxu0 0.0
  %2276 = vmatpush1.xpose.msra.mxu0 0.0
  %2277 = vmatprep.subr.mxu0 0.0
  %2278 = vmatpush1.xpose.msra.mxu0 0.0
  %2279 = vmatprep.subr.mxu0 0.0
  %2280 = vmatpush1.xpose.msra.mxu0 0.0
  %2281 = vmatprep.subr.mxu0 0.0
  %2282 = vmatpush1.xpose.msra.mxu0 0.0
  %2283 = vmatprep.subr.mxu0 0.0
  %2284 = vmatpush1.xpose.msra.mxu0 0.0
  %2285 = vmatprep.subr.mxu0 0.0
  %2286 = vmatpush1.xpose.msra.mxu0 0.0
  %2287 = vmatprep.subr.mxu0 0.0
  %2288 = vmatpush1.xpose.msra.mxu0 0.0
  %2289 = vmatprep.subr.mxu0 0.0
  %2290 = vmatpush1.xpose.msra.mxu0 0.0
  %2291 = vmatprep.subr.mxu0 0.0
  %2292 = vmatpush1.xpose.msra.mxu0 0.0
  %2293 = vmatprep.subr.mxu0 0.0
  %2294 = vmatpush1.xpose.msra.mxu0 0.0
  %2295 = vmatprep.subr.mxu0 0.0
  %2296 = vmatpush1.xpose.msra.mxu0 0.0
  %2297 = vmatprep.subr.mxu0 0.0
  %2298 = vmatpush1.xpose.msra.mxu0 0.0
  %2299 = vmatprep.subr.mxu0 0.0
  %2300 = vmatpush1.xpose.msra.mxu0 0.0
  %2301 = vmatprep.subr.mxu0 0.0
  %2302 = vmatpush1.xpose.msra.mxu0 0.0
  %2303 = vmatprep.subr.mxu0 0.0
  %2304 = vmatpush1.xpose.msra.mxu0 0.0
  %2305 = vmatprep.subr.mxu0 0.0
  %2306 = vmatpush1.xpose.msra.mxu0 0.0
  %2307 = vmatprep.subr.mxu0 0.0
  %2308 = vmatpush1.xpose.msra.mxu0 0.0
  %2309 = vmatprep.mubr.f32.mxu0 0.0
  %2310 = vmatmul.mubr.f32.gmra.mrb[0].mxu0 %v2225
  %v2311 = vpop.f32.mrb[0].mxu0
  %v2312 = vadd.f32 0.0, %v2311
  %v2313 = vpop.f32.mrb[0].mxu0
  %2314 = vmatprep.mubr.f32.mxu0 0.0
  %2315 = vmatmul.mubr.f32.gmra.mrb[0].mxu0 %v2228
  %v2316 = vpop.f32.mrb[0].mxu0
  %v2317 = vadd.f32 0.0, %v2316
  %v2318 = vpop.f32.mrb[0].mxu0
  %2319 = vmatprep.mubr.f32.mxu0 0.0
  %2320 = vmatmul.mubr.f32.gmra.mrb[0].mxu0 %v2231
  %v2321 = vpop.f32.mrb[0].mxu0
  %v2322 = vadd.f32 0.0, %v2321
  %v2323 = vpop.f32.mrb[0].mxu0
  %2324 = vmatprep.mubr.f32.mxu0 0.0
  %2325 = vmatmul.mubr.f32.gmra.mrb[0].mxu0 %v2234
  %v2326 = vpop.f32.mrb[0].mxu0
  %v2327 = vadd.f32 0.0, %v2326
  %v2328 = vpop.f32.mrb[0].mxu0
  %2329 = vmatprep.mubr.f32.mxu0 0.0
  %2330 = vmatmul.mubr.f32.gmra.mrb[0].mxu0 %v2237
  %v2331 = vpop.f32.mrb[0].mxu0
  %v2332 = vadd.f32 0.0, %v2331
  %v2333 = vpop.f32.mrb[0].mxu0
  %2334 = vdwg.mxu0
  %v2336 = vlaneseq
  %v2337 = vshrl.u32 %v2336, 7
  %v2338 = vsub.s32 0, %v2337
  %v2339 = vrot.slane %v1908, %v2338
  %v2341 = vadd.f32 %v2339, %v2312
  %v2342 = vadd.f32 %v2339, %v2317
  %v2343 = vadd.f32 %v2339, %v2322
  %v2344 = vadd.f32 %v2339, %v2327
  %v2345 = vadd.f32 %v2339, %v2332
  %2346 = vrot.lane.b32.xlu0 %v1881, 120
  %v2347 = vpop.permute.xlu0 %2346
  %2348 = vrot.lane.b32.xlu0 %v1886, 120
  %v2349 = vpop.permute.xlu0 %2348
  %2350 = vrot.lane.b32.xlu0 %v1891, 120
  %v2351 = vpop.permute.xlu0 %2350
  %2352 = vrot.lane.b32.xlu0 %v1896, 120
  %v2353 = vpop.permute.xlu0 %2352
  %2354 = vrot.lane.b32.xlu0 %v1901, 120
  %v2355 = vpop.permute.xlu0 %2354
  %2356 = vrot.lane.b32.xlu0 %v1881, 104
  %v2357 = vpop.permute.xlu0 %2356
  %2358 = vrot.lane.b32.xlu0 %v1886, 104
  %v2359 = vpop.permute.xlu0 %2358
  %2360 = vrot.lane.b32.xlu0 %v1891, 104
  %v2361 = vpop.permute.xlu0 %2360
  %2362 = vrot.lane.b32.xlu0 %v1896, 104
  %v2363 = vpop.permute.xlu0 %2362
  %2364 = vrot.lane.b32.xlu0 %v1901, 104
  %v2365 = vpop.permute.xlu0 %2364
  %v2366 = vsel %vm358, %v2347, 0
  %v2368 = vsel %vm358, %v2349, 0
  %v2370 = vsel %vm358, %v2351, 0
  %v2372 = vsel %vm358, %v2353, 0
  %v2374 = vsel %vm358, %v2355, 0
  %v2376 = vsel %vm358, %v2357, 0
  %v2378 = vsel %vm358, %v2359, 0
  %v2380 = vsel %vm358, %v2361, 0
  %v2382 = vsel %vm358, %v2363, 0
  %v2384 = vsel %vm358, %v2365, 0
  %2386 = vmatprep.subr.mxu0 0.0
  %2387 = vmatpush1.xpose.msra.mxu0 %v2376
  %2388 = vmatprep.subr.mxu0 0.0
  %2389 = vmatpush1.xpose.msra.mxu0 %v2378
  %2390 = vmatprep.subr.mxu0 0.0
  %2391 = vmatpush1.xpose.msra.mxu0 %v2380
  %2392 = vmatprep.subr.mxu0 0.0
  %2393 = vmatpush1.xpose.msra.mxu0 %v2382
  %2394 = vmatprep.subr.mxu0 0.0
  %2395 = vmatpush1.xpose.msra.mxu0 %v2384
  %2396 = vmatprep.subr.mxu0 0.0
  %2397 = vmatpush1.xpose.msra.mxu0 0.0
  %2398 = vmatprep.subr.mxu0 0.0
  %2399 = vmatpush1.xpose.msra.mxu0 0.0
  %2400 = vmatprep.subr.mxu0 0.0
  %2401 = vmatpush1.xpose.msra.mxu0 0.0
  %2402 = vmatprep.subr.mxu0 0.0
  %2403 = vmatpush1.xpose.msra.mxu0 0.0
  %2404 = vmatprep.subr.mxu0 0.0
  %2405 = vmatpush1.xpose.msra.mxu0 0.0
  %2406 = vmatprep.subr.mxu0 0.0
  %2407 = vmatpush1.xpose.msra.mxu0 0.0
  %2408 = vmatprep.subr.mxu0 0.0
  %2409 = vmatpush1.xpose.msra.mxu0 0.0
  %2410 = vmatprep.subr.mxu0 0.0
  %2411 = vmatpush1.xpose.msra.mxu0 0.0
  %2412 = vmatprep.subr.mxu0 0.0
  %2413 = vmatpush1.xpose.msra.mxu0 0.0
  %2414 = vmatprep.subr.mxu0 0.0
  %2415 = vmatpush1.xpose.msra.mxu0 0.0
  %2416 = vmatprep.subr.mxu0 0.0
  %2417 = vmatpush1.xpose.msra.mxu0 0.0
  %2418 = vmatprep.subr.mxu0 0.0
  %2419 = vmatpush1.xpose.msra.mxu0 0.0
  %2420 = vmatprep.subr.mxu0 0.0
  %2421 = vmatpush1.xpose.msra.mxu0 0.0
  %2422 = vmatprep.subr.mxu0 0.0
  %2423 = vmatpush1.xpose.msra.mxu0 0.0
  %2424 = vmatprep.subr.mxu0 0.0
  %2425 = vmatpush1.xpose.msra.mxu0 0.0
  %2426 = vmatprep.subr.mxu0 0.0
  %2427 = vmatpush1.xpose.msra.mxu0 0.0
  %2428 = vmatprep.subr.mxu0 0.0
  %2429 = vmatpush1.xpose.msra.mxu0 0.0
  %2430 = vmatprep.subr.mxu0 0.0
  %2431 = vmatpush1.xpose.msra.mxu0 0.0
  %2432 = vmatprep.subr.mxu0 0.0
  %2433 = vmatpush1.xpose.msra.mxu0 0.0
  %2434 = vmatprep.subr.mxu0 0.0
  %2435 = vmatpush1.xpose.msra.mxu0 0.0
  %2436 = vmatprep.subr.mxu0 0.0
  %2437 = vmatpush1.xpose.msra.mxu0 0.0
  %2438 = vmatprep.subr.mxu0 0.0
  %2439 = vmatpush1.xpose.msra.mxu0 0.0
  %2440 = vmatprep.subr.mxu0 0.0
  %2441 = vmatpush1.xpose.msra.mxu0 0.0
  %2442 = vmatprep.subr.mxu0 0.0
  %2443 = vmatpush1.xpose.msra.mxu0 0.0
  %2444 = vmatprep.subr.mxu0 0.0
  %2445 = vmatpush1.xpose.msra.mxu0 0.0
  %2446 = vmatprep.subr.mxu0 0.0
  %2447 = vmatpush1.xpose.msra.mxu0 0.0
  %2448 = vmatprep.subr.mxu0 0.0
  %2449 = vmatpush1.xpose.msra.mxu0 0.0
  %2450 = vmatprep.mubr.f32.mxu0 0.0
  %2451 = vmatmul.mubr.f32.gmra.mrb[0].mxu0 %v2366
  %v2452 = vpop.f32.mrb[0].mxu0
  %v2453 = vadd.f32 0.0, %v2452
  %v2454 = vpop.f32.mrb[0].mxu0
  %2455 = vmatprep.mubr.f32.mxu0 0.0
  %2456 = vmatmul.mubr.f32.gmra.mrb[0].mxu0 %v2368
  %v2457 = vpop.f32.mrb[0].mxu0
  %v2458 = vadd.f32 0.0, %v2457
  %v2459 = vpop.f32.mrb[0].mxu0
  %2460 = vmatprep.mubr.f32.mxu0 0.0
  %2461 = vmatmul.mubr.f32.gmra.mrb[0].mxu0 %v2370
  %v2462 = vpop.f32.mrb[0].mxu0
  %v2463 = vadd.f32 0.0, %v2462
  %v2464 = vpop.f32.mrb[0].mxu0
  %2465 = vmatprep.mubr.f32.mxu0 0.0
  %2466 = vmatmul.mubr.f32.gmra.mrb[0].mxu0 %v2372
  %v2467 = vpop.f32.mrb[0].mxu0
  %v2468 = vadd.f32 0.0, %v2467
  %v2469 = vpop.f32.mrb[0].mxu0
  %2470 = vmatprep.mubr.f32.mxu0 0.0
  %2471 = vmatmul.mubr.f32.gmra.mrb[0].mxu0 %v2374
  %v2472 = vpop.f32.mrb[0].mxu0
  %v2473 = vadd.f32 0.0, %v2472
  %v2474 = vpop.f32.mrb[0].mxu0
  %2475 = vdwg.mxu0
  %v2476 = vmul.f32 %v2453, 0.35355338
  %v2477 = vmul.f32 %v2458, 0.35355338
  %v2478 = vmul.f32 %v2463, 0.35355338
  %v2479 = vmul.f32 %v2468, 0.35355338
  %v2480 = vmul.f32 %v2473, 0.35355338
  %v2481 = vadd.f32 %v2476, %v907
  %v2482 = vadd.f32 %v2477, %v908
  %v2483 = vadd.f32 %v2478, %v909
  %v2484 = vadd.f32 %v2479, %v910
  %v2485 = vadd.f32 %v2480, %v911
  %v2486 = vadd.f32 %v2481, %v198
  %v2487 = vadd.f32 %v2482, %v199
  %v2488 = vadd.f32 %v2483, %v200
  %v2489 = vadd.f32 %v2484, %v201
  %v2490 = vadd.f32 %v2485, %v202
  %v2491 = vsel %vm479, %v2486, -inf
  %2492 = vmax.xlane.f32.xlu0 %v2491
  %v2493 = vpop.xlane.xlu0 %2492
  %v2494 = vsel %vm479, %v2487, -inf
  %2495 = vmax.xlane.f32.xlu0 %v2494
  %v2496 = vpop.xlane.xlu0 %2495
  %v2497 = vsel %vm479, %v2488, -inf
  %2498 = vmax.xlane.f32.xlu0 %v2497
  %v2499 = vpop.xlane.xlu0 %2498
  %v2500 = vsel %vm479, %v2489, -inf
  %2501 = vmax.xlane.f32.xlu0 %v2500
  %v2502 = vpop.xlane.xlu0 %2501
  %v2503 = vsel %vm479, %v2490, -inf
  %2504 = vmax.xlane.f32.xlu0 %v2503
  %v2505 = vpop.xlane.xlu0 %2504
  %v2506 = vsub.f32 %v2486, %v2493
  %v2507 = vsub.f32 %v2487, %v2496
  %v2508 = vsub.f32 %v2488, %v2499
  %v2509 = vsub.f32 %v2489, %v2502
  %v2510 = vsub.f32 %v2490, %v2505
  %v2511 = vmul.f32 %v2506, 1.442695
  %v2512 = vpow.pop %v2511
  %v2513 = vmul.f32 %v2507, 1.442695
  %v2514 = vpow.pop %v2513
  %v2515 = vmul.f32 %v2508, 1.442695
  %v2516 = vpow.pop %v2515
  %v2517 = vmul.f32 %v2509, 1.442695
  %v2518 = vpow.pop %v2517
  %v2519 = vmul.f32 %v2510, 1.442695
  %v2520 = vpow.pop %v2519
  %v2521 = vsel %vm479, %v2512, 0.0
  %2522 = vadd.xlane.f32.xlu0 %v2521
  %v2523 = vpop.xlane.xlu0 %2522
  %v2524 = vsel %vm479, %v2514, 0.0
  %2525 = vadd.xlane.f32.xlu0 %v2524
  %v2526 = vpop.xlane.xlu0 %2525
  %v2527 = vsel %vm479, %v2516, 0.0
  %2528 = vadd.xlane.f32.xlu0 %v2527
  %v2529 = vpop.xlane.xlu0 %2528
  %v2530 = vsel %vm479, %v2518, 0.0
  %2531 = vadd.xlane.f32.xlu0 %v2530
  %v2532 = vpop.xlane.xlu0 %2531
  %v2533 = vsel %vm479, %v2520, 0.0
  %2534 = vadd.xlane.f32.xlu0 %v2533
  %v2535 = vpop.xlane.xlu0 %2534
  %v2536 = vrcp.pop %v2523
  %v2537 = vmul.f32 %v2512, %v2536
  %v2538 = vrcp.pop %v2526
  %v2539 = vmul.f32 %v2514, %v2538
  %v2540 = vrcp.pop %v2529
  %v2541 = vmul.f32 %v2516, %v2540
  %v2542 = vrcp.pop %v2532
  %v2543 = vmul.f32 %v2518, %v2542
  %v2544 = vrcp.pop %v2535
  %v2545 = vmul.f32 %v2520, %v2544
  %2546 = vrot.lane.b32.xlu0 %v1881, 88
  %v2547 = vpop.permute.xlu0 %2546
  %2548 = vrot.lane.b32.xlu0 %v1886, 88
  %v2549 = vpop.permute.xlu0 %2548
  %2550 = vrot.lane.b32.xlu0 %v1891, 88
  %v2551 = vpop.permute.xlu0 %2550
  %2552 = vrot.lane.b32.xlu0 %v1896, 88
  %v2553 = vpop.permute.xlu0 %2552
  %2554 = vrot.lane.b32.xlu0 %v1901, 88
  %v2555 = vpop.permute.xlu0 %2554
  %v2562 = vsel %vm479, %v2537, 0
  %v2565 = vsel %vm479, %v2539, 0
  %v2568 = vsel %vm479, %v2541, 0
  %v2571 = vsel %vm479, %v2543, 0
  %v2574 = vsel %vm479, %v2545, 0
  %2576 = vmatprep.subr.mxu0 0.0
  %2577 = vmatpush1.msra.mxu0 %v2547
  %2578 = vmatprep.subr.mxu0 0.0
  %2579 = vmatpush1.msra.mxu0 %v2549
  %2580 = vmatprep.subr.mxu0 0.0
  %2581 = vmatpush1.msra.mxu0 %v2551
  %2582 = vmatprep.subr.mxu0 0.0
  %2583 = vmatpush1.msra.mxu0 %v2553
  %2584 = vmatprep.subr.mxu0 0.0
  %2585 = vmatpush1.msra.mxu0 %v2555
  %2586 = vmatprep.subr.mxu0 0.0
  %2587 = vmatpush1.msra.mxu0 0.0
  %2588 = vmatprep.subr.mxu0 0.0
  %2589 = vmatpush1.msra.mxu0 0.0
  %2590 = vmatprep.subr.mxu0 0.0
  %2591 = vmatpush1.msra.mxu0 0.0
  %2592 = vmatprep.subr.mxu0 0.0
  %2593 = vmatpush1.msra.mxu0 0.0
  %2594 = vmatprep.subr.mxu0 0.0
  %2595 = vmatpush1.msra.mxu0 0.0
  %2596 = vmatprep.subr.mxu0 0.0
  %2597 = vmatpush1.msra.mxu0 0.0
  %2598 = vmatprep.subr.mxu0 0.0
  %2599 = vmatpush1.msra.mxu0 0.0
  %2600 = vmatprep.subr.mxu0 0.0
  %2601 = vmatpush1.msra.mxu0 0.0
  %2602 = vmatprep.subr.mxu0 0.0
  %2603 = vmatpush1.msra.mxu0 0.0
  %2604 = vmatprep.subr.mxu0 0.0
  %2605 = vmatpush1.msra.mxu0 0.0
  %2606 = vmatprep.subr.mxu0 0.0
  %2607 = vmatpush1.msra.mxu0 0.0
  %2608 = vmatprep.subr.mxu0 0.0
  %2609 = vmatpush1.msra.mxu0 0.0
  %2610 = vmatprep.subr.mxu0 0.0
  %2611 = vmatpush1.msra.mxu0 0.0
  %2612 = vmatprep.subr.mxu0 0.0
  %2613 = vmatpush1.msra.mxu0 0.0
  %2614 = vmatprep.subr.mxu0 0.0
  %2615 = vmatpush1.msra.mxu0 0.0
  %2616 = vmatprep.subr.mxu0 0.0
  %2617 = vmatpush1.msra.mxu0 0.0
  %2618 = vmatprep.subr.mxu0 0.0
  %2619 = vmatpush1.msra.mxu0 0.0
  %2620 = vmatprep.subr.mxu0 0.0
  %2621 = vmatpush1.msra.mxu0 0.0
  %2622 = vmatprep.subr.mxu0 0.0
  %2623 = vmatpush1.msra.mxu0 0.0
  %2624 = vmatprep.subr.mxu0 0.0
  %2625 = vmatpush1.msra.mxu0 0.0
  %2626 = vmatprep.subr.mxu0 0.0
  %2627 = vmatpush1.msra.mxu0 0.0
  %2628 = vmatprep.subr.mxu0 0.0
  %2629 = vmatpush1.msra.mxu0 0.0
  %2630 = vmatprep.subr.mxu0 0.0
  %2631 = vmatpush1.msra.mxu0 0.0
  %2632 = vmatprep.subr.mxu0 0.0
  %2633 = vmatpush1.msra.mxu0 0.0
  %2634 = vmatprep.subr.mxu0 0.0
  %2635 = vmatpush1.msra.mxu0 0.0
  %2636 = vmatprep.subr.mxu0 0.0
  %2637 = vmatpush1.msra.mxu0 0.0
  %2638 = vmatprep.subr.mxu0 0.0
  %2639 = vmatpush1.msra.mxu0 0.0
  %2640 = vmatprep.mubr.f32.mxu0 0.0
  %2641 = vmatmul.mubr.f32.gmra.mrb[0].mxu0 %v2562
  %v2642 = vpop.f32.mrb[0].mxu0
  %v2643 = vadd.f32 0.0, %v2642
  %v2644 = vpop.f32.mrb[0].mxu0
  %2645 = vmatprep.mubr.f32.mxu0 0.0
  %2646 = vmatmul.mubr.f32.gmra.mrb[0].mxu0 %v2565
  %v2647 = vpop.f32.mrb[0].mxu0
  %v2648 = vadd.f32 0.0, %v2647
  %v2649 = vpop.f32.mrb[0].mxu0
  %2650 = vmatprep.mubr.f32.mxu0 0.0
  %2651 = vmatmul.mubr.f32.gmra.mrb[0].mxu0 %v2568
  %v2652 = vpop.f32.mrb[0].mxu0
  %v2653 = vadd.f32 0.0, %v2652
  %v2654 = vpop.f32.mrb[0].mxu0
  %2655 = vmatprep.mubr.f32.mxu0 0.0
  %2656 = vmatmul.mubr.f32.gmra.mrb[0].mxu0 %v2571
  %v2657 = vpop.f32.mrb[0].mxu0
  %v2658 = vadd.f32 0.0, %v2657
  %v2659 = vpop.f32.mrb[0].mxu0
  %2660 = vmatprep.mubr.f32.mxu0 0.0
  %2661 = vmatmul.mubr.f32.gmra.mrb[0].mxu0 %v2574
  %v2662 = vpop.f32.mrb[0].mxu0
  %v2663 = vadd.f32 0.0, %v2662
  %v2664 = vpop.f32.mrb[0].mxu0
  %2665 = vdwg.mxu0
  %2666 = vrot.lane.b32.xlu0 %v1905, 120
  %v2667 = vpop.permute.xlu0 %2666
  %2668 = vrot.lane.b32.xlu0 %v1906, 120
  %v2669 = vpop.permute.xlu0 %2668
  %v2671 = vsel %vm358, %v2643, 0
  %v2674 = vsel %vm358, %v2648, 0
  %v2677 = vsel %vm358, %v2653, 0
  %v2680 = vsel %vm358, %v2658, 0
  %v2683 = vsel %vm358, %v2663, 0
  %v2685 = vsel %vm358, %v2667, 0
  %v2687 = vsel %vm358, %v2669, 0
  %2689 = vmatprep.subr.mxu0 0.0
  %2690 = vmatpush1.xpose.msra.mxu0 %v2685
  %2691 = vmatprep.subr.mxu0 0.0
  %2692 = vmatpush1.xpose.msra.mxu0 %v2687
  %2693 = vmatprep.subr.mxu0 0.0
  %2694 = vmatpush1.xpose.msra.mxu0 0.0
  %2695 = vmatprep.subr.mxu0 0.0
  %2696 = vmatpush1.xpose.msra.mxu0 0.0
  %2697 = vmatprep.subr.mxu0 0.0
  %2698 = vmatpush1.xpose.msra.mxu0 0.0
  %2699 = vmatprep.subr.mxu0 0.0
  %2700 = vmatpush1.xpose.msra.mxu0 0.0
  %2701 = vmatprep.subr.mxu0 0.0
  %2702 = vmatpush1.xpose.msra.mxu0 0.0
  %2703 = vmatprep.subr.mxu0 0.0
  %2704 = vmatpush1.xpose.msra.mxu0 0.0
  %2705 = vmatprep.subr.mxu0 0.0
  %2706 = vmatpush1.xpose.msra.mxu0 0.0
  %2707 = vmatprep.subr.mxu0 0.0
  %2708 = vmatpush1.xpose.msra.mxu0 0.0
  %2709 = vmatprep.subr.mxu0 0.0
  %2710 = vmatpush1.xpose.msra.mxu0 0.0
  %2711 = vmatprep.subr.mxu0 0.0
  %2712 = vmatpush1.xpose.msra.mxu0 0.0
  %2713 = vmatprep.subr.mxu0 0.0
  %2714 = vmatpush1.xpose.msra.mxu0 0.0
  %2715 = vmatprep.subr.mxu0 0.0
  %2716 = vmatpush1.xpose.msra.mxu0 0.0
  %2717 = vmatprep.subr.mxu0 0.0
  %2718 = vmatpush1.xpose.msra.mxu0 0.0
  %2719 = vmatprep.subr.mxu0 0.0
  %2720 = vmatpush1.xpose.msra.mxu0 0.0
  %2721 = vmatprep.subr.mxu0 0.0
  %2722 = vmatpush1.xpose.msra.mxu0 0.0
  %2723 = vmatprep.subr.mxu0 0.0
  %2724 = vmatpush1.xpose.msra.mxu0 0.0
  %2725 = vmatprep.subr.mxu0 0.0
  %2726 = vmatpush1.xpose.msra.mxu0 0.0
  %2727 = vmatprep.subr.mxu0 0.0
  %2728 = vmatpush1.xpose.msra.mxu0 0.0
  %2729 = vmatprep.subr.mxu0 0.0
  %2730 = vmatpush1.xpose.msra.mxu0 0.0
  %2731 = vmatprep.subr.mxu0 0.0
  %2732 = vmatpush1.xpose.msra.mxu0 0.0
  %2733 = vmatprep.subr.mxu0 0.0
  %2734 = vmatpush1.xpose.msra.mxu0 0.0
  %2735 = vmatprep.subr.mxu0 0.0
  %2736 = vmatpush1.xpose.msra.mxu0 0.0
  %2737 = vmatprep.subr.mxu0 0.0
  %2738 = vmatpush1.xpose.msra.mxu0 0.0
  %2739 = vmatprep.subr.mxu0 0.0
  %2740 = vmatpush1.xpose.msra.mxu0 0.0
  %2741 = vmatprep.subr.mxu0 0.0
  %2742 = vmatpush1.xpose.msra.mxu0 0.0
  %2743 = vmatprep.subr.mxu0 0.0
  %2744 = vmatpush1.xpose.msra.mxu0 0.0
  %2745 = vmatprep.subr.mxu0 0.0
  %2746 = vmatpush1.xpose.msra.mxu0 0.0
  %2747 = vmatprep.subr.mxu0 0.0
  %2748 = vmatpush1.xpose.msra.mxu0 0.0
  %2749 = vmatprep.subr.mxu0 0.0
  %2750 = vmatpush1.xpose.msra.mxu0 0.0
  %2751 = vmatprep.subr.mxu0 0.0
  %2752 = vmatpush1.xpose.msra.mxu0 0.0
  %2753 = vmatprep.mubr.f32.mxu0 0.0
  %2754 = vmatmul.mubr.f32.gmra.mrb[0].mxu0 %v2671
  %v2755 = vpop.f32.mrb[0].mxu0
  %v2756 = vadd.f32 0.0, %v2755
  %v2757 = vpop.f32.mrb[0].mxu0
  %2758 = vmatprep.mubr.f32.mxu0 0.0
  %2759 = vmatmul.mubr.f32.gmra.mrb[0].mxu0 %v2674
  %v2760 = vpop.f32.mrb[0].mxu0
  %v2761 = vadd.f32 0.0, %v2760
  %v2762 = vpop.f32.mrb[0].mxu0
  %2763 = vmatprep.mubr.f32.mxu0 0.0
  %2764 = vmatmul.mubr.f32.gmra.mrb[0].mxu0 %v2677
  %v2765 = vpop.f32.mrb[0].mxu0
  %v2766 = vadd.f32 0.0, %v2765
  %v2767 = vpop.f32.mrb[0].mxu0
  %2768 = vmatprep.mubr.f32.mxu0 0.0
  %2769 = vmatmul.mubr.f32.gmra.mrb[0].mxu0 %v2680
  %v2770 = vpop.f32.mrb[0].mxu0
  %v2771 = vadd.f32 0.0, %v2770
  %v2772 = vpop.f32.mrb[0].mxu0
  %2773 = vmatprep.mubr.f32.mxu0 0.0
  %2774 = vmatmul.mubr.f32.gmra.mrb[0].mxu0 %v2683
  %v2775 = vpop.f32.mrb[0].mxu0
  %v2776 = vadd.f32 0.0, %v2775
  %v2777 = vpop.f32.mrb[0].mxu0
  %2778 = vdwg.mxu0
  %v2779 = vadd.f32 %v2341, %v2756
  %v2780 = vadd.f32 %v2342, %v2761
  %v2781 = vadd.f32 %v2343, %v2766
  %v2782 = vadd.f32 %v2344, %v2771
  %v2783 = vadd.f32 %v2345, %v2776
  %s2784 = scalar_lea.vmem %s9, 1
  %v2785 = vld [vmem:[%s2784] sm:$0x1]
  %s2786 = scalar_lea.vmem %s10, 1
  %v2787 = vld [vmem:[%s2786] sm:$0x1]
  %v2788 = vadd.f32 %v1761, %v2779
  %v2789 = vadd.f32 %v1762, %v2780
  %v2790 = vadd.f32 %v1763, %v2781
  %v2791 = vadd.f32 %v1764, %v2782
  %v2792 = vadd.f32 %v1765, %v2783
  %v2793 = vsel %vm216, %v2788, 0.0
  %v2794 = vsel %vm216, %v2789, 0.0
  %v2795 = vadd.f32 %v2793, %v2794
  %v2796 = vsel %vm216, %v2790, 0.0
  %v2797 = vadd.f32 %v2795, %v2796
  %v2798 = vsel %vm216, %v2791, 0.0
  %v2799 = vadd.f32 %v2797, %v2798
  %v2800 = vsel %vm216, %v2792, 0.0
  %v2801 = vadd.f32 %v2799, %v2800
  %v2802 = vrot.slane %v2801, 4
  %v2803 = vadd.f32 %v2801, %v2802
  %v2804 = vrot.slane %v2803, 2
  %v2805 = vadd.f32 %v2803, %v2804
  %v2806 = vrot.slane %v2805, 1
  %v2807 = vadd.f32 %v2805, %v2806
  %v2808 = vmul.f32 %v2807, %v1232
  %v2809 = vsub.f32 %v2788, %v2808
  %v2810 = vsub.f32 %v2789, %v2808
  %v2811 = vsub.f32 %v2790, %v2808
  %v2812 = vsub.f32 %v2791, %v2808
  %v2813 = vsub.f32 %v2792, %v2808
  %v2814 = vmul.f32 %v2809, %v2809
  %v2815 = vmul.f32 %v2810, %v2810
  %v2816 = vmul.f32 %v2811, %v2811
  %v2817 = vmul.f32 %v2812, %v2812
  %v2818 = vmul.f32 %v2813, %v2813
  %v2819 = vsel %vm216, %v2814, 0.0
  %v2820 = vsel %vm216, %v2815, 0.0
  %v2821 = vadd.f32 %v2819, %v2820
  %v2822 = vsel %vm216, %v2816, 0.0
  %v2823 = vadd.f32 %v2821, %v2822
  %v2824 = vsel %vm216, %v2817, 0.0
  %v2825 = vadd.f32 %v2823, %v2824
  %v2826 = vsel %vm216, %v2818, 0.0
  %v2827 = vadd.f32 %v2825, %v2826
  %v2828 = vrot.slane %v2827, 4
  %v2829 = vadd.f32 %v2827, %v2828
  %v2830 = vrot.slane %v2829, 2
  %v2831 = vadd.f32 %v2829, %v2830
  %v2832 = vrot.slane %v2831, 1
  %v2833 = vadd.f32 %v2831, %v2832
  %v2834 = vmul.f32 %v2833, %v1232
  %v2835 = vadd.f32 %v2834, 1e-05
  %v2836 = vrsqrt.pop %v2835
  %v2837 = vmul.f32 %v2809, %v2836
  %v2838 = vmul.f32 %v2810, %v2836
  %v2839 = vmul.f32 %v2811, %v2836
  %v2840 = vmul.f32 %v2812, %v2836
  %v2841 = vmul.f32 %v2813, %v2836
  %v2843 = vlaneseq
  %v2844 = vshrl.u32 %v2843, 7
  %v2845 = vsub.s32 0, %v2844
  %v2846 = vrot.slane %v2785, %v2845
  %v2848 = vmul.f32 %v2837, %v2846
  %v2849 = vmul.f32 %v2838, %v2846
  %v2850 = vmul.f32 %v2839, %v2846
  %v2851 = vmul.f32 %v2840, %v2846
  %v2852 = vmul.f32 %v2841, %v2846
  %v2854 = vlaneseq
  %v2855 = vshrl.u32 %v2854, 7
  %v2856 = vsub.s32 0, %v2855
  %v2857 = vrot.slane %v2787, %v2856
  %v2859 = vadd.f32 %v2848, %v2857
  %v2860 = vadd.f32 %v2849, %v2857
  %v2861 = vadd.f32 %v2850, %v2857
  %v2862 = vadd.f32 %v2851, %v2857
  %v2863 = vadd.f32 %v2852, %v2857
  %s2864 = scalar_lea.vmem %s11, 32
  %v2865 = vld [vmem:[%s2864] sm:$0xff]
  %v2866 = vld [vmem:[%s2864 + $0x8] sm:$0xff]
  %v2867 = vld [vmem:[%s2864 + $0x10] sm:$0xff]
  %v2868 = vld [vmem:[%s2864 + $0x18] sm:$0xff]
  %s2869 = scalar_lea.vmem %s12, 1
  %v2870 = vld [vmem:[%s2869] sm:$0x1]
  %v2872 = vlaneseq
  %v2873 = vshrl.u32 %v2872, 7
  %v2874 = vsub.s32 0, %v2873
  %v2875 = vrot.slane %v2870, %v2874
  %v2878 = vsel %vm216, %v2859, 0
  %v2881 = vsel %vm216, %v2860, 0
  %v2884 = vsel %vm216, %v2861, 0
  %v2887 = vsel %vm216, %v2862, 0
  %v2890 = vsel %vm216, %v2863, 0
  %v2893 = vsel %vm216, %v2865, 0
  %v2896 = vsel %vm216, %v2866, 0
  %v2899 = vsel %vm216, %v2867, 0
  %v2902 = vsel %vm216, %v2868, 0
  %2904 = vmatprep.subr.mxu0 0.0
  %2905 = vmatpush1.xpose.msra.mxu0 %v2893
  %2906 = vmatprep.subr.mxu0 0.0
  %2907 = vmatpush1.xpose.msra.mxu0 %v2896
  %2908 = vmatprep.subr.mxu0 0.0
  %2909 = vmatpush1.xpose.msra.mxu0 %v2899
  %2910 = vmatprep.subr.mxu0 0.0
  %2911 = vmatpush1.xpose.msra.mxu0 %v2902
  %2912 = vmatprep.subr.mxu0 0.0
  %2913 = vmatpush1.xpose.msra.mxu0 0.0
  %2914 = vmatprep.subr.mxu0 0.0
  %2915 = vmatpush1.xpose.msra.mxu0 0.0
  %2916 = vmatprep.subr.mxu0 0.0
  %2917 = vmatpush1.xpose.msra.mxu0 0.0
  %2918 = vmatprep.subr.mxu0 0.0
  %2919 = vmatpush1.xpose.msra.mxu0 0.0
  %2920 = vmatprep.subr.mxu0 0.0
  %2921 = vmatpush1.xpose.msra.mxu0 0.0
  %2922 = vmatprep.subr.mxu0 0.0
  %2923 = vmatpush1.xpose.msra.mxu0 0.0
  %2924 = vmatprep.subr.mxu0 0.0
  %2925 = vmatpush1.xpose.msra.mxu0 0.0
  %2926 = vmatprep.subr.mxu0 0.0
  %2927 = vmatpush1.xpose.msra.mxu0 0.0
  %2928 = vmatprep.subr.mxu0 0.0
  %2929 = vmatpush1.xpose.msra.mxu0 0.0
  %2930 = vmatprep.subr.mxu0 0.0
  %2931 = vmatpush1.xpose.msra.mxu0 0.0
  %2932 = vmatprep.subr.mxu0 0.0
  %2933 = vmatpush1.xpose.msra.mxu0 0.0
  %2934 = vmatprep.subr.mxu0 0.0
  %2935 = vmatpush1.xpose.msra.mxu0 0.0
  %2936 = vmatprep.subr.mxu0 0.0
  %2937 = vmatpush1.xpose.msra.mxu0 0.0
  %2938 = vmatprep.subr.mxu0 0.0
  %2939 = vmatpush1.xpose.msra.mxu0 0.0
  %2940 = vmatprep.subr.mxu0 0.0
  %2941 = vmatpush1.xpose.msra.mxu0 0.0
  %2942 = vmatprep.subr.mxu0 0.0
  %2943 = vmatpush1.xpose.msra.mxu0 0.0
  %2944 = vmatprep.subr.mxu0 0.0
  %2945 = vmatpush1.xpose.msra.mxu0 0.0
  %2946 = vmatprep.subr.mxu0 0.0
  %2947 = vmatpush1.xpose.msra.mxu0 0.0
  %2948 = vmatprep.subr.mxu0 0.0
  %2949 = vmatpush1.xpose.msra.mxu0 0.0
  %2950 = vmatprep.subr.mxu0 0.0
  %2951 = vmatpush1.xpose.msra.mxu0 0.0
  %2952 = vmatprep.subr.mxu0 0.0
  %2953 = vmatpush1.xpose.msra.mxu0 0.0
  %2954 = vmatprep.subr.mxu0 0.0
  %2955 = vmatpush1.xpose.msra.mxu0 0.0
  %2956 = vmatprep.subr.mxu0 0.0
  %2957 = vmatpush1.xpose.msra.mxu0 0.0
  %2958 = vmatprep.subr.mxu0 0.0
  %2959 = vmatpush1.xpose.msra.mxu0 0.0
  %2960 = vmatprep.subr.mxu0 0.0
  %2961 = vmatpush1.xpose.msra.mxu0 0.0
  %2962 = vmatprep.subr.mxu0 0.0
  %2963 = vmatpush1.xpose.msra.mxu0 0.0
  %2964 = vmatprep.subr.mxu0 0.0
  %2965 = vmatpush1.xpose.msra.mxu0 0.0
  %2966 = vmatprep.subr.mxu0 0.0
  %2967 = vmatpush1.xpose.msra.mxu0 0.0
  %2968 = vmatprep.mubr.f32.mxu0 0.0
  %2969 = vmatmul.mubr.f32.gmra.mrb[0].mxu0 %v2878
  %v2970 = vpop.f32.mrb[0].mxu0
  %v2971 = vadd.f32 %v2875, %v2970
  %v2972 = vpop.f32.mrb[0].mxu0
  %2973 = vmatprep.mubr.f32.mxu0 0.0
  %2974 = vmatmul.mubr.f32.gmra.mrb[0].mxu0 %v2881
  %v2975 = vpop.f32.mrb[0].mxu0
  %v2976 = vadd.f32 %v2875, %v2975
  %v2977 = vpop.f32.mrb[0].mxu0
  %2978 = vmatprep.mubr.f32.mxu0 0.0
  %2979 = vmatmul.mubr.f32.gmra.mrb[0].mxu0 %v2884
  %v2980 = vpop.f32.mrb[0].mxu0
  %v2981 = vadd.f32 %v2875, %v2980
  %v2982 = vpop.f32.mrb[0].mxu0
  %2983 = vmatprep.mubr.f32.mxu0 0.0
  %2984 = vmatmul.mubr.f32.gmra.mrb[0].mxu0 %v2887
  %v2985 = vpop.f32.mrb[0].mxu0
  %v2986 = vadd.f32 %v2875, %v2985
  %v2987 = vpop.f32.mrb[0].mxu0
  %2988 = vmatprep.mubr.f32.mxu0 0.0
  %2989 = vmatmul.mubr.f32.gmra.mrb[0].mxu0 %v2890
  %v2990 = vpop.f32.mrb[0].mxu0
  %v2991 = vadd.f32 %v2875, %v2990
  %v2992 = vpop.f32.mrb[0].mxu0
  %2993 = vdwg.mxu0
  %v2994 = vmul.f32 %v2971, 0.5
  %v2995 = vmul.f32 %v2976, 0.5
  %v2996 = vmul.f32 %v2981, 0.5
  %v2997 = vmul.f32 %v2986, 0.5
  %v2998 = vmul.f32 %v2991, 0.5
  %v2999 = vmul.f32 %v2971, 0.70710677
  %v3000 = vmul.f32 %v2976, 0.70710677
  %v3001 = vmul.f32 %v2981, 0.70710677
  %v3002 = vmul.f32 %v2986, 0.70710677
  %v3003 = vmul.f32 %v2991, 0.70710677
  %v3004 = vmax.f32 %v2999, -4.0
  %v3005 = vmax.f32 %v3000, -4.0
  %v3006 = vmax.f32 %v3001, -4.0
  %v3007 = vmax.f32 %v3002, -4.0
  %v3008 = vmax.f32 %v3003, -4.0
  %v3009 = vmin.f32 %v3004, 4.0
  %v3010 = vmin.f32 %v3005, 4.0
  %v3011 = vmin.f32 %v3006, 4.0
  %v3012 = vmin.f32 %v3007, 4.0
  %v3013 = vmin.f32 %v3008, 4.0
  %v3014 = vmul.f32 %v3009, %v3009
  %v3015 = vmul.f32 %v3010, %v3010
  %v3016 = vmul.f32 %v3011, %v3011
  %v3017 = vmul.f32 %v3012, %v3012
  %v3018 = vmul.f32 %v3013, %v3013
  %v3019 = vmul.f32 %v3014, -2.7261424e-10
  %v3020 = vmul.f32 %v3015, -2.7261424e-10
  %v3021 = vmul.f32 %v3016, -2.7261424e-10
  %v3022 = vmul.f32 %v3017, -2.7261424e-10
  %v3023 = vmul.f32 %v3018, -2.7261424e-10
  %v3024 = vadd.f32 %v3019, 2.7706815e-08
  %v3025 = vadd.f32 %v3020, 2.7706815e-08
  %v3026 = vadd.f32 %v3021, 2.7706815e-08
  %v3027 = vadd.f32 %v3022, 2.7706815e-08
  %v3028 = vadd.f32 %v3023, 2.7706815e-08
  %v3029 = vmul.f32 %v3024, %v3014
  %v3030 = vmul.f32 %v3025, %v3015
  %v3031 = vmul.f32 %v3026, %v3016
  %v3032 = vmul.f32 %v3027, %v3017
  %v3033 = vmul.f32 %v3028, %v3018
  %v3034 = vadd.f32 %v3029, -2.101024e-06
  %v3035 = vadd.f32 %v3030, -2.101024e-06
  %v3036 = vadd.f32 %v3031, -2.101024e-06
  %v3037 = vadd.f32 %v3032, -2.101024e-06
  %v3038 = vadd.f32 %v3033, -2.101024e-06
  %v3039 = vmul.f32 %v3034, %v3014
  %v3040 = vmul.f32 %v3035, %v3015
  %v3041 = vmul.f32 %v3036, %v3016
  %v3042 = vmul.f32 %v3037, %v3017
  %v3043 = vmul.f32 %v3038, %v3018
  %v3044 = vadd.f32 %v3039, -5.6925062e-05
  %v3045 = vadd.f32 %v3040, -5.6925062e-05
  %v3046 = vadd.f32 %v3041, -5.6925062e-05
  %v3047 = vadd.f32 %v3042, -5.6925062e-05
  %v3048 = vadd.f32 %v3043, -5.6925062e-05
  %v3049 = vmul.f32 %v3044, %v3014
  %v3050 = vmul.f32 %v3045, %v3015
  %v3051 = vmul.f32 %v3046, %v3016
  %v3052 = vmul.f32 %v3047, %v3017
  %v3053 = vmul.f32 %v3048, %v3018
  %v3054 = vadd.f32 %v3049, -0.00073499064
  %v3055 = vadd.f32 %v3050, -0.00073499064
  %v3056 = vadd.f32 %v3051, -0.00073499064
  %v3057 = vadd.f32 %v3052, -0.00073499064
  %v3058 = vadd.f32 %v3053, -0.00073499064
  %v3059 = vmul.f32 %v3054, %v3014
  %v3060 = vmul.f32 %v3055, %v3015
  %v3061 = vmul.f32 %v3056, %v3016
  %v3062 = vmul.f32 %v3057, %v3017
  %v3063 = vmul.f32 %v3058, %v3018
  %v3064 = vadd.f32 %v3059, -0.0029546
  %v3065 = vadd.f32 %v3060, -0.0029546
  %v3066 = vadd.f32 %v3061, -0.0029546
  %v3067 = vadd.f32 %v3062, -0.0029546
  %v3068 = vadd.f32 %v3063, -0.0029546
  %v3069 = vmul.f32 %v3064, %v3014
  %v3070 = vmul.f32 %v3065, %v3015
  %v3071 = vmul.f32 %v3066, %v3016
  %v3072 = vmul.f32 %v3067, %v3017
  %v3073 = vmul.f32 %v3068, %v3018
  %v3074 = vadd.f32 %v3069, -0.016096033
  %v3075 = vadd.f32 %v3070, -0.016096033
  %v3076 = vadd.f32 %v3071, -0.016096033
  %v3077 = vadd.f32 %v3072, -0.016096033
  %v3078 = vadd.f32 %v3073, -0.016096033
  %v3079 = vmul.f32 %v3014, -1.45660715e-05
  %v3080 = vmul.f32 %v3015, -1.45660715e-05
  %v3081 = vmul.f32 %v3016, -1.45660715e-05
  %v3082 = vmul.f32 %v3017, -1.45660715e-05
  %v3083 = vmul.f32 %v3018, -1.45660715e-05
  %v3084 = vadd.f32 %v3079, -0.00021337405
  %v3085 = vadd.f32 %v3080, -0.00021337405
  %v3086 = vadd.f32 %v3081, -0.00021337405
  %v3087 = vadd.f32 %v3082, -0.00021337405
  %v3088 = vadd.f32 %v3083, -0.00021337405
  %v3089 = vmul.f32 %v3084, %v3014
  %v3090 = vmul.f32 %v3085, %v3015
  %v3091 = vmul.f32 %v3086, %v3016
  %v3092 = vmul.f32 %v3087, %v3017
  %v3093 = vmul.f32 %v3088, %v3018
  %v3094 = vadd.f32 %v3089, -0.001682827
  %v3095 = vadd.f32 %v3090, -0.001682827
  %v3096 = vadd.f32 %v3091, -0.001682827
  %v3097 = vadd.f32 %v3092, -0.001682827
  %v3098 = vadd.f32 %v3093, -0.001682827
  %v3099 = vmul.f32 %v3094, %v3014
  %v3100 = vmul.f32 %v3095, %v3015
  %v3101 = vmul.f32 %v3096, %v3016
  %v3102 = vmul.f32 %v3097, %v3017
  %v3103 = vmul.f32 %v3098, %v3018
  %v3104 = vadd.f32 %v3099, -0.0073733293
  %v3105 = vadd.f32 %v3100, -0.0073733293
  %v3106 = vadd.f32 %v3101, -0.0073733293
  %v3107 = vadd.f32 %v3102, -0.0073733293
  %v3108 = vadd.f32 %v3103, -0.0073733293
  %v3109 = vmul.f32 %v3104, %v3014
  %v3110 = vmul.f32 %v3105, %v3015
  %v3111 = vmul.f32 %v3106, %v3016
  %v3112 = vmul.f32 %v3107, %v3017
  %v3113 = vmul.f32 %v3108, %v3018
  %v3114 = vadd.f32 %v3109, -0.014264739
  %v3115 = vadd.f32 %v3110, -0.014264739
  %v3116 = vadd.f32 %v3111, -0.014264739
  %v3117 = vadd.f32 %v3112, -0.014264739
  %v3118 = vadd.f32 %v3113, -0.014264739
  %v3119 = vmul.f32 %v3009, %v3074
  %v3120 = vmul.f32 %v3010, %v3075
  %v3121 = vmul.f32 %v3011, %v3076
  %v3122 = vmul.f32 %v3012, %v3077
  %v3123 = vmul.f32 %v3013, %v3078
  %v3124 = vrcp.pop %v3114
  %v3125 = vmul.f32 %v3119, %v3124
  %v3126 = vrcp.pop %v3115
  %v3127 = vmul.f32 %v3120, %v3126
  %v3128 = vrcp.pop %v3116
  %v3129 = vmul.f32 %v3121, %v3128
  %v3130 = vrcp.pop %v3117
  %v3131 = vmul.f32 %v3122, %v3130
  %v3132 = vrcp.pop %v3118
  %v3133 = vmul.f32 %v3123, %v3132
  %v3134 = vadd.f32 %v3125, 1.0
  %v3135 = vadd.f32 %v3127, 1.0
  %v3136 = vadd.f32 %v3129, 1.0
  %v3137 = vadd.f32 %v3131, 1.0
  %v3138 = vadd.f32 %v3133, 1.0
  %v3139 = vmul.f32 %v2994, %v3134
  %v3140 = vmul.f32 %v2995, %v3135
  %v3141 = vmul.f32 %v2996, %v3136
  %v3142 = vmul.f32 %v2997, %v3137
  %v3143 = vmul.f32 %v2998, %v3138
  %s3144 = scalar_lea.vmem %s13, 16
  %v3145 = vld [vmem:[%s3144] sm:$0xff]
  %v3146 = vld [vmem:[%s3144 + $0x8] sm:$0xff]
  %s3147 = scalar_lea.vmem %s14, 1
  %v3148 = vld [vmem:[%s3147] sm:$0x1]
  %v3150 = vlaneseq
  %v3151 = vshrl.u32 %v3150, 7
  %v3152 = vsub.s32 0, %v3151
  %v3153 = vrot.slane %v3148, %v3152
  %v3156 = vsel %vm1576, %v3139, 0
  %v3159 = vsel %vm1576, %v3140, 0
  %v3162 = vsel %vm1576, %v3141, 0
  %v3165 = vsel %vm1576, %v3142, 0
  %v3168 = vsel %vm1576, %v3143, 0
  %v3171 = vsel %vm1576, %v3145, 0
  %v3174 = vsel %vm1576, %v3146, 0
  %3176 = vmatprep.subr.mxu0 0.0
  %3177 = vmatpush1.xpose.msra.mxu0 %v3171
  %3178 = vmatprep.subr.mxu0 0.0
  %3179 = vmatpush1.xpose.msra.mxu0 %v3174
  %3180 = vmatprep.subr.mxu0 0.0
  %3181 = vmatpush1.xpose.msra.mxu0 0.0
  %3182 = vmatprep.subr.mxu0 0.0
  %3183 = vmatpush1.xpose.msra.mxu0 0.0
  %3184 = vmatprep.subr.mxu0 0.0
  %3185 = vmatpush1.xpose.msra.mxu0 0.0
  %3186 = vmatprep.subr.mxu0 0.0
  %3187 = vmatpush1.xpose.msra.mxu0 0.0
  %3188 = vmatprep.subr.mxu0 0.0
  %3189 = vmatpush1.xpose.msra.mxu0 0.0
  %3190 = vmatprep.subr.mxu0 0.0
  %3191 = vmatpush1.xpose.msra.mxu0 0.0
  %3192 = vmatprep.subr.mxu0 0.0
  %3193 = vmatpush1.xpose.msra.mxu0 0.0
  %3194 = vmatprep.subr.mxu0 0.0
  %3195 = vmatpush1.xpose.msra.mxu0 0.0
  %3196 = vmatprep.subr.mxu0 0.0
  %3197 = vmatpush1.xpose.msra.mxu0 0.0
  %3198 = vmatprep.subr.mxu0 0.0
  %3199 = vmatpush1.xpose.msra.mxu0 0.0
  %3200 = vmatprep.subr.mxu0 0.0
  %3201 = vmatpush1.xpose.msra.mxu0 0.0
  %3202 = vmatprep.subr.mxu0 0.0
  %3203 = vmatpush1.xpose.msra.mxu0 0.0
  %3204 = vmatprep.subr.mxu0 0.0
  %3205 = vmatpush1.xpose.msra.mxu0 0.0
  %3206 = vmatprep.subr.mxu0 0.0
  %3207 = vmatpush1.xpose.msra.mxu0 0.0
  %3208 = vmatprep.subr.mxu0 0.0
  %3209 = vmatpush1.xpose.msra.mxu0 0.0
  %3210 = vmatprep.subr.mxu0 0.0
  %3211 = vmatpush1.xpose.msra.mxu0 0.0
  %3212 = vmatprep.subr.mxu0 0.0
  %3213 = vmatpush1.xpose.msra.mxu0 0.0
  %3214 = vmatprep.subr.mxu0 0.0
  %3215 = vmatpush1.xpose.msra.mxu0 0.0
  %3216 = vmatprep.subr.mxu0 0.0
  %3217 = vmatpush1.xpose.msra.mxu0 0.0
  %3218 = vmatprep.subr.mxu0 0.0
  %3219 = vmatpush1.xpose.msra.mxu0 0.0
  %3220 = vmatprep.subr.mxu0 0.0
  %3221 = vmatpush1.xpose.msra.mxu0 0.0
  %3222 = vmatprep.subr.mxu0 0.0
  %3223 = vmatpush1.xpose.msra.mxu0 0.0
  %3224 = vmatprep.subr.mxu0 0.0
  %3225 = vmatpush1.xpose.msra.mxu0 0.0
  %3226 = vmatprep.subr.mxu0 0.0
  %3227 = vmatpush1.xpose.msra.mxu0 0.0
  %3228 = vmatprep.subr.mxu0 0.0
  %3229 = vmatpush1.xpose.msra.mxu0 0.0
  %3230 = vmatprep.subr.mxu0 0.0
  %3231 = vmatpush1.xpose.msra.mxu0 0.0
  %3232 = vmatprep.subr.mxu0 0.0
  %3233 = vmatpush1.xpose.msra.mxu0 0.0
  %3234 = vmatprep.subr.mxu0 0.0
  %3235 = vmatpush1.xpose.msra.mxu0 0.0
  %3236 = vmatprep.subr.mxu0 0.0
  %3237 = vmatpush1.xpose.msra.mxu0 0.0
  %3238 = vmatprep.subr.mxu0 0.0
  %3239 = vmatpush1.xpose.msra.mxu0 0.0
  %3240 = vmatprep.mubr.f32.mxu0 0.0
  %3241 = vmatmul.mubr.f32.gmra.mrb[0].mxu0 %v3156
  %v3242 = vpop.f32.mrb[0].mxu0
  %v3243 = vadd.f32 %v3153, %v3242
  %v3244 = vpop.f32.mrb[0].mxu0
  %3245 = vmatprep.mubr.f32.mxu0 0.0
  %3246 = vmatmul.mubr.f32.gmra.mrb[0].mxu0 %v3159
  %v3247 = vpop.f32.mrb[0].mxu0
  %v3248 = vadd.f32 %v3153, %v3247
  %v3249 = vpop.f32.mrb[0].mxu0
  %3250 = vmatprep.mubr.f32.mxu0 0.0
  %3251 = vmatmul.mubr.f32.gmra.mrb[0].mxu0 %v3162
  %v3252 = vpop.f32.mrb[0].mxu0
  %v3253 = vadd.f32 %v3153, %v3252
  %v3254 = vpop.f32.mrb[0].mxu0
  %3255 = vmatprep.mubr.f32.mxu0 0.0
  %3256 = vmatmul.mubr.f32.gmra.mrb[0].mxu0 %v3165
  %v3257 = vpop.f32.mrb[0].mxu0
  %v3258 = vadd.f32 %v3153, %v3257
  %v3259 = vpop.f32.mrb[0].mxu0
  %3260 = vmatprep.mubr.f32.mxu0 0.0
  %3261 = vmatmul.mubr.f32.gmra.mrb[0].mxu0 %v3168
  %v3262 = vpop.f32.mrb[0].mxu0
  %v3263 = vadd.f32 %v3153, %v3262
  %v3264 = vpop.f32.mrb[0].mxu0
  %3265 = vdwg.mxu0
  %s3266 = scalar_lea.vmem %s15, 1
  %v3267 = vld [vmem:[%s3266] sm:$0x1]
  %s3268 = scalar_lea.vmem %s16, 1
  %v3269 = vld [vmem:[%s3268] sm:$0x1]
  %v3270 = vadd.f32 %v2859, %v3243
  %v3271 = vadd.f32 %v2860, %v3248
  %v3272 = vadd.f32 %v2861, %v3253
  %v3273 = vadd.f32 %v2862, %v3258
  %v3274 = vadd.f32 %v2863, %v3263
  %v3275 = vsel %vm216, %v3270, 0.0
  %v3276 = vsel %vm216, %v3271, 0.0
  %v3277 = vadd.f32 %v3275, %v3276
  %v3278 = vsel %vm216, %v3272, 0.0
  %v3279 = vadd.f32 %v3277, %v3278
  %v3280 = vsel %vm216, %v3273, 0.0
  %v3281 = vadd.f32 %v3279, %v3280
  %v3282 = vsel %vm216, %v3274, 0.0
  %v3283 = vadd.f32 %v3281, %v3282
  %v3284 = vrot.slane %v3283, 4
  %v3285 = vadd.f32 %v3283, %v3284
  %v3286 = vrot.slane %v3285, 2
  %v3287 = vadd.f32 %v3285, %v3286
  %v3288 = vrot.slane %v3287, 1
  %v3289 = vadd.f32 %v3287, %v3288
  %v3290 = vmul.f32 %v3289, %v1232
  %v3291 = vsub.f32 %v3270, %v3290
  %v3292 = vsub.f32 %v3271, %v3290
  %v3293 = vsub.f32 %v3272, %v3290
  %v3294 = vsub.f32 %v3273, %v3290
  %v3295 = vsub.f32 %v3274, %v3290
  %v3296 = vmul.f32 %v3291, %v3291
  %v3297 = vmul.f32 %v3292, %v3292
  %v3298 = vmul.f32 %v3293, %v3293
  %v3299 = vmul.f32 %v3294, %v3294
  %v3300 = vmul.f32 %v3295, %v3295
  %v3301 = vsel %vm216, %v3296, 0.0
  %v3302 = vsel %vm216, %v3297, 0.0
  %v3303 = vadd.f32 %v3301, %v3302
  %v3304 = vsel %vm216, %v3298, 0.0
  %v3305 = vadd.f32 %v3303, %v3304
  %v3306 = vsel %vm216, %v3299, 0.0
  %v3307 = vadd.f32 %v3305, %v3306
  %v3308 = vsel %vm216, %v3300, 0.0
  %v3309 = vadd.f32 %v3307, %v3308
  %v3310 = vrot.slane %v3309, 4
  %v3311 = vadd.f32 %v3309, %v3310
  %v3312 = vrot.slane %v3311, 2
  %v3313 = vadd.f32 %v3311, %v3312
  %v3314 = vrot.slane %v3313, 1
  %v3315 = vadd.f32 %v3313, %v3314
  %v3316 = vmul.f32 %v3315, %v1232
  %v3317 = vadd.f32 %v3316, 1e-05
  %v3318 = vrsqrt.pop %v3317
  %v3319 = vmul.f32 %v3291, %v3318
  %v3320 = vmul.f32 %v3292, %v3318
  %v3321 = vmul.f32 %v3293, %v3318
  %v3322 = vmul.f32 %v3294, %v3318
  %v3323 = vmul.f32 %v3295, %v3318
  %v3325 = vlaneseq
  %v3326 = vshrl.u32 %v3325, 7
  %v3327 = vsub.s32 0, %v3326
  %v3328 = vrot.slane %v3267, %v3327
  %v3330 = vmul.f32 %v3319, %v3328
  %v3331 = vmul.f32 %v3320, %v3328
  %v3332 = vmul.f32 %v3321, %v3328
  %v3333 = vmul.f32 %v3322, %v3328
  %v3334 = vmul.f32 %v3323, %v3328
  %v3336 = vlaneseq
  %v3337 = vshrl.u32 %v3336, 7
  %v3338 = vsub.s32 0, %v3337
  %v3339 = vrot.slane %v3269, %v3338
  %v3341 = vadd.f32 %v3330, %v3339
  %v3342 = vadd.f32 %v3331, %v3339
  %v3343 = vadd.f32 %v3332, %v3339
  %v3344 = vadd.f32 %v3333, %v3339
  %v3345 = vadd.f32 %v3334, %v3339
  %v3346 = vld [vmem:[%s18] sm:$0x1]
  %v3347 = vld [vmem:[%s17] sm:$0xff]
  %v3349 = vsel %vm216, %v3341, 0
  %v3352 = vsel %vm216, %v3347, 0
  %3354 = vmatprep.subr.mxu0 0.0
  %3355 = vmatpush1.xpose.msra.mxu0 %v3352
  %3356 = vmatprep.subr.mxu0 0.0
  %3357 = vmatpush1.xpose.msra.mxu0 0.0
  %3358 = vmatprep.subr.mxu0 0.0
  %3359 = vmatpush1.xpose.msra.mxu0 0.0
  %3360 = vmatprep.subr.mxu0 0.0
  %3361 = vmatpush1.xpose.msra.mxu0 0.0
  %3362 = vmatprep.subr.mxu0 0.0
  %3363 = vmatpush1.xpose.msra.mxu0 0.0
  %3364 = vmatprep.subr.mxu0 0.0
  %3365 = vmatpush1.xpose.msra.mxu0 0.0
  %3366 = vmatprep.subr.mxu0 0.0
  %3367 = vmatpush1.xpose.msra.mxu0 0.0
  %3368 = vmatprep.subr.mxu0 0.0
  %3369 = vmatpush1.xpose.msra.mxu0 0.0
  %3370 = vmatprep.subr.mxu0 0.0
  %3371 = vmatpush1.xpose.msra.mxu0 0.0
  %3372 = vmatprep.subr.mxu0 0.0
  %3373 = vmatpush1.xpose.msra.mxu0 0.0
  %3374 = vmatprep.subr.mxu0 0.0
  %3375 = vmatpush1.xpose.msra.mxu0 0.0
  %3376 = vmatprep.subr.mxu0 0.0
  %3377 = vmatpush1.xpose.msra.mxu0 0.0
  %3378 = vmatprep.subr.mxu0 0.0
  %3379 = vmatpush1.xpose.msra.mxu0 0.0
  %3380 = vmatprep.subr.mxu0 0.0
  %3381 = vmatpush1.xpose.msra.mxu0 0.0
  %3382 = vmatprep.subr.mxu0 0.0
  %3383 = vmatpush1.xpose.msra.mxu0 0.0
  %3384 = vmatprep.subr.mxu0 0.0
  %3385 = vmatpush1.xpose.msra.mxu0 0.0
  %3386 = vmatprep.subr.mxu0 0.0
  %3387 = vmatpush1.xpose.msra.mxu0 0.0
  %3388 = vmatprep.subr.mxu0 0.0
  %3389 = vmatpush1.xpose.msra.mxu0 0.0
  %3390 = vmatprep.subr.mxu0 0.0
  %3391 = vmatpush1.xpose.msra.mxu0 0.0
  %3392 = vmatprep.subr.mxu0 0.0
  %3393 = vmatpush1.xpose.msra.mxu0 0.0
  %3394 = vmatprep.subr.mxu0 0.0
  %3395 = vmatpush1.xpose.msra.mxu0 0.0
  %3396 = vmatprep.subr.mxu0 0.0
  %3397 = vmatpush1.xpose.msra.mxu0 0.0
  %3398 = vmatprep.subr.mxu0 0.0
  %3399 = vmatpush1.xpose.msra.mxu0 0.0
  %3400 = vmatprep.subr.mxu0 0.0
  %3401 = vmatpush1.xpose.msra.mxu0 0.0
  %3402 = vmatprep.subr.mxu0 0.0
  %3403 = vmatpush1.xpose.msra.mxu0 0.0
  %3404 = vmatprep.subr.mxu0 0.0
  %3405 = vmatpush1.xpose.msra.mxu0 0.0
  %3406 = vmatprep.subr.mxu0 0.0
  %3407 = vmatpush1.xpose.msra.mxu0 0.0
  %3408 = vmatprep.subr.mxu0 0.0
  %3409 = vmatpush1.xpose.msra.mxu0 0.0
  %3410 = vmatprep.subr.mxu0 0.0
  %3411 = vmatpush1.xpose.msra.mxu0 0.0
  %3412 = vmatprep.subr.mxu0 0.0
  %3413 = vmatpush1.xpose.msra.mxu0 0.0
  %3414 = vmatprep.subr.mxu0 0.0
  %3415 = vmatpush1.xpose.msra.mxu0 0.0
  %3416 = vmatprep.subr.mxu0 0.0
  %3417 = vmatpush1.xpose.msra.mxu0 0.0
  %3418 = vmatprep.mubr.f32.mxu0 0.0
  %3419 = vmatmul.mubr.f32.gmra.mrb[0].mxu0 %v3349
  %v3420 = vpop.f32.mrb[0].mxu0
  %v3421 = vadd.f32 0.0, %v3420
  %v3422 = vpop.f32.mrb[0].mxu0
  %3423 = vdwg.mxu0
  %v3425 = vlaneseq
  %v3426 = vshrl.u32 %v3425, 7
  %v3427 = vsub.s32 0, %v3426
  %v3428 = vrot.slane %v3346, %v3427
  %v3430 = vadd.f32 %v3428, %v3421
  %s3431 = scalar_lea.vmem %s17, 8
  %v3432 = vld [vmem:[%s3431] sm:$0xff]
  %v3434 = vsel %vm216, %v3342, 0
  %v3437 = vsel %vm216, %v3432, 0
  %3439 = vmatprep.subr.mxu0 0.0
  %3440 = vmatpush1.xpose.msra.mxu0 %v3437
  %3441 = vmatprep.subr.mxu0 0.0
  %3442 = vmatpush1.xpose.msra.mxu0 0.0
  %3443 = vmatprep.subr.mxu0 0.0
  %3444 = vmatpush1.xpose.msra.mxu0 0.0
  %3445 = vmatprep.subr.mxu0 0.0
  %3446 = vmatpush1.xpose.msra.mxu0 0.0
  %3447 = vmatprep.subr.mxu0 0.0
  %3448 = vmatpush1.xpose.msra.mxu0 0.0
  %3449 = vmatprep.subr.mxu0 0.0
  %3450 = vmatpush1.xpose.msra.mxu0 0.0
  %3451 = vmatprep.subr.mxu0 0.0
  %3452 = vmatpush1.xpose.msra.mxu0 0.0
  %3453 = vmatprep.subr.mxu0 0.0
  %3454 = vmatpush1.xpose.msra.mxu0 0.0
  %3455 = vmatprep.subr.mxu0 0.0
  %3456 = vmatpush1.xpose.msra.mxu0 0.0
  %3457 = vmatprep.subr.mxu0 0.0
  %3458 = vmatpush1.xpose.msra.mxu0 0.0
  %3459 = vmatprep.subr.mxu0 0.0
  %3460 = vmatpush1.xpose.msra.mxu0 0.0
  %3461 = vmatprep.subr.mxu0 0.0
  %3462 = vmatpush1.xpose.msra.mxu0 0.0
  %3463 = vmatprep.subr.mxu0 0.0
  %3464 = vmatpush1.xpose.msra.mxu0 0.0
  %3465 = vmatprep.subr.mxu0 0.0
  %3466 = vmatpush1.xpose.msra.mxu0 0.0
  %3467 = vmatprep.subr.mxu0 0.0
  %3468 = vmatpush1.xpose.msra.mxu0 0.0
  %3469 = vmatprep.subr.mxu0 0.0
  %3470 = vmatpush1.xpose.msra.mxu0 0.0
  %3471 = vmatprep.subr.mxu0 0.0
  %3472 = vmatpush1.xpose.msra.mxu0 0.0
  %3473 = vmatprep.subr.mxu0 0.0
  %3474 = vmatpush1.xpose.msra.mxu0 0.0
  %3475 = vmatprep.subr.mxu0 0.0
  %3476 = vmatpush1.xpose.msra.mxu0 0.0
  %3477 = vmatprep.subr.mxu0 0.0
  %3478 = vmatpush1.xpose.msra.mxu0 0.0
  %3479 = vmatprep.subr.mxu0 0.0
  %3480 = vmatpush1.xpose.msra.mxu0 0.0
  %3481 = vmatprep.subr.mxu0 0.0
  %3482 = vmatpush1.xpose.msra.mxu0 0.0
  %3483 = vmatprep.subr.mxu0 0.0
  %3484 = vmatpush1.xpose.msra.mxu0 0.0
  %3485 = vmatprep.subr.mxu0 0.0
  %3486 = vmatpush1.xpose.msra.mxu0 0.0
  %3487 = vmatprep.subr.mxu0 0.0
  %3488 = vmatpush1.xpose.msra.mxu0 0.0
  %3489 = vmatprep.subr.mxu0 0.0
  %3490 = vmatpush1.xpose.msra.mxu0 0.0
  %3491 = vmatprep.subr.mxu0 0.0
  %3492 = vmatpush1.xpose.msra.mxu0 0.0
  %3493 = vmatprep.subr.mxu0 0.0
  %3494 = vmatpush1.xpose.msra.mxu0 0.0
  %3495 = vmatprep.subr.mxu0 0.0
  %3496 = vmatpush1.xpose.msra.mxu0 0.0
  %3497 = vmatprep.subr.mxu0 0.0
  %3498 = vmatpush1.xpose.msra.mxu0 0.0
  %3499 = vmatprep.subr.mxu0 0.0
  %3500 = vmatpush1.xpose.msra.mxu0 0.0
  %3501 = vmatprep.subr.mxu0 0.0
  %3502 = vmatpush1.xpose.msra.mxu0 0.0
  %3503 = vmatprep.mubr.f32.mxu0 0.0
  %3504 = vmatmul.mubr.f32.gmra.mrb[0].mxu0 %v3434
  %v3505 = vpop.f32.mrb[0].mxu0
  %v3506 = vadd.f32 0.0, %v3505
  %v3507 = vpop.f32.mrb[0].mxu0
  %3508 = vdwg.mxu0
  %v3509 = vadd.f32 %v3430, %v3506
  %s3510 = scalar_lea.vmem %s17, 16
  %v3511 = vld [vmem:[%s3510] sm:$0xff]
  %v3513 = vsel %vm216, %v3343, 0
  %v3516 = vsel %vm216, %v3511, 0
  %3518 = vmatprep.subr.mxu0 0.0
  %3519 = vmatpush1.xpose.msra.mxu0 %v3516
  %3520 = vmatprep.subr.mxu0 0.0
  %3521 = vmatpush1.xpose.msra.mxu0 0.0
  %3522 = vmatprep.subr.mxu0 0.0
  %3523 = vmatpush1.xpose.msra.mxu0 0.0
  %3524 = vmatprep.subr.mxu0 0.0
  %3525 = vmatpush1.xpose.msra.mxu0 0.0
  %3526 = vmatprep.subr.mxu0 0.0
  %3527 = vmatpush1.xpose.msra.mxu0 0.0
  %3528 = vmatprep.subr.mxu0 0.0
  %3529 = vmatpush1.xpose.msra.mxu0 0.0
  %3530 = vmatprep.subr.mxu0 0.0
  %3531 = vmatpush1.xpose.msra.mxu0 0.0
  %3532 = vmatprep.subr.mxu0 0.0
  %3533 = vmatpush1.xpose.msra.mxu0 0.0
  %3534 = vmatprep.subr.mxu0 0.0
  %3535 = vmatpush1.xpose.msra.mxu0 0.0
  %3536 = vmatprep.subr.mxu0 0.0
  %3537 = vmatpush1.xpose.msra.mxu0 0.0
  %3538 = vmatprep.subr.mxu0 0.0
  %3539 = vmatpush1.xpose.msra.mxu0 0.0
  %3540 = vmatprep.subr.mxu0 0.0
  %3541 = vmatpush1.xpose.msra.mxu0 0.0
  %3542 = vmatprep.subr.mxu0 0.0
  %3543 = vmatpush1.xpose.msra.mxu0 0.0
  %3544 = vmatprep.subr.mxu0 0.0
  %3545 = vmatpush1.xpose.msra.mxu0 0.0
  %3546 = vmatprep.subr.mxu0 0.0
  %3547 = vmatpush1.xpose.msra.mxu0 0.0
  %3548 = vmatprep.subr.mxu0 0.0
  %3549 = vmatpush1.xpose.msra.mxu0 0.0
  %3550 = vmatprep.subr.mxu0 0.0
  %3551 = vmatpush1.xpose.msra.mxu0 0.0
  %3552 = vmatprep.subr.mxu0 0.0
  %3553 = vmatpush1.xpose.msra.mxu0 0.0
  %3554 = vmatprep.subr.mxu0 0.0
  %3555 = vmatpush1.xpose.msra.mxu0 0.0
  %3556 = vmatprep.subr.mxu0 0.0
  %3557 = vmatpush1.xpose.msra.mxu0 0.0
  %3558 = vmatprep.subr.mxu0 0.0
  %3559 = vmatpush1.xpose.msra.mxu0 0.0
  %3560 = vmatprep.subr.mxu0 0.0
  %3561 = vmatpush1.xpose.msra.mxu0 0.0
  %3562 = vmatprep.subr.mxu0 0.0
  %3563 = vmatpush1.xpose.msra.mxu0 0.0
  %3564 = vmatprep.subr.mxu0 0.0
  %3565 = vmatpush1.xpose.msra.mxu0 0.0
  %3566 = vmatprep.subr.mxu0 0.0
  %3567 = vmatpush1.xpose.msra.mxu0 0.0
  %3568 = vmatprep.subr.mxu0 0.0
  %3569 = vmatpush1.xpose.msra.mxu0 0.0
  %3570 = vmatprep.subr.mxu0 0.0
  %3571 = vmatpush1.xpose.msra.mxu0 0.0
  %3572 = vmatprep.subr.mxu0 0.0
  %3573 = vmatpush1.xpose.msra.mxu0 0.0
  %3574 = vmatprep.subr.mxu0 0.0
  %3575 = vmatpush1.xpose.msra.mxu0 0.0
  %3576 = vmatprep.subr.mxu0 0.0
  %3577 = vmatpush1.xpose.msra.mxu0 0.0
  %3578 = vmatprep.subr.mxu0 0.0
  %3579 = vmatpush1.xpose.msra.mxu0 0.0
  %3580 = vmatprep.subr.mxu0 0.0
  %3581 = vmatpush1.xpose.msra.mxu0 0.0
  %3582 = vmatprep.mubr.f32.mxu0 0.0
  %3583 = vmatmul.mubr.f32.gmra.mrb[0].mxu0 %v3513
  %v3584 = vpop.f32.mrb[0].mxu0
  %v3585 = vadd.f32 0.0, %v3584
  %v3586 = vpop.f32.mrb[0].mxu0
  %3587 = vdwg.mxu0
  %v3588 = vadd.f32 %v3509, %v3585
  %s3589 = scalar_lea.vmem %s17, 24
  %v3590 = vld [vmem:[%s3589] sm:$0xff]
  %v3592 = vsel %vm216, %v3344, 0
  %v3595 = vsel %vm216, %v3590, 0
  %3597 = vmatprep.subr.mxu0 0.0
  %3598 = vmatpush1.xpose.msra.mxu0 %v3595
  %3599 = vmatprep.subr.mxu0 0.0
  %3600 = vmatpush1.xpose.msra.mxu0 0.0
  %3601 = vmatprep.subr.mxu0 0.0
  %3602 = vmatpush1.xpose.msra.mxu0 0.0
  %3603 = vmatprep.subr.mxu0 0.0
  %3604 = vmatpush1.xpose.msra.mxu0 0.0
  %3605 = vmatprep.subr.mxu0 0.0
  %3606 = vmatpush1.xpose.msra.mxu0 0.0
  %3607 = vmatprep.subr.mxu0 0.0
  %3608 = vmatpush1.xpose.msra.mxu0 0.0
  %3609 = vmatprep.subr.mxu0 0.0
  %3610 = vmatpush1.xpose.msra.mxu0 0.0
  %3611 = vmatprep.subr.mxu0 0.0
  %3612 = vmatpush1.xpose.msra.mxu0 0.0
  %3613 = vmatprep.subr.mxu0 0.0
  %3614 = vmatpush1.xpose.msra.mxu0 0.0
  %3615 = vmatprep.subr.mxu0 0.0
  %3616 = vmatpush1.xpose.msra.mxu0 0.0
  %3617 = vmatprep.subr.mxu0 0.0
  %3618 = vmatpush1.xpose.msra.mxu0 0.0
  %3619 = vmatprep.subr.mxu0 0.0
  %3620 = vmatpush1.xpose.msra.mxu0 0.0
  %3621 = vmatprep.subr.mxu0 0.0
  %3622 = vmatpush1.xpose.msra.mxu0 0.0
  %3623 = vmatprep.subr.mxu0 0.0
  %3624 = vmatpush1.xpose.msra.mxu0 0.0
  %3625 = vmatprep.subr.mxu0 0.0
  %3626 = vmatpush1.xpose.msra.mxu0 0.0
  %3627 = vmatprep.subr.mxu0 0.0
  %3628 = vmatpush1.xpose.msra.mxu0 0.0
  %3629 = vmatprep.subr.mxu0 0.0
  %3630 = vmatpush1.xpose.msra.mxu0 0.0
  %3631 = vmatprep.subr.mxu0 0.0
  %3632 = vmatpush1.xpose.msra.mxu0 0.0
  %3633 = vmatprep.subr.mxu0 0.0
  %3634 = vmatpush1.xpose.msra.mxu0 0.0
  %3635 = vmatprep.subr.mxu0 0.0
  %3636 = vmatpush1.xpose.msra.mxu0 0.0
  %3637 = vmatprep.subr.mxu0 0.0
  %3638 = vmatpush1.xpose.msra.mxu0 0.0
  %3639 = vmatprep.subr.mxu0 0.0
  %3640 = vmatpush1.xpose.msra.mxu0 0.0
  %3641 = vmatprep.subr.mxu0 0.0
  %3642 = vmatpush1.xpose.msra.mxu0 0.0
  %3643 = vmatprep.subr.mxu0 0.0
  %3644 = vmatpush1.xpose.msra.mxu0 0.0
  %3645 = vmatprep.subr.mxu0 0.0
  %3646 = vmatpush1.xpose.msra.mxu0 0.0
  %3647 = vmatprep.subr.mxu0 0.0
  %3648 = vmatpush1.xpose.msra.mxu0 0.0
  %3649 = vmatprep.subr.mxu0 0.0
  %3650 = vmatpush1.xpose.msra.mxu0 0.0
  %3651 = vmatprep.subr.mxu0 0.0
  %3652 = vmatpush1.xpose.msra.mxu0 0.0
  %3653 = vmatprep.subr.mxu0 0.0
  %3654 = vmatpush1.xpose.msra.mxu0 0.0
  %3655 = vmatprep.subr.mxu0 0.0
  %3656 = vmatpush1.xpose.msra.mxu0 0.0
  %3657 = vmatprep.subr.mxu0 0.0
  %3658 = vmatpush1.xpose.msra.mxu0 0.0
  %3659 = vmatprep.subr.mxu0 0.0
  %3660 = vmatpush1.xpose.msra.mxu0 0.0
  %3661 = vmatprep.mubr.f32.mxu0 0.0
  %3662 = vmatmul.mubr.f32.gmra.mrb[0].mxu0 %v3592
  %v3663 = vpop.f32.mrb[0].mxu0
  %v3664 = vadd.f32 0.0, %v3663
  %v3665 = vpop.f32.mrb[0].mxu0
  %3666 = vdwg.mxu0
  %v3667 = vadd.f32 %v3588, %v3664
  %s3668 = scalar_lea.vmem %s17, 32
  %v3669 = vld [vmem:[%s3668] sm:$0xff]
  %v3671 = vsel %vm216, %v3345, 0
  %v3674 = vsel %vm216, %v3669, 0
  %3676 = vmatprep.subr.mxu0 0.0
  %3677 = vmatpush1.xpose.msra.mxu0 %v3674
  %3678 = vmatprep.subr.mxu0 0.0
  %3679 = vmatpush1.xpose.msra.mxu0 0.0
  %3680 = vmatprep.subr.mxu0 0.0
  %3681 = vmatpush1.xpose.msra.mxu0 0.0
  %3682 = vmatprep.subr.mxu0 0.0
  %3683 = vmatpush1.xpose.msra.mxu0 0.0
  %3684 = vmatprep.subr.mxu0 0.0
  %3685 = vmatpush1.xpose.msra.mxu0 0.0
  %3686 = vmatprep.subr.mxu0 0.0
  %3687 = vmatpush1.xpose.msra.mxu0 0.0
  %3688 = vmatprep.subr.mxu0 0.0
  %3689 = vmatpush1.xpose.msra.mxu0 0.0
  %3690 = vmatprep.subr.mxu0 0.0
  %3691 = vmatpush1.xpose.msra.mxu0 0.0
  %3692 = vmatprep.subr.mxu0 0.0
  %3693 = vmatpush1.xpose.msra.mxu0 0.0
  %3694 = vmatprep.subr.mxu0 0.0
  %3695 = vmatpush1.xpose.msra.mxu0 0.0
  %3696 = vmatprep.subr.mxu0 0.0
  %3697 = vmatpush1.xpose.msra.mxu0 0.0
  %3698 = vmatprep.subr.mxu0 0.0
  %3699 = vmatpush1.xpose.msra.mxu0 0.0
  %3700 = vmatprep.subr.mxu0 0.0
  %3701 = vmatpush1.xpose.msra.mxu0 0.0
  %3702 = vmatprep.subr.mxu0 0.0
  %3703 = vmatpush1.xpose.msra.mxu0 0.0
  %3704 = vmatprep.subr.mxu0 0.0
  %3705 = vmatpush1.xpose.msra.mxu0 0.0
  %3706 = vmatprep.subr.mxu0 0.0
  %3707 = vmatpush1.xpose.msra.mxu0 0.0
  %3708 = vmatprep.subr.mxu0 0.0
  %3709 = vmatpush1.xpose.msra.mxu0 0.0
  %3710 = vmatprep.subr.mxu0 0.0
  %3711 = vmatpush1.xpose.msra.mxu0 0.0
  %3712 = vmatprep.subr.mxu0 0.0
  %3713 = vmatpush1.xpose.msra.mxu0 0.0
  %3714 = vmatprep.subr.mxu0 0.0
  %3715 = vmatpush1.xpose.msra.mxu0 0.0
  %3716 = vmatprep.subr.mxu0 0.0
  %3717 = vmatpush1.xpose.msra.mxu0 0.0
  %3718 = vmatprep.subr.mxu0 0.0
  %3719 = vmatpush1.xpose.msra.mxu0 0.0
  %3720 = vmatprep.subr.mxu0 0.0
  %3721 = vmatpush1.xpose.msra.mxu0 0.0
  %3722 = vmatprep.subr.mxu0 0.0
  %3723 = vmatpush1.xpose.msra.mxu0 0.0
  %3724 = vmatprep.subr.mxu0 0.0
  %3725 = vmatpush1.xpose.msra.mxu0 0.0
  %3726 = vmatprep.subr.mxu0 0.0
  %3727 = vmatpush1.xpose.msra.mxu0 0.0
  %3728 = vmatprep.subr.mxu0 0.0
  %3729 = vmatpush1.xpose.msra.mxu0 0.0
  %3730 = vmatprep.subr.mxu0 0.0
  %3731 = vmatpush1.xpose.msra.mxu0 0.0
  %3732 = vmatprep.subr.mxu0 0.0
  %3733 = vmatpush1.xpose.msra.mxu0 0.0
  %3734 = vmatprep.subr.mxu0 0.0
  %3735 = vmatpush1.xpose.msra.mxu0 0.0
  %3736 = vmatprep.subr.mxu0 0.0
  %3737 = vmatpush1.xpose.msra.mxu0 0.0
  %3738 = vmatprep.subr.mxu0 0.0
  %3739 = vmatpush1.xpose.msra.mxu0 0.0
  %3740 = vmatprep.mubr.f32.mxu0 0.0
  %3741 = vmatmul.mubr.f32.gmra.mrb[0].mxu0 %v3671
  %v3742 = vpop.f32.mrb[0].mxu0
  %v3743 = vadd.f32 0.0, %v3742
  %v3744 = vpop.f32.mrb[0].mxu0
  %3745 = vdwg.mxu0
  %v3746 = vadd.f32 %v3667, %v3743
  %3747 = vst.msk [vmem:[%s19] sm:$0xff] %vm358, %v3746
  // Predicated region
  $region78: #{patchtst_forward.1} parent=0 // pred_check
    _
  $region79: #{patchtst_forward.1} parent=0 // pred_check_branch
    %3749 = sbr.rel (0) target = $region81
  $region80: #{patchtst_forward.1} parent=0 // pred_region
    _
  $region81: #{patchtst_forward.1} parent=0 // pred_fallthru
    _
  // Predicated region
  $region82: #{patchtst_forward.1} parent=0 // pred_check
    _
  $region83: #{patchtst_forward.1} parent=0 // pred_check_branch
    %3751 = sbr.rel (0) target = $region85
  $region84: #{patchtst_forward.1} parent=0 // pred_region
    _
  $region85: #{patchtst_forward.1} parent=0 // pred_fallthru
    _

</llo_original>
